<compile_context>
chip_gen: v7x
topology: tpu7x:2x2x1
jax: 0.10.0
libtpu: 0.0.40
codegen_flags: <defaults>
</compile_context>

<pallas_src>
import functools

import jax
import jax.numpy as jnp
from jax import lax
from jax.experimental import pallas as pl
from jax.experimental.pallas import tpu as pltpu


# ------------------------------ fused kernel --------------------------------

def _splat_kernel(x_ref, w_ref, b_ref, f1w_ref, f1b_ref, f2w_ref, f2b_ref,
                  mask_ref, o_ref, *, radix, cardinality, KH, KW, Wp, HWp,
                  inv_hw):
    # x_ref   : (1, Cin, Lpad) f32  padded image, flattened padded spatial on lanes
    # w_ref   : (G, KH, KW, out_pg, in_pg) f32  grouped conv weight
    # b_ref   : (radix, C, 1)  f32  conv bias, radix-major
    # f1w_ref : (inter, C)     f32  fc1 weight (transposed: channels on lanes)
    # f1b_ref : (inter, 1)     f32
    # f2w_ref : (Cout, inter)  f32
    # f2b_ref : (Cout, 1)      f32
    # mask_ref: (1, HWp)       f32  1.0 for valid output columns (j < Wo)
    # o_ref   : (1, C, HWp)    f32  attention-combined output (padded-W layout)
    _, _, _, out_pg, in_pg = w_ref.shape
    C = o_ref.shape[1]
    chpg = C // cardinality

    x2 = x_ref[0]                                   # (Cin, Lpad)
    mask = mask_ref[...]                            # (1, HWp)

    # ---- grouped conv + bias + ReLU, radix-major splits ---------------------
    # Conv as KH*KW accumulating MXU dots per group; the (kh, kw) tap of the
    # padded-flat image is just a lane slice at offset kh*Wp + kw.
    y_splits = []                                   # radix-major list of (C, HWp)
    for r in range(radix):
        parts = []
        for c in range(cardinality):
            g = r * cardinality + c
            xg = x2[g * in_pg:(g + 1) * in_pg, :]   # (in_pg, Lpad)
            acc = jnp.zeros((out_pg, HWp), jnp.float32)
            for kh in range(KH):
                for kw in range(KW):
                    off = kh * Wp + kw
                    acc = acc + jnp.dot(w_ref[g, kh, kw],
                                        xg[:, off:off + HWp],
                                        preferred_element_type=jnp.float32)
            parts.append(acc)
        y_r = parts[0] if cardinality == 1 else jnp.concatenate(parts, axis=0)
        y_splits.append(jnp.maximum(y_r + b_ref[r], 0.0))       # (C, HWp)

    # ---- radix-sum + masked global average pool (junk columns excluded) -----
    gsum = y_splits[0]
    for r in range(1, radix):
        gsum = gsum + y_splits[r]
    gap = jnp.sum(gsum * mask, axis=1, keepdims=True) * inv_hw  # (C, 1)

    # ---- attention MLP (channels stay on the sublane axis) ------------------
    h = jnp.maximum(
        jnp.dot(f1w_ref[...], gap, preferred_element_type=jnp.float32)
        + f1b_ref[...], 0.0)                                    # (inter, 1)
    logits = (jnp.dot(f2w_ref[...], h, preferred_element_type=jnp.float32)
              + f2b_ref[...])                                   # (Cout, 1)

    # ---- rSoftMax over radix (fc2 channel order = (cardinality, radix, chpg))
    if radix > 1:
        lsplit = []
        for r in range(radix):
            rows = [logits[c * radix * chpg + r * chpg:
                           c * radix * chpg + (r + 1) * chpg, :]
                    for c in range(cardinality)]
            lsplit.append(rows[0] if cardinality == 1
                          else jnp.concatenate(rows, axis=0))   # (C, 1)
        m = lsplit[0]
        for r in range(1, radix):
            m = jnp.maximum(m, lsplit[r])
        exps = [jnp.exp(l - m) for l in lsplit]
        den = exps[0]
        for r in range(1, radix):
            den = den + exps[r]
        att = [e / den for e in exps]                           # radix x (C, 1)
    else:
        att = [jax.nn.sigmoid(logits)]                          # (C, 1)

    # ---- attention-weighted sum over radix splits ----------------------------
    out = att[0] * y_splits[0]
    for r in range(1, radix):
        out = out + att[r] * y_splits[r]
    o_ref[0] = out.astype(o_ref.dtype)


# --------------------------------- wrapper -----------------------------------

@functools.partial(jax.jit, static_argnames=("radix", "cardinality", "padding"))
def splat_conv2d(x, params, *, radix, cardinality, padding):
    """SplAtConv2d forward (use_bn=False, dropblock=0, stride=1). x is NCHW."""
    B, Cin, H, W = x.shape
    wg = params["conv_wg"]                          # (G, KH, KW, in_pg, out_pg)
    G, KH, KW, in_pg, out_pg = wg.shape
    Cout = G * out_pg
    C = Cout // radix
    inter = params["fc1_w"].shape[1]
    ph, pw = padding
    Hp, Wp = H + 2 * ph, W + 2 * pw
    Ho, Wo = Hp - KH + 1, Wp - KW + 1
    HWp = Ho * Wp                                   # padded-width output lanes
    # flat padded image, tail-padded so every (kh, kw) lane slice is in bounds
    Lpad = ((Hp * Wp + KW - 1 + 127) // 128) * 128

    xp = jnp.pad(x, ((0, 0), (0, 0), (ph, ph), (pw, pw))).reshape(B, Cin, Hp * Wp)
    xflat = jnp.pad(xp, ((0, 0), (0, 0), (0, Lpad - Hp * Wp))).astype(jnp.float32)

    wk = jnp.transpose(wg, (0, 1, 2, 4, 3)).astype(jnp.float32)  # (G,KH,KW,opg,ipg)
    b3 = params["conv_b"].reshape(radix, C, 1).astype(jnp.float32)
    f1w = params["fc1_w"].T.astype(jnp.float32)                  # (inter, C)
    f1b = params["fc1_b"].reshape(inter, 1).astype(jnp.float32)
    f2w = params["fc2_w"].T.astype(jnp.float32)                  # (Cout, inter)
    f2b = params["fc2_b"].reshape(Cout, 1).astype(jnp.float32)
    col = lax.broadcasted_iota(jnp.int32, (1, HWp), 1) % Wp
    valid = (col < Wo).astype(jnp.float32)                       # (1, HWp)

    kernel = functools.partial(
        _splat_kernel, radix=radix, cardinality=cardinality,
        KH=KH, KW=KW, Wp=Wp, HWp=HWp, inv_hw=1.0 / (Ho * Wo))

    out = pl.pallas_call(
        kernel,
        grid=(B,),
        in_specs=[
            pl.BlockSpec((1, Cin, Lpad), lambda b: (b, 0, 0)),
            pl.BlockSpec((G, KH, KW, out_pg, in_pg),
                         lambda b: (0, 0, 0, 0, 0)),
            pl.BlockSpec((radix, C, 1), lambda b: (0, 0, 0)),
            pl.BlockSpec((inter, C), lambda b: (0, 0)),
            pl.BlockSpec((inter, 1), lambda b: (0, 0)),
            pl.BlockSpec((Cout, inter), lambda b: (0, 0)),
            pl.BlockSpec((Cout, 1), lambda b: (0, 0)),
            pl.BlockSpec((1, HWp), lambda b: (0, 0)),
        ],
        out_specs=pl.BlockSpec((1, C, HWp), lambda b: (b, 0, 0)),
        out_shape=jax.ShapeDtypeStruct((B, C, HWp), jnp.float32),
        compiler_params=pltpu.CompilerParams(
            dimension_semantics=("parallel",)),
    )(xflat, wk, b3, f1w, f1b, f2w, f2b, valid)

    # drop the Wp-Wo junk columns and return NCHW
    return out.reshape(B, C, Ho, Wp)[:, :, :, :Wo]


# ----------------------- parameter construction helpers ----------------------

def _conv_block_diag(gw):
    # gw: (G, KH, KW, in_pg, out_pg) -> dense (KH, KW, G*in_pg, G*out_pg)
    G, KH, KW, ipg, opg = gw.shape
    dense = jnp.zeros((KH, KW, G * ipg, G * opg), jnp.float32)
    for g in range(G):
        dense = dense.at[:, :, g * ipg:(g + 1) * ipg,
                         g * opg:(g + 1) * opg].set(gw[g])
    return dense


def _block_diag(gw):
    # gw: (G, in_pg, out_pg) -> dense (G*in_pg, G*out_pg)
    G, ipg, opg = gw.shape
    dense = jnp.zeros((G * ipg, G * opg), jnp.float32)
    for g in range(G):
        dense = dense.at[g * ipg:(g + 1) * ipg, g * opg:(g + 1) * opg].set(gw[g])
    return dense


# ------------------------------ reference (JAX) ------------------------------

def reference(x, params, radix, cardinality, padding):
    w = _conv_block_diag(params["conv_wg"])         # (KH, KW, Cin, Cout) HWIO
    b = params["conv_b"]
    Cout = w.shape[-1]
    C = Cout // radix
    y = lax.conv_general_dilated(
        x, w, (1, 1), [(padding[0], padding[0]), (padding[1], padding[1])],
        dimension_numbers=("NCHW", "HWIO", "NCHW"))
    y = jnp.maximum(y + b[None, :, None, None], 0.0)
    gap = jnp.mean(sum(y[:, r * C:(r + 1) * C] for r in range(radix)),
                   axis=(2, 3))
    h = jnp.maximum(gap @ params["fc1_w"] + params["fc1_b"], 0.0)
    logits = h @ params["fc2_w"] + params["fc2_b"]
    B = x.shape[0]
    chpg = C // cardinality
    if radix > 1:
        soft = jax.nn.softmax(logits.reshape(B, cardinality, radix, chpg),
                              axis=2)
        att = jnp.transpose(soft, (0, 2, 1, 3)).reshape(B, radix, C)
    else:
        att = jax.nn.sigmoid(logits).reshape(B, 1, C)
    out = sum(att[:, r][:, :, None, None] * y[:, r * C:(r + 1) * C]
              for r in range(radix))
    return out


# ----------------------------------- main ------------------------------------

if __name__ == "__main__":
    B, Cin, H, W = 2, 4, 16, 16
    channels, radix, groups = 4, 2, 1
    KH = KW = 3
    padding = (1, 1)
    reduction_factor = 4
    inter = max(Cin * radix // reduction_factor, 32)    # = 32
    Cout = channels * radix                             # = 8
    G = groups * radix                                  # conv groups = 2

    keys = jax.random.split(jax.random.PRNGKey(0), 7)
    x = jax.random.normal(keys[0], (B, Cin, H, W), jnp.float32)

    conv_gw = 0.2 * jax.random.normal(
        keys[1], (G, KH, KW, Cin // G, Cout // G), jnp.float32)
    conv_b = 0.1 * jax.random.normal(keys[2], (Cout,), jnp.float32)

    fc1_gw = 0.2 * jax.random.normal(
        keys[3], (groups, channels // groups, inter // groups), jnp.float32)
    fc1_w = _block_diag(fc1_gw)
    fc1_b = 0.1 * jax.random.normal(keys[4], (inter,), jnp.float32)

    fc2_gw = 0.2 * jax.random.normal(
        keys[5], (groups, inter // groups, Cout // groups), jnp.float32)
    fc2_w = _block_diag(fc2_gw)
    fc2_b = 0.1 * jax.random.normal(keys[6], (Cout,), jnp.float32)

    params = dict(conv_wg=conv_gw, conv_b=conv_b,
                  fc1_w=fc1_w, fc1_b=fc1_b, fc2_w=fc2_w, fc2_b=fc2_b)

    out = splat_conv2d(x, params, radix=radix, cardinality=groups,
                       padding=padding)
    out = jax.block_until_ready(out)

    ref = reference(x, params, radix, groups, padding)
    assert out.shape == (B, channels, H, W), out.shape
    err = float(jnp.max(jnp.abs(out - ref)))
    assert jnp.allclose(out, ref, rtol=2e-3, atol=2e-3), err
    print("KERNEL_OK")
</pallas_src>

<mosaic_0001>
module attributes {stable_mosaic.version = 11 : i64} {
  func.func @_splat_kernel(%arg0: i32, %arg1: memref<1x4x384xf32, #tpu.memory_space<vmem>>, %arg2: memref<2x3x3x4x2xf32, #tpu.memory_space<vmem>>, %arg3: memref<2x4x1xf32, #tpu.memory_space<vmem>>, %arg4: memref<32x4xf32, #tpu.memory_space<vmem>>, %arg5: memref<32x1xf32, #tpu.memory_space<vmem>>, %arg6: memref<8x32xf32, #tpu.memory_space<vmem>>, %arg7: memref<8x1xf32, #tpu.memory_space<vmem>>, %arg8: memref<1x288xf32, #tpu.memory_space<vmem>>, %arg9: memref<1x4x288xf32, #tpu.memory_space<vmem>>) attributes {dimension_semantics = [#tpu.dimension_semantics<parallel>], iteration_bounds = array<i64: 2>, scalar_prefetch = 0 : i64, scratch_operands = 0 : i64, tpu.core_type = #tpu.core_type<tc>, window_params = [{transform_indices = @transform_0, window_bounds = array<i64: 1, 4, 384>}, {pipeline_mode = #tpu.pipeline_mode<synchronous>, transform_indices = @transform_1, window_bounds = array<i64: 2, 3, 3, 4, 2>}, {pipeline_mode = #tpu.pipeline_mode<synchronous>, transform_indices = @transform_2, window_bounds = array<i64: 2, 4, 1>}, {pipeline_mode = #tpu.pipeline_mode<synchronous>, transform_indices = @transform_3, window_bounds = array<i64: 32, 4>}, {pipeline_mode = #tpu.pipeline_mode<synchronous>, transform_indices = @transform_4, window_bounds = array<i64: 32, 1>}, {pipeline_mode = #tpu.pipeline_mode<synchronous>, transform_indices = @transform_5, window_bounds = array<i64: 8, 32>}, {pipeline_mode = #tpu.pipeline_mode<synchronous>, transform_indices = @transform_6, window_bounds = array<i64: 8, 1>}, {pipeline_mode = #tpu.pipeline_mode<synchronous>, transform_indices = @transform_7, window_bounds = array<i64: 1, 288>}, {transform_indices = @transform_8, window_bounds = array<i64: 1, 4, 288>}]} {
    %c0 = arith.constant 0 : index
    %c0_0 = arith.constant 0 : index
    %c0_1 = arith.constant 0 : index
    %0 = vector.load %arg1[%c0, %c0_0, %c0_1] : memref<1x4x384xf32, #tpu.memory_space<vmem>>, vector<1x4x384xf32>
    %1 = vector.shape_cast %0 : vector<1x4x384xf32> to vector<4x384xf32>
    %c0_2 = arith.constant 0 : index
    %c0_3 = arith.constant 0 : index
    %2 = vector.load %arg8[%c0_2, %c0_3] : memref<1x288xf32, #tpu.memory_space<vmem>>, vector<1x288xf32>
    %3 = vector.extract_strided_slice %1 {offsets = [0, 0], sizes = [2, 384], strides = [1, 1]} : vector<4x384xf32> to vector<2x384xf32>
    %cst = arith.constant 0.000000e+00 : f32
    %4 = vector.broadcast %cst : f32 to vector<4x288xf32>
    %c0_4 = arith.constant 0 : index
    %c0_5 = arith.constant 0 : index
    %c0_6 = arith.constant 0 : index
    %c0_7 = arith.constant 0 : index
    %c0_8 = arith.constant 0 : index
    %5 = vector.load %arg2[%c0_4, %c0_5, %c0_6, %c0_7, %c0_8] : memref<2x3x3x4x2xf32, #tpu.memory_space<vmem>>, vector<1x1x1x4x2xf32>
    %6 = vector.shape_cast %5 : vector<1x1x1x4x2xf32> to vector<4x2xf32>
    %7 = vector.extract_strided_slice %3 {offsets = [0, 0], sizes = [2, 288], strides = [1, 1]} : vector<2x384xf32> to vector<2x288xf32>
    %cst_9 = arith.constant dense<0.000000e+00> : vector<4x288xf32>
    %8 = tpu.matmul %6, %7, %cst_9 {dimension_numbers = #tpu.dot_dimension_numbers<[1], [0], [0], [1], [0, 0, 1, 1], [], []>} : vector<4x2xf32>, vector<2x288xf32>, vector<4x288xf32> -> vector<4x288xf32>
    %9 = arith.addf %4, %8 : vector<4x288xf32>
    %c0_10 = arith.constant 0 : index
    %c0_11 = arith.constant 0 : index
    %c1 = arith.constant 1 : index
    %c0_12 = arith.constant 0 : index
    %c0_13 = arith.constant 0 : index
    %10 = vector.load %arg2[%c0_10, %c0_11, %c1, %c0_12, %c0_13] : memref<2x3x3x4x2xf32, #tpu.memory_space<vmem>>, vector<1x1x1x4x2xf32>
    %11 = vector.shape_cast %10 : vector<1x1x1x4x2xf32> to vector<4x2xf32>
    %12 = vector.extract_strided_slice %3 {offsets = [0, 1], sizes = [2, 288], strides = [1, 1]} : vector<2x384xf32> to vector<2x288xf32>
    %cst_14 = arith.constant dense<0.000000e+00> : vector<4x288xf32>
    %13 = tpu.matmul %11, %12, %cst_14 {dimension_numbers = #tpu.dot_dimension_numbers<[1], [0], [0], [1], [0, 0, 1, 1], [], []>} : vector<4x2xf32>, vector<2x288xf32>, vector<4x288xf32> -> vector<4x288xf32>
    %14 = arith.addf %9, %13 : vector<4x288xf32>
    %c0_15 = arith.constant 0 : index
    %c0_16 = arith.constant 0 : index
    %c2 = arith.constant 2 : index
    %c0_17 = arith.constant 0 : index
    %c0_18 = arith.constant 0 : index
    %15 = vector.load %arg2[%c0_15, %c0_16, %c2, %c0_17, %c0_18] : memref<2x3x3x4x2xf32, #tpu.memory_space<vmem>>, vector<1x1x1x4x2xf32>
    %16 = vector.shape_cast %15 : vector<1x1x1x4x2xf32> to vector<4x2xf32>
    %17 = vector.extract_strided_slice %3 {offsets = [0, 2], sizes = [2, 288], strides = [1, 1]} : vector<2x384xf32> to vector<2x288xf32>
    %cst_19 = arith.constant dense<0.000000e+00> : vector<4x288xf32>
    %18 = tpu.matmul %16, %17, %cst_19 {dimension_numbers = #tpu.dot_dimension_numbers<[1], [0], [0], [1], [0, 0, 1, 1], [], []>} : vector<4x2xf32>, vector<2x288xf32>, vector<4x288xf32> -> vector<4x288xf32>
    %19 = arith.addf %14, %18 : vector<4x288xf32>
    %c0_20 = arith.constant 0 : index
    %c1_21 = arith.constant 1 : index
    %c0_22 = arith.constant 0 : index
    %c0_23 = arith.constant 0 : index
    %c0_24 = arith.constant 0 : index
    %20 = vector.load %arg2[%c0_20, %c1_21, %c0_22, %c0_23, %c0_24] : memref<2x3x3x4x2xf32, #tpu.memory_space<vmem>>, vector<1x1x1x4x2xf32>
    %21 = vector.shape_cast %20 : vector<1x1x1x4x2xf32> to vector<4x2xf32>
    %22 = vector.extract_strided_slice %3 {offsets = [0, 18], sizes = [2, 288], strides = [1, 1]} : vector<2x384xf32> to vector<2x288xf32>
    %cst_25 = arith.constant dense<0.000000e+00> : vector<4x288xf32>
    %23 = tpu.matmul %21, %22, %cst_25 {dimension_numbers = #tpu.dot_dimension_numbers<[1], [0], [0], [1], [0, 0, 1, 1], [], []>} : vector<4x2xf32>, vector<2x288xf32>, vector<4x288xf32> -> vector<4x288xf32>
    %24 = arith.addf %19, %23 : vector<4x288xf32>
    %c0_26 = arith.constant 0 : index
    %c1_27 = arith.constant 1 : index
    %c1_28 = arith.constant 1 : index
    %c0_29 = arith.constant 0 : index
    %c0_30 = arith.constant 0 : index
    %25 = vector.load %arg2[%c0_26, %c1_27, %c1_28, %c0_29, %c0_30] : memref<2x3x3x4x2xf32, #tpu.memory_space<vmem>>, vector<1x1x1x4x2xf32>
    %26 = vector.shape_cast %25 : vector<1x1x1x4x2xf32> to vector<4x2xf32>
    %27 = vector.extract_strided_slice %3 {offsets = [0, 19], sizes = [2, 288], strides = [1, 1]} : vector<2x384xf32> to vector<2x288xf32>
    %cst_31 = arith.constant dense<0.000000e+00> : vector<4x288xf32>
    %28 = tpu.matmul %26, %27, %cst_31 {dimension_numbers = #tpu.dot_dimension_numbers<[1], [0], [0], [1], [0, 0, 1, 1], [], []>} : vector<4x2xf32>, vector<2x288xf32>, vector<4x288xf32> -> vector<4x288xf32>
    %29 = arith.addf %24, %28 : vector<4x288xf32>
    %c0_32 = arith.constant 0 : index
    %c1_33 = arith.constant 1 : index
    %c2_34 = arith.constant 2 : index
    %c0_35 = arith.constant 0 : index
    %c0_36 = arith.constant 0 : index
    %30 = vector.load %arg2[%c0_32, %c1_33, %c2_34, %c0_35, %c0_36] : memref<2x3x3x4x2xf32, #tpu.memory_space<vmem>>, vector<1x1x1x4x2xf32>
    %31 = vector.shape_cast %30 : vector<1x1x1x4x2xf32> to vector<4x2xf32>
    %32 = vector.extract_strided_slice %3 {offsets = [0, 20], sizes = [2, 288], strides = [1, 1]} : vector<2x384xf32> to vector<2x288xf32>
    %cst_37 = arith.constant dense<0.000000e+00> : vector<4x288xf32>
    %33 = tpu.matmul %31, %32, %cst_37 {dimension_numbers = #tpu.dot_dimension_numbers<[1], [0], [0], [1], [0, 0, 1, 1], [], []>} : vector<4x2xf32>, vector<2x288xf32>, vector<4x288xf32> -> vector<4x288xf32>
    %34 = arith.addf %29, %33 : vector<4x288xf32>
    %c0_38 = arith.constant 0 : index
    %c2_39 = arith.constant 2 : index
    %c0_40 = arith.constant 0 : index
    %c0_41 = arith.constant 0 : index
    %c0_42 = arith.constant 0 : index
    %35 = vector.load %arg2[%c0_38, %c2_39, %c0_40, %c0_41, %c0_42] : memref<2x3x3x4x2xf32, #tpu.memory_space<vmem>>, vector<1x1x1x4x2xf32>
    %36 = vector.shape_cast %35 : vector<1x1x1x4x2xf32> to vector<4x2xf32>
    %37 = vector.extract_strided_slice %3 {offsets = [0, 36], sizes = [2, 288], strides = [1, 1]} : vector<2x384xf32> to vector<2x288xf32>
    %cst_43 = arith.constant dense<0.000000e+00> : vector<4x288xf32>
    %38 = tpu.matmul %36, %37, %cst_43 {dimension_numbers = #tpu.dot_dimension_numbers<[1], [0], [0], [1], [0, 0, 1, 1], [], []>} : vector<4x2xf32>, vector<2x288xf32>, vector<4x288xf32> -> vector<4x288xf32>
    %39 = arith.addf %34, %38 : vector<4x288xf32>
    %c0_44 = arith.constant 0 : index
    %c2_45 = arith.constant 2 : index
    %c1_46 = arith.constant 1 : index
    %c0_47 = arith.constant 0 : index
    %c0_48 = arith.constant 0 : index
    %40 = vector.load %arg2[%c0_44, %c2_45, %c1_46, %c0_47, %c0_48] : memref<2x3x3x4x2xf32, #tpu.memory_space<vmem>>, vector<1x1x1x4x2xf32>
    %41 = vector.shape_cast %40 : vector<1x1x1x4x2xf32> to vector<4x2xf32>
    %42 = vector.extract_strided_slice %3 {offsets = [0, 37], sizes = [2, 288], strides = [1, 1]} : vector<2x384xf32> to vector<2x288xf32>
    %cst_49 = arith.constant dense<0.000000e+00> : vector<4x288xf32>
    %43 = tpu.matmul %41, %42, %cst_49 {dimension_numbers = #tpu.dot_dimension_numbers<[1], [0], [0], [1], [0, 0, 1, 1], [], []>} : vector<4x2xf32>, vector<2x288xf32>, vector<4x288xf32> -> vector<4x288xf32>
    %44 = arith.addf %39, %43 : vector<4x288xf32>
    %c0_50 = arith.constant 0 : index
    %c2_51 = arith.constant 2 : index
    %c2_52 = arith.constant 2 : index
    %c0_53 = arith.constant 0 : index
    %c0_54 = arith.constant 0 : index
    %45 = vector.load %arg2[%c0_50, %c2_51, %c2_52, %c0_53, %c0_54] : memref<2x3x3x4x2xf32, #tpu.memory_space<vmem>>, vector<1x1x1x4x2xf32>
    %46 = vector.shape_cast %45 : vector<1x1x1x4x2xf32> to vector<4x2xf32>
    %47 = vector.extract_strided_slice %3 {offsets = [0, 38], sizes = [2, 288], strides = [1, 1]} : vector<2x384xf32> to vector<2x288xf32>
    %cst_55 = arith.constant dense<0.000000e+00> : vector<4x288xf32>
    %48 = tpu.matmul %46, %47, %cst_55 {dimension_numbers = #tpu.dot_dimension_numbers<[1], [0], [0], [1], [0, 0, 1, 1], [], []>} : vector<4x2xf32>, vector<2x288xf32>, vector<4x288xf32> -> vector<4x288xf32>
    %49 = arith.addf %44, %48 : vector<4x288xf32>
    %c0_56 = arith.constant 0 : index
    %c0_57 = arith.constant 0 : index
    %c0_58 = arith.constant 0 : index
    %50 = vector.load %arg3[%c0_56, %c0_57, %c0_58] : memref<2x4x1xf32, #tpu.memory_space<vmem>>, vector<1x4x1xf32>
    %51 = vector.shape_cast %50 : vector<1x4x1xf32> to vector<4x1xf32>
    %52 = vector.broadcast %51 : vector<4x1xf32> to vector<4x288xf32>
    %53 = arith.addf %49, %52 : vector<4x288xf32>
    %cst_59 = arith.constant 0.000000e+00 : f32
    %54 = vector.broadcast %cst_59 : f32 to vector<4x288xf32>
    %55 = arith.maximumf %53, %54 : vector<4x288xf32>
    %56 = vector.extract_strided_slice %1 {offsets = [2, 0], sizes = [2, 384], strides = [1, 1]} : vector<4x384xf32> to vector<2x384xf32>
    %cst_60 = arith.constant 0.000000e+00 : f32
    %57 = vector.broadcast %cst_60 : f32 to vector<4x288xf32>
    %c1_61 = arith.constant 1 : index
    %c0_62 = arith.constant 0 : index
    %c0_63 = arith.constant 0 : index
    %c0_64 = arith.constant 0 : index
    %c0_65 = arith.constant 0 : index
    %58 = vector.load %arg2[%c1_61, %c0_62, %c0_63, %c0_64, %c0_65] : memref<2x3x3x4x2xf32, #tpu.memory_space<vmem>>, vector<1x1x1x4x2xf32>
    %59 = vector.shape_cast %58 : vector<1x1x1x4x2xf32> to vector<4x2xf32>
    %60 = vector.extract_strided_slice %56 {offsets = [0, 0], sizes = [2, 288], strides = [1, 1]} : vector<2x384xf32> to vector<2x288xf32>
    %cst_66 = arith.constant dense<0.000000e+00> : vector<4x288xf32>
    %61 = tpu.matmul %59, %60, %cst_66 {dimension_numbers = #tpu.dot_dimension_numbers<[1], [0], [0], [1], [0, 0, 1, 1], [], []>} : vector<4x2xf32>, vector<2x288xf32>, vector<4x288xf32> -> vector<4x288xf32>
    %62 = arith.addf %57, %61 : vector<4x288xf32>
    %c1_67 = arith.constant 1 : index
    %c0_68 = arith.constant 0 : index
    %c1_69 = arith.constant 1 : index
    %c0_70 = arith.constant 0 : index
    %c0_71 = arith.constant 0 : index
    %63 = vector.load %arg2[%c1_67, %c0_68, %c1_69, %c0_70, %c0_71] : memref<2x3x3x4x2xf32, #tpu.memory_space<vmem>>, vector<1x1x1x4x2xf32>
    %64 = vector.shape_cast %63 : vector<1x1x1x4x2xf32> to vector<4x2xf32>
    %65 = vector.extract_strided_slice %56 {offsets = [0, 1], sizes = [2, 288], strides = [1, 1]} : vector<2x384xf32> to vector<2x288xf32>
    %cst_72 = arith.constant dense<0.000000e+00> : vector<4x288xf32>
    %66 = tpu.matmul %64, %65, %cst_72 {dimension_numbers = #tpu.dot_dimension_numbers<[1], [0], [0], [1], [0, 0, 1, 1], [], []>} : vector<4x2xf32>, vector<2x288xf32>, vector<4x288xf32> -> vector<4x288xf32>
    %67 = arith.addf %62, %66 : vector<4x288xf32>
    %c1_73 = arith.constant 1 : index
    %c0_74 = arith.constant 0 : index
    %c2_75 = arith.constant 2 : index
    %c0_76 = arith.constant 0 : index
    %c0_77 = arith.constant 0 : index
    %68 = vector.load %arg2[%c1_73, %c0_74, %c2_75, %c0_76, %c0_77] : memref<2x3x3x4x2xf32, #tpu.memory_space<vmem>>, vector<1x1x1x4x2xf32>
    %69 = vector.shape_cast %68 : vector<1x1x1x4x2xf32> to vector<4x2xf32>
    %70 = vector.extract_strided_slice %56 {offsets = [0, 2], sizes = [2, 288], strides = [1, 1]} : vector<2x384xf32> to vector<2x288xf32>
    %cst_78 = arith.constant dense<0.000000e+00> : vector<4x288xf32>
    %71 = tpu.matmul %69, %70, %cst_78 {dimension_numbers = #tpu.dot_dimension_numbers<[1], [0], [0], [1], [0, 0, 1, 1], [], []>} : vector<4x2xf32>, vector<2x288xf32>, vector<4x288xf32> -> vector<4x288xf32>
    %72 = arith.addf %67, %71 : vector<4x288xf32>
    %c1_79 = arith.constant 1 : index
    %c1_80 = arith.constant 1 : index
    %c0_81 = arith.constant 0 : index
    %c0_82 = arith.constant 0 : index
    %c0_83 = arith.constant 0 : index
    %73 = vector.load %arg2[%c1_79, %c1_80, %c0_81, %c0_82, %c0_83] : memref<2x3x3x4x2xf32, #tpu.memory_space<vmem>>, vector<1x1x1x4x2xf32>
    %74 = vector.shape_cast %73 : vector<1x1x1x4x2xf32> to vector<4x2xf32>
    %75 = vector.extract_strided_slice %56 {offsets = [0, 18], sizes = [2, 288], strides = [1, 1]} : vector<2x384xf32> to vector<2x288xf32>
    %cst_84 = arith.constant dense<0.000000e+00> : vector<4x288xf32>
    %76 = tpu.matmul %74, %75, %cst_84 {dimension_numbers = #tpu.dot_dimension_numbers<[1], [0], [0], [1], [0, 0, 1, 1], [], []>} : vector<4x2xf32>, vector<2x288xf32>, vector<4x288xf32> -> vector<4x288xf32>
    %77 = arith.addf %72, %76 : vector<4x288xf32>
    %c1_85 = arith.constant 1 : index
    %c1_86 = arith.constant 1 : index
    %c1_87 = arith.constant 1 : index
    %c0_88 = arith.constant 0 : index
    %c0_89 = arith.constant 0 : index
    %78 = vector.load %arg2[%c1_85, %c1_86, %c1_87, %c0_88, %c0_89] : memref<2x3x3x4x2xf32, #tpu.memory_space<vmem>>, vector<1x1x1x4x2xf32>
    %79 = vector.shape_cast %78 : vector<1x1x1x4x2xf32> to vector<4x2xf32>
    %80 = vector.extract_strided_slice %56 {offsets = [0, 19], sizes = [2, 288], strides = [1, 1]} : vector<2x384xf32> to vector<2x288xf32>
    %cst_90 = arith.constant dense<0.000000e+00> : vector<4x288xf32>
    %81 = tpu.matmul %79, %80, %cst_90 {dimension_numbers = #tpu.dot_dimension_numbers<[1], [0], [0], [1], [0, 0, 1, 1], [], []>} : vector<4x2xf32>, vector<2x288xf32>, vector<4x288xf32> -> vector<4x288xf32>
    %82 = arith.addf %77, %81 : vector<4x288xf32>
    %c1_91 = arith.constant 1 : index
    %c1_92 = arith.constant 1 : index
    %c2_93 = arith.constant 2 : index
    %c0_94 = arith.constant 0 : index
    %c0_95 = arith.constant 0 : index
    %83 = vector.load %arg2[%c1_91, %c1_92, %c2_93, %c0_94, %c0_95] : memref<2x3x3x4x2xf32, #tpu.memory_space<vmem>>, vector<1x1x1x4x2xf32>
    %84 = vector.shape_cast %83 : vector<1x1x1x4x2xf32> to vector<4x2xf32>
    %85 = vector.extract_strided_slice %56 {offsets = [0, 20], sizes = [2, 288], strides = [1, 1]} : vector<2x384xf32> to vector<2x288xf32>
    %cst_96 = arith.constant dense<0.000000e+00> : vector<4x288xf32>
    %86 = tpu.matmul %84, %85, %cst_96 {dimension_numbers = #tpu.dot_dimension_numbers<[1], [0], [0], [1], [0, 0, 1, 1], [], []>} : vector<4x2xf32>, vector<2x288xf32>, vector<4x288xf32> -> vector<4x288xf32>
    %87 = arith.addf %82, %86 : vector<4x288xf32>
    %c1_97 = arith.constant 1 : index
    %c2_98 = arith.constant 2 : index
    %c0_99 = arith.constant 0 : index
    %c0_100 = arith.constant 0 : index
    %c0_101 = arith.constant 0 : index
    %88 = vector.load %arg2[%c1_97, %c2_98, %c0_99, %c0_100, %c0_101] : memref<2x3x3x4x2xf32, #tpu.memory_space<vmem>>, vector<1x1x1x4x2xf32>
    %89 = vector.shape_cast %88 : vector<1x1x1x4x2xf32> to vector<4x2xf32>
    %90 = vector.extract_strided_slice %56 {offsets = [0, 36], sizes = [2, 288], strides = [1, 1]} : vector<2x384xf32> to vector<2x288xf32>
    %cst_102 = arith.constant dense<0.000000e+00> : vector<4x288xf32>
    %91 = tpu.matmul %89, %90, %cst_102 {dimension_numbers = #tpu.dot_dimension_numbers<[1], [0], [0], [1], [0, 0, 1, 1], [], []>} : vector<4x2xf32>, vector<2x288xf32>, vector<4x288xf32> -> vector<4x288xf32>
    %92 = arith.addf %87, %91 : vector<4x288xf32>
    %c1_103 = arith.constant 1 : index
    %c2_104 = arith.constant 2 : index
    %c1_105 = arith.constant 1 : index
    %c0_106 = arith.constant 0 : index
    %c0_107 = arith.constant 0 : index
    %93 = vector.load %arg2[%c1_103, %c2_104, %c1_105, %c0_106, %c0_107] : memref<2x3x3x4x2xf32, #tpu.memory_space<vmem>>, vector<1x1x1x4x2xf32>
    %94 = vector.shape_cast %93 : vector<1x1x1x4x2xf32> to vector<4x2xf32>
    %95 = vector.extract_strided_slice %56 {offsets = [0, 37], sizes = [2, 288], strides = [1, 1]} : vector<2x384xf32> to vector<2x288xf32>
    %cst_108 = arith.constant dense<0.000000e+00> : vector<4x288xf32>
    %96 = tpu.matmul %94, %95, %cst_108 {dimension_numbers = #tpu.dot_dimension_numbers<[1], [0], [0], [1], [0, 0, 1, 1], [], []>} : vector<4x2xf32>, vector<2x288xf32>, vector<4x288xf32> -> vector<4x288xf32>
    %97 = arith.addf %92, %96 : vector<4x288xf32>
    %c1_109 = arith.constant 1 : index
    %c2_110 = arith.constant 2 : index
    %c2_111 = arith.constant 2 : index
    %c0_112 = arith.constant 0 : index
    %c0_113 = arith.constant 0 : index
    %98 = vector.load %arg2[%c1_109, %c2_110, %c2_111, %c0_112, %c0_113] : memref<2x3x3x4x2xf32, #tpu.memory_space<vmem>>, vector<1x1x1x4x2xf32>
    %99 = vector.shape_cast %98 : vector<1x1x1x4x2xf32> to vector<4x2xf32>
    %100 = vector.extract_strided_slice %56 {offsets = [0, 38], sizes = [2, 288], strides = [1, 1]} : vector<2x384xf32> to vector<2x288xf32>
    %cst_114 = arith.constant dense<0.000000e+00> : vector<4x288xf32>
    %101 = tpu.matmul %99, %100, %cst_114 {dimension_numbers = #tpu.dot_dimension_numbers<[1], [0], [0], [1], [0, 0, 1, 1], [], []>} : vector<4x2xf32>, vector<2x288xf32>, vector<4x288xf32> -> vector<4x288xf32>
    %102 = arith.addf %97, %101 : vector<4x288xf32>
    %c1_115 = arith.constant 1 : index
    %c0_116 = arith.constant 0 : index
    %c0_117 = arith.constant 0 : index
    %103 = vector.load %arg3[%c1_115, %c0_116, %c0_117] : memref<2x4x1xf32, #tpu.memory_space<vmem>>, vector<1x4x1xf32>
    %104 = vector.shape_cast %103 : vector<1x4x1xf32> to vector<4x1xf32>
    %105 = vector.broadcast %104 : vector<4x1xf32> to vector<4x288xf32>
    %106 = arith.addf %102, %105 : vector<4x288xf32>
    %cst_118 = arith.constant 0.000000e+00 : f32
    %107 = vector.broadcast %cst_118 : f32 to vector<4x288xf32>
    %108 = arith.maximumf %106, %107 : vector<4x288xf32>
    %109 = arith.addf %55, %108 : vector<4x288xf32>
    %110 = vector.broadcast %2 : vector<1x288xf32> to vector<4x288xf32>
    %111 = arith.mulf %109, %110 : vector<4x288xf32>
    %cst_119 = arith.constant dense<0.000000e+00> : vector<4xf32>
    %112 = vector.multi_reduction <add>, %111, %cst_119 [1] : vector<4x288xf32> to vector<4xf32>
    %113 = vector.shape_cast %112 : vector<4xf32> to vector<4x1xf32>
    %cst_120 = arith.constant 3.906250e-03 : f32
    %114 = vector.broadcast %cst_120 : f32 to vector<4x1xf32>
    %115 = arith.mulf %113, %114 : vector<4x1xf32>
    %c0_121 = arith.constant 0 : index
    %c0_122 = arith.constant 0 : index
    %116 = vector.load %arg4[%c0_121, %c0_122] : memref<32x4xf32, #tpu.memory_space<vmem>>, vector<32x4xf32>
    %cst_123 = arith.constant dense<0.000000e+00> : vector<32x1xf32>
    %117 = tpu.matmul %116, %115, %cst_123 {dimension_numbers = #tpu.dot_dimension_numbers<[1], [0], [0], [1], [0, 0, 1, 1], [], []>} : vector<32x4xf32>, vector<4x1xf32>, vector<32x1xf32> -> vector<32x1xf32>
    %c0_124 = arith.constant 0 : index
    %c0_125 = arith.constant 0 : index
    %118 = vector.load %arg5[%c0_124, %c0_125] : memref<32x1xf32, #tpu.memory_space<vmem>>, vector<32x1xf32>
    %119 = arith.addf %117, %118 : vector<32x1xf32>
    %cst_126 = arith.constant 0.000000e+00 : f32
    %120 = vector.broadcast %cst_126 : f32 to vector<32x1xf32>
    %121 = arith.maximumf %119, %120 : vector<32x1xf32>
    %c0_127 = arith.constant 0 : index
    %c0_128 = arith.constant 0 : index
    %122 = vector.load %arg6[%c0_127, %c0_128] : memref<8x32xf32, #tpu.memory_space<vmem>>, vector<8x32xf32>
    %cst_129 = arith.constant dense<0.000000e+00> : vector<8x1xf32>
    %123 = tpu.matmul %122, %121, %cst_129 {dimension_numbers = #tpu.dot_dimension_numbers<[1], [0], [0], [1], [0, 0, 1, 1], [], []>} : vector<8x32xf32>, vector<32x1xf32>, vector<8x1xf32> -> vector<8x1xf32>
    %c0_130 = arith.constant 0 : index
    %c0_131 = arith.constant 0 : index
    %124 = vector.load %arg7[%c0_130, %c0_131] : memref<8x1xf32, #tpu.memory_space<vmem>>, vector<8x1xf32>
    %125 = arith.addf %123, %124 : vector<8x1xf32>
    %126 = vector.extract_strided_slice %125 {offsets = [0, 0], sizes = [4, 1], strides = [1, 1]} : vector<8x1xf32> to vector<4x1xf32>
    %127 = vector.extract_strided_slice %125 {offsets = [4, 0], sizes = [4, 1], strides = [1, 1]} : vector<8x1xf32> to vector<4x1xf32>
    %128 = arith.maximumf %126, %127 : vector<4x1xf32>
    %129 = arith.subf %126, %128 : vector<4x1xf32>
    %130 = math.exp %129 : vector<4x1xf32>
    %131 = arith.subf %127, %128 : vector<4x1xf32>
    %132 = math.exp %131 : vector<4x1xf32>
    %133 = arith.addf %130, %132 : vector<4x1xf32>
    %134 = arith.divf %130, %133 : vector<4x1xf32>
    %135 = arith.divf %132, %133 : vector<4x1xf32>
    %136 = vector.broadcast %134 : vector<4x1xf32> to vector<4x288xf32>
    %137 = arith.mulf %136, %55 : vector<4x288xf32>
    %138 = vector.broadcast %135 : vector<4x1xf32> to vector<4x288xf32>
    %139 = arith.mulf %138, %108 : vector<4x288xf32>
    %140 = arith.addf %137, %139 : vector<4x288xf32>
    %c0_132 = arith.constant 0 : index
    %c0_133 = arith.constant 0 : index
    %c0_134 = arith.constant 0 : index
    %141 = vector.load %arg9[%c0_132, %c0_133, %c0_134] : memref<1x4x288xf32, #tpu.memory_space<vmem>>, vector<1x4x288xf32>
    %142 = vector.shape_cast %141 : vector<1x4x288xf32> to vector<4x288xf32>
    %143 = vector.shape_cast %140 : vector<4x288xf32> to vector<1x4x288xf32>
    tpu.vector_store %arg9[%c0_132, %c0_133, %c0_134], %143 {strides = array<i32>} : memref<1x4x288xf32, #tpu.memory_space<vmem>>, vector<1x4x288xf32>,
    return
  }
  func.func @transform_0(%arg0: i32) -> (i32, i32, i32) {
    %c0_i32 = arith.constant 0 : i32
    %c0_i32_0 = arith.constant 0 : i32
    %c0_i32_1 = arith.constant 0 : i32
    return %arg0, %c0_i32, %c0_i32_0 : i32, i32, i32
  }
  func.func @transform_1(%arg0: i32) -> (i32, i32, i32, i32, i32) {
    %c0_i32 = arith.constant 0 : i32
    %c0_i32_0 = arith.constant 0 : i32
    %c0_i32_1 = arith.constant 0 : i32
    %c0_i32_2 = arith.constant 0 : i32
    %c0_i32_3 = arith.constant 0 : i32
    %c0_i32_4 = arith.constant 0 : i32
    return %c0_i32, %c0_i32_0, %c0_i32_1, %c0_i32_2, %c0_i32_3 : i32, i32, i32, i32, i32
  }
  func.func @transform_2(%arg0: i32) -> (i32, i32, i32) {
    %c0_i32 = arith.constant 0 : i32
    %c0_i32_0 = arith.constant 0 : i32
    %c0_i32_1 = arith.constant 0 : i32
    %c0_i32_2 = arith.constant 0 : i32
    return %c0_i32, %c0_i32_0, %c0_i32_1 : i32, i32, i32
  }
  func.func @transform_3(%arg0: i32) -> (i32, i32) {
    %c0_i32 = arith.constant 0 : i32
    %c0_i32_0 = arith.constant 0 : i32
    %c0_i32_1 = arith.constant 0 : i32
    return %c0_i32, %c0_i32_0 : i32, i32
  }
  func.func @transform_4(%arg0: i32) -> (i32, i32) {
    %c0_i32 = arith.constant 0 : i32
    %c0_i32_0 = arith.constant 0 : i32
    %c0_i32_1 = arith.constant 0 : i32
    return %c0_i32, %c0_i32_0 : i32, i32
  }
  func.func @transform_5(%arg0: i32) -> (i32, i32) {
    %c0_i32 = arith.constant 0 : i32
    %c0_i32_0 = arith.constant 0 : i32
    %c0_i32_1 = arith.constant 0 : i32
    return %c0_i32, %c0_i32_0 : i32, i32
  }
  func.func @transform_6(%arg0: i32) -> (i32, i32) {
    %c0_i32 = arith.constant 0 : i32
    %c0_i32_0 = arith.constant 0 : i32
    %c0_i32_1 = arith.constant 0 : i32
    return %c0_i32, %c0_i32_0 : i32, i32
  }
  func.func @transform_7(%arg0: i32) -> (i32, i32) {
    %c0_i32 = arith.constant 0 : i32
    %c0_i32_0 = arith.constant 0 : i32
    %c0_i32_1 = arith.constant 0 : i32
    return %c0_i32, %c0_i32_0 : i32, i32
  }
  func.func @transform_8(%arg0: i32) -> (i32, i32, i32) {
    %c0_i32 = arith.constant 0 : i32
    %c0_i32_0 = arith.constant 0 : i32
    %c0_i32_1 = arith.constant 0 : i32
    return %arg0, %c0_i32, %c0_i32_0 : i32, i32, i32
  }
}

</mosaic_0001>

<llo_original>
// kernel: splat_conv2d.1
$region0: #{splat_conv2d.1}
  #allocation0 [shape = 'u32[]', space=smem, size = 0x4, offset = 0x4, fixed_abs, tag = 'smem constant byte address 0x4 - core index']
  #allocation1 [shape = 'u32[144,128]{1,0:T(1,128)}', space=vmem, size = 0x12000, scoped, tag = 'internal scratch']
  %s0 = inlined_call_operand.vmem [shape: f32[2,4,384], index: 0, kind: input, shape index: {}]
  %s1 = inlined_call_operand.vmem [shape: f32[2,3,3,4,2], index: 1, kind: input, shape index: {}]
  %s2 = inlined_call_operand.vmem [shape: f32[2,4,1], index: 2, kind: input, shape index: {}]
  %s3 = inlined_call_operand.vmem [shape: f32[32,4], index: 3, kind: input, shape index: {}]
  %s4 = inlined_call_operand.vmem [shape: f32[32,1], index: 4, kind: input, shape index: {}]
  %s5 = inlined_call_operand.vmem [shape: f32[8,32], index: 5, kind: input, shape index: {}]
  %s6 = inlined_call_operand.vmem [shape: f32[8,1], index: 6, kind: input, shape index: {}]
  %s7 = inlined_call_operand.vmem [shape: f32[1,288], index: 7, kind: input, shape index: {}]
  %s8 = inlined_call_operand.vmem [shape: f32[2,4,288], index: 8, kind: output, shape index: {}]
  %s9 = sld [smem:[#allocation0]]
  $region65: #{splat_conv2d.1} parent=0
    _
  %s11 = ssub.s32 1, %s9
  %s12 = scalar_select 0, %s11, %s9
  loop: start=0, step=1, limit=4
  $region2: #{splat_conv2d.1} parent=0 // loop_pre_header
    _
  $region3: #{splat_conv2d.1} parent=0 // loop_header
    %s14 = sphi 0, %s18
    %p15 = scmp.ge.s32.totalorder %s14, 4
    %s24 = sphi 0, %s26
    %s27 = sphi 0, %s24
    %s28 = sphi 0, %s27
    %s44 = sphi 0, %s28
    %s48 = sphi 0, %s48
    %s50 = sphi 0, %s48
    %s51 = sphi 0, %s50
    %s65 = sphi 0, %s51
    %s69 = sphi 0, %s69
    %s71 = sphi 0, %s69
    %s72 = sphi 0, %s71
    %s86 = sphi 0, %s72
    %s90 = sphi 0, %s90
    %s92 = sphi 0, %s90
    %s93 = sphi 0, %s92
    %s107 = sphi 0, %s93
    %s111 = sphi 0, %s111
    %s113 = sphi 0, %s111
    %s114 = sphi 0, %s113
    %s128 = sphi 0, %s114
    %s132 = sphi 0, %s132
    %s134 = sphi 0, %s132
    %s135 = sphi 0, %s134
    %s149 = sphi 0, %s135
    %s153 = sphi 0, %s153
    %s155 = sphi 0, %s153
    %s156 = sphi 0, %s155
    %s170 = sphi 0, %s156
    %s174 = sphi 0, %s174
    %s176 = sphi 0, %s174
    %s177 = sphi 0, %s176
    %s191 = sphi 0, %s177
    %s197 = sphi 0, %s199
    %s200 = sphi 0, %s197
    %s201 = sphi 0, %s200
    %s217 = sphi 0, %s201
  $region4: #{splat_conv2d.1} parent=0 // loop_header_branch
    %17 = sbr.rel (%p15) target = $region8
  $region5: #{splat_conv2d.1} parent=0 // loop_body
    %s19 = ssub.s32 %s14, 1
    %s20 = ssub.s32 %s14, 2
    %s21 = sadd.s32 %s14, 1
    %s22 = ssub.s32 %s14, %s21
    %p23 = scmp.eq.s32.totalorder %s22, 0
    %s25 = sadd.s32 %s24, 1
    %s26 = scalar_select %p23, %s24, %s25
    %p29 = pneg %p23
    %p30 = scmp.eq.s32.totalorder %s14, 1
    %p31 = por %p29, %p30
    %p32 = scmp.ne.s32.totalorder %s24, %s27
    %p33 = scmp.eq.s32.totalorder %s14, 0
    %p34 = por %p32, %p33
    %p35 = scmp.ne.s32.totalorder %s24, %s27
    %p36 = scmp.eq.s32.totalorder %s19, 1
    %p37 = por %p35, %p36
    %p38 = scmp.ne.s32.totalorder %s27, %s28
    %p39 = scmp.eq.s32.totalorder %s19, 0
    %p40 = por %p38, %p39
    %p41 = scmp.ne.s32.totalorder %s27, %s28
    %p42 = scmp.eq.s32.totalorder %s20, 1
    %p43 = por %p41, %p42
    %p45 = scmp.ne.s32.totalorder %s28, %s44
    %p46 = scmp.eq.s32.totalorder %s20, 0
    %p47 = por %p45, %p46
    %s49 = sadd.s32 %s48, 1
    %p52 = scmp.eq.s32.totalorder %s14, 1
    %p53 = scmp.ne.s32.totalorder %s48, %s50
    %p54 = scmp.eq.s32.totalorder %s14, 0
    %p55 = por %p53, %p54
    %p56 = scmp.ne.s32.totalorder %s48, %s50
    %p57 = scmp.eq.s32.totalorder %s19, 1
    %p58 = por %p56, %p57
    %p59 = scmp.ne.s32.totalorder %s50, %s51
    %p60 = scmp.eq.s32.totalorder %s19, 0
    %p61 = por %p59, %p60
    %p62 = scmp.ne.s32.totalorder %s50, %s51
    %p63 = scmp.eq.s32.totalorder %s20, 1
    %p64 = por %p62, %p63
    %p66 = scmp.ne.s32.totalorder %s51, %s65
    %p67 = scmp.eq.s32.totalorder %s20, 0
    %p68 = por %p66, %p67
    %s70 = sadd.s32 %s69, 1
    %p73 = scmp.eq.s32.totalorder %s14, 1
    %p74 = scmp.ne.s32.totalorder %s69, %s71
    %p75 = scmp.eq.s32.totalorder %s14, 0
    %p76 = por %p74, %p75
    %p77 = scmp.ne.s32.totalorder %s69, %s71
    %p78 = scmp.eq.s32.totalorder %s19, 1
    %p79 = por %p77, %p78
    %p80 = scmp.ne.s32.totalorder %s71, %s72
    %p81 = scmp.eq.s32.totalorder %s19, 0
    %p82 = por %p80, %p81
    %p83 = scmp.ne.s32.totalorder %s71, %s72
    %p84 = scmp.eq.s32.totalorder %s20, 1
    %p85 = por %p83, %p84
    %p87 = scmp.ne.s32.totalorder %s72, %s86
    %p88 = scmp.eq.s32.totalorder %s20, 0
    %p89 = por %p87, %p88
    %s91 = sadd.s32 %s90, 1
    %p94 = scmp.eq.s32.totalorder %s14, 1
    %p95 = scmp.ne.s32.totalorder %s90, %s92
    %p96 = scmp.eq.s32.totalorder %s14, 0
    %p97 = por %p95, %p96
    %p98 = scmp.ne.s32.totalorder %s90, %s92
    %p99 = scmp.eq.s32.totalorder %s19, 1
    %p100 = por %p98, %p99
    %p101 = scmp.ne.s32.totalorder %s92, %s93
    %p102 = scmp.eq.s32.totalorder %s19, 0
    %p103 = por %p101, %p102
    %p104 = scmp.ne.s32.totalorder %s92, %s93
    %p105 = scmp.eq.s32.totalorder %s20, 1
    %p106 = por %p104, %p105
    %p108 = scmp.ne.s32.totalorder %s93, %s107
    %p109 = scmp.eq.s32.totalorder %s20, 0
    %p110 = por %p108, %p109
    %s112 = sadd.s32 %s111, 1
    %p115 = scmp.eq.s32.totalorder %s14, 1
    %p116 = scmp.ne.s32.totalorder %s111, %s113
    %p117 = scmp.eq.s32.totalorder %s14, 0
    %p118 = por %p116, %p117
    %p119 = scmp.ne.s32.totalorder %s111, %s113
    %p120 = scmp.eq.s32.totalorder %s19, 1
    %p121 = por %p119, %p120
    %p122 = scmp.ne.s32.totalorder %s113, %s114
    %p123 = scmp.eq.s32.totalorder %s19, 0
    %p124 = por %p122, %p123
    %p125 = scmp.ne.s32.totalorder %s113, %s114
    %p126 = scmp.eq.s32.totalorder %s20, 1
    %p127 = por %p125, %p126
    %p129 = scmp.ne.s32.totalorder %s114, %s128
    %p130 = scmp.eq.s32.totalorder %s20, 0
    %p131 = por %p129, %p130
    %s133 = sadd.s32 %s132, 1
    %p136 = scmp.eq.s32.totalorder %s14, 1
    %p137 = scmp.ne.s32.totalorder %s132, %s134
    %p138 = scmp.eq.s32.totalorder %s14, 0
    %p139 = por %p137, %p138
    %p140 = scmp.ne.s32.totalorder %s132, %s134
    %p141 = scmp.eq.s32.totalorder %s19, 1
    %p142 = por %p140, %p141
    %p143 = scmp.ne.s32.totalorder %s134, %s135
    %p144 = scmp.eq.s32.totalorder %s19, 0
    %p145 = por %p143, %p144
    %p146 = scmp.ne.s32.totalorder %s134, %s135
    %p147 = scmp.eq.s32.totalorder %s20, 1
    %p148 = por %p146, %p147
    %p150 = scmp.ne.s32.totalorder %s135, %s149
    %p151 = scmp.eq.s32.totalorder %s20, 0
    %p152 = por %p150, %p151
    %s154 = sadd.s32 %s153, 1
    %p157 = scmp.eq.s32.totalorder %s14, 1
    %p158 = scmp.ne.s32.totalorder %s153, %s155
    %p159 = scmp.eq.s32.totalorder %s14, 0
    %p160 = por %p158, %p159
    %p161 = scmp.ne.s32.totalorder %s153, %s155
    %p162 = scmp.eq.s32.totalorder %s19, 1
    %p163 = por %p161, %p162
    %p164 = scmp.ne.s32.totalorder %s155, %s156
    %p165 = scmp.eq.s32.totalorder %s19, 0
    %p166 = por %p164, %p165
    %p167 = scmp.ne.s32.totalorder %s155, %s156
    %p168 = scmp.eq.s32.totalorder %s20, 1
    %p169 = por %p167, %p168
    %p171 = scmp.ne.s32.totalorder %s156, %s170
    %p172 = scmp.eq.s32.totalorder %s20, 0
    %p173 = por %p171, %p172
    %s175 = sadd.s32 %s174, 1
    %p178 = scmp.eq.s32.totalorder %s14, 1
    %p179 = scmp.ne.s32.totalorder %s174, %s176
    %p180 = scmp.eq.s32.totalorder %s14, 0
    %p181 = por %p179, %p180
    %p182 = scmp.ne.s32.totalorder %s174, %s176
    %p183 = scmp.eq.s32.totalorder %s19, 1
    %p184 = por %p182, %p183
    %p185 = scmp.ne.s32.totalorder %s176, %s177
    %p186 = scmp.eq.s32.totalorder %s19, 0
    %p187 = por %p185, %p186
    %p188 = scmp.ne.s32.totalorder %s176, %s177
    %p189 = scmp.eq.s32.totalorder %s20, 1
    %p190 = por %p188, %p189
    %p192 = scmp.ne.s32.totalorder %s177, %s191
    %p193 = scmp.eq.s32.totalorder %s20, 0
    %p194 = por %p192, %p193
    %s195 = ssub.s32 %s14, %s21
    %p196 = scmp.eq.s32.totalorder %s195, 0
    %s198 = sadd.s32 %s197, 1
    %s199 = scalar_select %p196, %s197, %s198
    %p202 = pneg %p196
    %p203 = scmp.eq.s32.totalorder %s14, 1
    %p204 = por %p202, %p203
    %p205 = scmp.ne.s32.totalorder %s197, %s200
    %p206 = scmp.eq.s32.totalorder %s14, 0
    %p207 = por %p205, %p206
    %p208 = scmp.ne.s32.totalorder %s197, %s200
    %p209 = scmp.eq.s32.totalorder %s19, 1
    %p210 = por %p208, %p209
    %p211 = scmp.ne.s32.totalorder %s200, %s201
    %p212 = scmp.eq.s32.totalorder %s19, 0
    %p213 = por %p211, %p212
    %p214 = scmp.ne.s32.totalorder %s200, %s201
    %p215 = scmp.eq.s32.totalorder %s20, 1
    %p216 = por %p214, %p215
    %p218 = scmp.ne.s32.totalorder %s201, %s217
    %p219 = scmp.eq.s32.totalorder %s20, 0
    %p220 = por %p218, %p219
    %p221 = scmp.le.s32.totalorder 1, %s14
    %p222 = scmp.lt.s32.totalorder %s14, 3
    %p223 = pnand %p221, %p222
    %p224 = pneg %p223
    // Predicated region
    $region9: #{splat_conv2d.1} parent=5 // pred_check
      _
    $region10: #{splat_conv2d.1} parent=5 // pred_check_branch
      %226 = sbr.rel (%p223) target = $region12
    $region11: #{splat_conv2d.1} parent=5 // pred_region
      %s227 = ssub.s32 %s14, 1
      // Predicated region
      $region13: #{splat_conv2d.1} parent=11 // pred_check
        %p228 = pneg %p61
      $region14: #{splat_conv2d.1} parent=11 // pred_check_branch
        %230 = sbr.rel (%p228) target = $region16
      $region15: #{splat_conv2d.1} parent=11 // pred_region
        _
      $region16: #{splat_conv2d.1} parent=11 // pred_fallthru
        _
      // Predicated region
      $region17: #{splat_conv2d.1} parent=11 // pred_check
        %p231 = pneg %p82
      $region18: #{splat_conv2d.1} parent=11 // pred_check_branch
        %233 = sbr.rel (%p231) target = $region20
      $region19: #{splat_conv2d.1} parent=11 // pred_region
        _
      $region20: #{splat_conv2d.1} parent=11 // pred_fallthru
        _
      // Predicated region
      $region21: #{splat_conv2d.1} parent=11 // pred_check
        %p234 = pneg %p103
      $region22: #{splat_conv2d.1} parent=11 // pred_check_branch
        %236 = sbr.rel (%p234) target = $region24
      $region23: #{splat_conv2d.1} parent=11 // pred_region
        _
      $region24: #{splat_conv2d.1} parent=11 // pred_fallthru
        _
      // Predicated region
      $region25: #{splat_conv2d.1} parent=11 // pred_check
        %p237 = pneg %p124
      $region26: #{splat_conv2d.1} parent=11 // pred_check_branch
        %239 = sbr.rel (%p237) target = $region28
      $region27: #{splat_conv2d.1} parent=11 // pred_region
        _
      $region28: #{splat_conv2d.1} parent=11 // pred_fallthru
        _
      // Predicated region
      $region29: #{splat_conv2d.1} parent=11 // pred_check
        %p240 = pneg %p145
      $region30: #{splat_conv2d.1} parent=11 // pred_check_branch
        %242 = sbr.rel (%p240) target = $region32
      $region31: #{splat_conv2d.1} parent=11 // pred_region
        _
      $region32: #{splat_conv2d.1} parent=11 // pred_fallthru
        _
      // Predicated region
      $region33: #{splat_conv2d.1} parent=11 // pred_check
        %p243 = pneg %p166
      $region34: #{splat_conv2d.1} parent=11 // pred_check_branch
        %245 = sbr.rel (%p243) target = $region36
      $region35: #{splat_conv2d.1} parent=11 // pred_region
        _
      $region36: #{splat_conv2d.1} parent=11 // pred_fallthru
        _
      // Predicated region
      $region37: #{splat_conv2d.1} parent=11 // pred_check
        %p246 = pneg %p187
      $region38: #{splat_conv2d.1} parent=11 // pred_check_branch
        %248 = sbr.rel (%p246) target = $region40
      $region39: #{splat_conv2d.1} parent=11 // pred_region
        _
      $region40: #{splat_conv2d.1} parent=11 // pred_fallthru
        _
    $region12: #{splat_conv2d.1} parent=5 // pred_fallthru
      _
    %p249 = scmp.lt.s32.totalorder %s14, 2
    // Predicated region
    $region41: #{splat_conv2d.1} parent=5 // pred_check
      %p250 = pneg %p249
    $region42: #{splat_conv2d.1} parent=5 // pred_check_branch
      %252 = sbr.rel (%p250) target = $region44
    $region43: #{splat_conv2d.1} parent=5 // pred_region
      // Predicated region
      $region45: #{splat_conv2d.1} parent=43 // pred_check
        %p253 = pneg %p34
      $region46: #{splat_conv2d.1} parent=43 // pred_check_branch
        %255 = sbr.rel (%p253) target = $region48
      $region47: #{splat_conv2d.1} parent=43 // pred_region
        %p256 = scmp.lt.s32.totalorder %s14, 1
        %s257 = scalar_select %p256, %s14, 1
        %s258 = smul.addr %s257, 3
        %s259 = smul.addr %s258, 4
        %s260 = scalar_lea.vmem %s0, %s259
      $region48: #{splat_conv2d.1} parent=43 // pred_fallthru
        _
    $region44: #{splat_conv2d.1} parent=5 // pred_fallthru
      _
    %p261 = scmp.le.s32.totalorder 1, %s14
    %p262 = scmp.lt.s32.totalorder %s14, 3
    %p263 = pnand %p261, %p262
    %p264 = pneg %p263
    // Predicated region
    $region49: #{splat_conv2d.1} parent=5 // pred_check
      _
    $region50: #{splat_conv2d.1} parent=5 // pred_check_branch
      %266 = sbr.rel (%p263) target = $region52
    $region51: #{splat_conv2d.1} parent=5 // pred_region
      %s267 = ssub.s32 %s14, 1
      %p268 = scmp.lt.s32.totalorder %s19, 1
      %s269 = scalar_select %p268, %s19, 1
      %s270 = smul.addr %s269, 3
      %s271 = smul.addr %s270, 4
      %s272 = scalar_lea.vmem %s0, %s271
      %p273 = pneg %p40
      %p274 = pneg %p37
      %p275 = pneg %p61
      %p276 = pneg %p58
      %p277 = pneg %p82
      %p278 = pneg %p79
      %p279 = pneg %p103
      %p280 = pneg %p100
      %p281 = pneg %p124
      %p282 = pneg %p121
      %p283 = pneg %p145
      %p284 = pneg %p142
      %p285 = pneg %p166
      %p286 = pneg %p163
      %p287 = pneg %p187
      %p288 = pneg %p184
      %p289 = pneg %p213
      %p290 = pneg %p210
      %p291 = scmp.lt.s32.totalorder %s19, 1
      %s292 = scalar_select %p291, %s19, 1
      %s293 = smul.addr %s292, 3
      %s294 = smul.addr %s293, 4
      %s295 = scalar_lea.vmem %s8, %s294
      %p296 = scmp.lt.s32.totalorder %s19, 1
      %s297 = scalar_select %p296, %s19, 1
      %s298 = smul.addr %s297, 3
      %s299 = smul.addr %s298, 4
      %s300 = scalar_lea.vmem %s0, %s299
      %p301 = scmp.lt.s32.totalorder %s19, 1
      %s302 = scalar_select %p301, %s19, 1
      %s303 = smul.addr %s302, 3
      %s304 = smul.addr %s303, 4
      %s305 = scalar_lea.vmem %s8, %s304
      %v306 = vld [vmem:[%s300] sm:$0xff]
      %v307 = vld [vmem:[%s300 + $0x8] sm:$0xf]
      %v308 = vld [vmem:[%s7] sm:$0x7]
      %v309 = vld [vmem:[%s1] sm:$0xf]
      %s310 = scalar_lea.vmem %s1, 4
      %v311 = vld [vmem:[%s310] sm:$0xf]
      %v314 = vcombine.high %v306, %v306
      %315 = vrot.lane.b32.xlu0 %v306, 127
      %v316 = vpop.permute.xlu0 %315
      %317 = vrot.lane.b32.xlu0 %v314, 127
      %v318 = vpop.permute.xlu0 %317
      %319 = vrot.lane.b32.xlu0 %v307, 127
      %v320 = vpop.permute.xlu0 %319
      %vm321 = vcmask 1039360
      %v322 = vsel %vm321, %v316, %v318
      %v323 = vsel %vm321, %v318, %v320
      %vm324 = vcmask 15360
      %v326 = vsel %vm324, %v311, 0
      %vm328 = vcmask 1041408
      %v329 = vsel %vm328, %v322, 0
      %v331 = vsel %vm328, %v323, 0
      %v333 = vsel %vm328, %v320, 0
      %335 = vmatprep.subr.mxu0 %v331
      %336 = vmatpush1.msra.mxu0 %v329
      %337 = vmatprep.subr.mxu0 0.0
      %338 = vmatpush1.msra.mxu0 0.0
      %339 = vmatprep.subr.mxu0 0.0
      %340 = vmatpush1.msra.mxu0 0.0
      %341 = vmatprep.subr.mxu0 0.0
      %342 = vmatpush1.msra.mxu0 0.0
      %343 = vmatprep.subr.mxu0 0.0
      %344 = vmatpush1.msra.mxu0 0.0
      %345 = vmatprep.subr.mxu0 0.0
      %346 = vmatpush1.msra.mxu0 0.0
      %347 = vmatprep.subr.mxu0 0.0
      %348 = vmatpush1.msra.mxu0 0.0
      %349 = vmatprep.subr.mxu0 0.0
      %350 = vmatpush1.msra.mxu0 0.0
      %351 = vmatprep.subr.mxu0 0.0
      %352 = vmatpush1.msra.mxu0 0.0
      %353 = vmatprep.subr.mxu0 0.0
      %354 = vmatpush1.msra.mxu0 0.0
      %355 = vmatprep.subr.mxu0 0.0
      %356 = vmatpush1.msra.mxu0 0.0
      %357 = vmatprep.subr.mxu0 0.0
      %358 = vmatpush1.msra.mxu0 0.0
      %359 = vmatprep.subr.mxu0 0.0
      %360 = vmatpush1.msra.mxu0 0.0
      %361 = vmatprep.subr.mxu0 0.0
      %362 = vmatpush1.msra.mxu0 0.0
      %363 = vmatprep.subr.mxu0 0.0
      %364 = vmatpush1.msra.mxu0 0.0
      %365 = vmatprep.subr.mxu0 0.0
      %366 = vmatpush1.msra.mxu0 0.0
      %367 = vmatprep.subr.mxu0 0.0
      %368 = vmatpush1.msra.mxu0 0.0
      %369 = vmatprep.subr.mxu0 0.0
      %370 = vmatpush1.msra.mxu0 0.0
      %371 = vmatprep.subr.mxu0 0.0
      %372 = vmatpush1.msra.mxu0 0.0
      %373 = vmatprep.subr.mxu0 0.0
      %374 = vmatpush1.msra.mxu0 0.0
      %375 = vmatprep.subr.mxu0 0.0
      %376 = vmatpush1.msra.mxu0 0.0
      %377 = vmatprep.subr.mxu0 0.0
      %378 = vmatpush1.msra.mxu0 0.0
      %379 = vmatprep.subr.mxu0 0.0
      %380 = vmatpush1.msra.mxu0 0.0
      %381 = vmatprep.subr.mxu0 0.0
      %382 = vmatpush1.msra.mxu0 0.0
      %383 = vmatprep.subr.mxu0 0.0
      %384 = vmatpush1.msra.mxu0 0.0
      %385 = vmatprep.subr.mxu0 0.0
      %386 = vmatpush1.msra.mxu0 0.0
      %387 = vmatprep.subr.mxu0 0.0
      %388 = vmatpush1.msra.mxu0 0.0
      %389 = vmatprep.subr.mxu0 0.0
      %390 = vmatpush1.msra.mxu0 0.0
      %391 = vmatprep.subr.mxu0 0.0
      %392 = vmatpush1.msra.mxu0 0.0
      %393 = vmatprep.subr.mxu0 0.0
      %394 = vmatpush1.msra.mxu0 0.0
      %395 = vmatprep.subr.mxu0 0.0
      %396 = vmatpush1.msra.mxu0 0.0
      %397 = vmatprep.subr.mxu0 0.0
      %398 = vmatpush1.msra.mxu0 0.0
      %399 = vmatprep.mubr.f32.mxu0 0.0
      %400 = vmatmul.mubr.f32.gmra.mrb[0].mxu0 %v326
      %v401 = vpop.f32.mrb[0].mxu0
      %v402 = vadd.f32 0.0, %v401
      %v403 = vpop.f32.mrb[0].mxu0
      %v404 = vadd.f32 0.0, %v403
      %405 = vdwg.mxu0
      %406 = vmatprep.subr.mxu0 0.0
      %407 = vmatpush1.msra.mxu0 %v333
      %408 = vmatprep.subr.mxu0 0.0
      %409 = vmatpush1.msra.mxu0 0.0
      %410 = vmatprep.subr.mxu0 0.0
      %411 = vmatpush1.msra.mxu0 0.0
      %412 = vmatprep.subr.mxu0 0.0
      %413 = vmatpush1.msra.mxu0 0.0
      %414 = vmatprep.subr.mxu0 0.0
      %415 = vmatpush1.msra.mxu0 0.0
      %416 = vmatprep.subr.mxu0 0.0
      %417 = vmatpush1.msra.mxu0 0.0
      %418 = vmatprep.subr.mxu0 0.0
      %419 = vmatpush1.msra.mxu0 0.0
      %420 = vmatprep.subr.mxu0 0.0
      %421 = vmatpush1.msra.mxu0 0.0
      %422 = vmatprep.subr.mxu0 0.0
      %423 = vmatpush1.msra.mxu0 0.0
      %424 = vmatprep.subr.mxu0 0.0
      %425 = vmatpush1.msra.mxu0 0.0
      %426 = vmatprep.subr.mxu0 0.0
      %427 = vmatpush1.msra.mxu0 0.0
      %428 = vmatprep.subr.mxu0 0.0
      %429 = vmatpush1.msra.mxu0 0.0
      %430 = vmatprep.subr.mxu0 0.0
      %431 = vmatpush1.msra.mxu0 0.0
      %432 = vmatprep.subr.mxu0 0.0
      %433 = vmatpush1.msra.mxu0 0.0
      %434 = vmatprep.subr.mxu0 0.0
      %435 = vmatpush1.msra.mxu0 0.0
      %436 = vmatprep.subr.mxu0 0.0
      %437 = vmatpush1.msra.mxu0 0.0
      %438 = vmatprep.subr.mxu0 0.0
      %439 = vmatpush1.msra.mxu0 0.0
      %440 = vmatprep.subr.mxu0 0.0
      %441 = vmatpush1.msra.mxu0 0.0
      %442 = vmatprep.subr.mxu0 0.0
      %443 = vmatpush1.msra.mxu0 0.0
      %444 = vmatprep.subr.mxu0 0.0
      %445 = vmatpush1.msra.mxu0 0.0
      %446 = vmatprep.subr.mxu0 0.0
      %447 = vmatpush1.msra.mxu0 0.0
      %448 = vmatprep.subr.mxu0 0.0
      %449 = vmatpush1.msra.mxu0 0.0
      %450 = vmatprep.subr.mxu0 0.0
      %451 = vmatpush1.msra.mxu0 0.0
      %452 = vmatprep.subr.mxu0 0.0
      %453 = vmatpush1.msra.mxu0 0.0
      %454 = vmatprep.subr.mxu0 0.0
      %455 = vmatpush1.msra.mxu0 0.0
      %456 = vmatprep.subr.mxu0 0.0
      %457 = vmatpush1.msra.mxu0 0.0
      %458 = vmatprep.subr.mxu0 0.0
      %459 = vmatpush1.msra.mxu0 0.0
      %460 = vmatprep.subr.mxu0 0.0
      %461 = vmatpush1.msra.mxu0 0.0
      %462 = vmatprep.subr.mxu0 0.0
      %463 = vmatpush1.msra.mxu0 0.0
      %464 = vmatprep.subr.mxu0 0.0
      %465 = vmatpush1.msra.mxu0 0.0
      %466 = vmatprep.subr.mxu0 0.0
      %467 = vmatpush1.msra.mxu0 0.0
      %468 = vmatprep.subr.mxu0 0.0
      %469 = vmatpush1.msra.mxu0 0.0
      %470 = vmatprep.mubr.f32.mxu0 0.0
      %471 = vmatmul.mubr.f32.gmra.mrb[0].mxu0 %v326
      %v472 = vpop.f32.mrb[0].mxu0
      %v473 = vadd.f32 0.0, %v472
      %v474 = vpop.f32.mrb[0].mxu0
      %475 = vdwg.mxu0
      %v477 = vsel %vm324, %v309, 0
      %v479 = vsel %vm328, %v306, 0
      %v481 = vsel %vm328, %v314, 0
      %v483 = vsel %vm328, %v307, 0
      %485 = vmatprep.subr.mxu0 %v481
      %486 = vmatpush1.msra.mxu0 %v479
      %487 = vmatprep.subr.mxu0 0.0
      %488 = vmatpush1.msra.mxu0 0.0
      %489 = vmatprep.subr.mxu0 0.0
      %490 = vmatpush1.msra.mxu0 0.0
      %491 = vmatprep.subr.mxu0 0.0
      %492 = vmatpush1.msra.mxu0 0.0
      %493 = vmatprep.subr.mxu0 0.0
      %494 = vmatpush1.msra.mxu0 0.0
      %495 = vmatprep.subr.mxu0 0.0
      %496 = vmatpush1.msra.mxu0 0.0
      %497 = vmatprep.subr.mxu0 0.0
      %498 = vmatpush1.msra.mxu0 0.0
      %499 = vmatprep.subr.mxu0 0.0
      %500 = vmatpush1.msra.mxu0 0.0
      %501 = vmatprep.subr.mxu0 0.0
      %502 = vmatpush1.msra.mxu0 0.0
      %503 = vmatprep.subr.mxu0 0.0
      %504 = vmatpush1.msra.mxu0 0.0
      %505 = vmatprep.subr.mxu0 0.0
      %506 = vmatpush1.msra.mxu0 0.0
      %507 = vmatprep.subr.mxu0 0.0
      %508 = vmatpush1.msra.mxu0 0.0
      %509 = vmatprep.subr.mxu0 0.0
      %510 = vmatpush1.msra.mxu0 0.0
      %511 = vmatprep.subr.mxu0 0.0
      %512 = vmatpush1.msra.mxu0 0.0
      %513 = vmatprep.subr.mxu0 0.0
      %514 = vmatpush1.msra.mxu0 0.0
      %515 = vmatprep.subr.mxu0 0.0
      %516 = vmatpush1.msra.mxu0 0.0
      %517 = vmatprep.subr.mxu0 0.0
      %518 = vmatpush1.msra.mxu0 0.0
      %519 = vmatprep.subr.mxu0 0.0
      %520 = vmatpush1.msra.mxu0 0.0
      %521 = vmatprep.subr.mxu0 0.0
      %522 = vmatpush1.msra.mxu0 0.0
      %523 = vmatprep.subr.mxu0 0.0
      %524 = vmatpush1.msra.mxu0 0.0
      %525 = vmatprep.subr.mxu0 0.0
      %526 = vmatpush1.msra.mxu0 0.0
      %527 = vmatprep.subr.mxu0 0.0
      %528 = vmatpush1.msra.mxu0 0.0
      %529 = vmatprep.subr.mxu0 0.0
      %530 = vmatpush1.msra.mxu0 0.0
      %531 = vmatprep.subr.mxu0 0.0
      %532 = vmatpush1.msra.mxu0 0.0
      %533 = vmatprep.subr.mxu0 0.0
      %534 = vmatpush1.msra.mxu0 0.0
      %535 = vmatprep.subr.mxu0 0.0
      %536 = vmatpush1.msra.mxu0 0.0
      %537 = vmatprep.subr.mxu0 0.0
      %538 = vmatpush1.msra.mxu0 0.0
      %539 = vmatprep.subr.mxu0 0.0
      %540 = vmatpush1.msra.mxu0 0.0
      %541 = vmatprep.subr.mxu0 0.0
      %542 = vmatpush1.msra.mxu0 0.0
      %543 = vmatprep.subr.mxu0 0.0
      %544 = vmatpush1.msra.mxu0 0.0
      %545 = vmatprep.subr.mxu0 0.0
      %546 = vmatpush1.msra.mxu0 0.0
      %547 = vmatprep.subr.mxu0 0.0
      %548 = vmatpush1.msra.mxu0 0.0
      %549 = vmatprep.mubr.f32.mxu0 0.0
      %550 = vmatmul.mubr.f32.gmra.mrb[0].mxu0 %v477
      %v551 = vpop.f32.mrb[0].mxu0
      %v552 = vadd.f32 %v402, %v551
      %v553 = vpop.f32.mrb[0].mxu0
      %v554 = vadd.f32 %v404, %v553
      %555 = vdwg.mxu0
      %556 = vmatprep.subr.mxu0 0.0
      %557 = vmatpush1.msra.mxu0 %v483
      %558 = vmatprep.subr.mxu0 0.0
      %559 = vmatpush1.msra.mxu0 0.0
      %560 = vmatprep.subr.mxu0 0.0
      %561 = vmatpush1.msra.mxu0 0.0
      %562 = vmatprep.subr.mxu0 0.0
      %563 = vmatpush1.msra.mxu0 0.0
      %564 = vmatprep.subr.mxu0 0.0
      %565 = vmatpush1.msra.mxu0 0.0
      %566 = vmatprep.subr.mxu0 0.0
      %567 = vmatpush1.msra.mxu0 0.0
      %568 = vmatprep.subr.mxu0 0.0
      %569 = vmatpush1.msra.mxu0 0.0
      %570 = vmatprep.subr.mxu0 0.0
      %571 = vmatpush1.msra.mxu0 0.0
      %572 = vmatprep.subr.mxu0 0.0
      %573 = vmatpush1.msra.mxu0 0.0
      %574 = vmatprep.subr.mxu0 0.0
      %575 = vmatpush1.msra.mxu0 0.0
      %576 = vmatprep.subr.mxu0 0.0
      %577 = vmatpush1.msra.mxu0 0.0
      %578 = vmatprep.subr.mxu0 0.0
      %579 = vmatpush1.msra.mxu0 0.0
      %580 = vmatprep.subr.mxu0 0.0
      %581 = vmatpush1.msra.mxu0 0.0
      %582 = vmatprep.subr.mxu0 0.0
      %583 = vmatpush1.msra.mxu0 0.0
      %584 = vmatprep.subr.mxu0 0.0
      %585 = vmatpush1.msra.mxu0 0.0
      %586 = vmatprep.subr.mxu0 0.0
      %587 = vmatpush1.msra.mxu0 0.0
      %588 = vmatprep.subr.mxu0 0.0
      %589 = vmatpush1.msra.mxu0 0.0
      %590 = vmatprep.subr.mxu0 0.0
      %591 = vmatpush1.msra.mxu0 0.0
      %592 = vmatprep.subr.mxu0 0.0
      %593 = vmatpush1.msra.mxu0 0.0
      %594 = vmatprep.subr.mxu0 0.0
      %595 = vmatpush1.msra.mxu0 0.0
      %596 = vmatprep.subr.mxu0 0.0
      %597 = vmatpush1.msra.mxu0 0.0
      %598 = vmatprep.subr.mxu0 0.0
      %599 = vmatpush1.msra.mxu0 0.0
      %600 = vmatprep.subr.mxu0 0.0
      %601 = vmatpush1.msra.mxu0 0.0
      %602 = vmatprep.subr.mxu0 0.0
      %603 = vmatpush1.msra.mxu0 0.0
      %604 = vmatprep.subr.mxu0 0.0
      %605 = vmatpush1.msra.mxu0 0.0
      %606 = vmatprep.subr.mxu0 0.0
      %607 = vmatpush1.msra.mxu0 0.0
      %608 = vmatprep.subr.mxu0 0.0
      %609 = vmatpush1.msra.mxu0 0.0
      %610 = vmatprep.subr.mxu0 0.0
      %611 = vmatpush1.msra.mxu0 0.0
      %612 = vmatprep.subr.mxu0 0.0
      %613 = vmatpush1.msra.mxu0 0.0
      %614 = vmatprep.subr.mxu0 0.0
      %615 = vmatpush1.msra.mxu0 0.0
      %616 = vmatprep.subr.mxu0 0.0
      %617 = vmatpush1.msra.mxu0 0.0
      %618 = vmatprep.subr.mxu0 0.0
      %619 = vmatpush1.msra.mxu0 0.0
      %620 = vmatprep.mubr.f32.mxu0 0.0
      %621 = vmatmul.mubr.f32.gmra.mrb[0].mxu0 %v477
      %v622 = vpop.f32.mrb[0].mxu0
      %v623 = vadd.f32 %v473, %v622
      %v624 = vpop.f32.mrb[0].mxu0
      %625 = vdwg.mxu0
      %s626 = scalar_lea.vmem %s1, 8
      %v627 = vld [vmem:[%s626] sm:$0xf]
      %628 = vrot.lane.b32.xlu0 %v306, 126
      %v629 = vpop.permute.xlu0 %628
      %630 = vrot.lane.b32.xlu0 %v314, 126
      %v631 = vpop.permute.xlu0 %630
      %632 = vrot.lane.b32.xlu0 %v307, 126
      %v633 = vpop.permute.xlu0 %632
      %vm634 = vcmask 1031168
      %v635 = vsel %vm634, %v629, %v631
      %v636 = vsel %vm634, %v631, %v633
      %v638 = vsel %vm324, %v627, 0
      %v640 = vsel %vm328, %v635, 0
      %v642 = vsel %vm328, %v636, 0
      %v644 = vsel %vm328, %v633, 0
      %646 = vmatprep.subr.mxu0 %v642
      %647 = vmatpush1.msra.mxu0 %v640
      %648 = vmatprep.subr.mxu0 0.0
      %649 = vmatpush1.msra.mxu0 0.0
      %650 = vmatprep.subr.mxu0 0.0
      %651 = vmatpush1.msra.mxu0 0.0
      %652 = vmatprep.subr.mxu0 0.0
      %653 = vmatpush1.msra.mxu0 0.0
      %654 = vmatprep.subr.mxu0 0.0
      %655 = vmatpush1.msra.mxu0 0.0
      %656 = vmatprep.subr.mxu0 0.0
      %657 = vmatpush1.msra.mxu0 0.0
      %658 = vmatprep.subr.mxu0 0.0
      %659 = vmatpush1.msra.mxu0 0.0
      %660 = vmatprep.subr.mxu0 0.0
      %661 = vmatpush1.msra.mxu0 0.0
      %662 = vmatprep.subr.mxu0 0.0
      %663 = vmatpush1.msra.mxu0 0.0
      %664 = vmatprep.subr.mxu0 0.0
      %665 = vmatpush1.msra.mxu0 0.0
      %666 = vmatprep.subr.mxu0 0.0
      %667 = vmatpush1.msra.mxu0 0.0
      %668 = vmatprep.subr.mxu0 0.0
      %669 = vmatpush1.msra.mxu0 0.0
      %670 = vmatprep.subr.mxu0 0.0
      %671 = vmatpush1.msra.mxu0 0.0
      %672 = vmatprep.subr.mxu0 0.0
      %673 = vmatpush1.msra.mxu0 0.0
      %674 = vmatprep.subr.mxu0 0.0
      %675 = vmatpush1.msra.mxu0 0.0
      %676 = vmatprep.subr.mxu0 0.0
      %677 = vmatpush1.msra.mxu0 0.0
      %678 = vmatprep.subr.mxu0 0.0
      %679 = vmatpush1.msra.mxu0 0.0
      %680 = vmatprep.subr.mxu0 0.0
      %681 = vmatpush1.msra.mxu0 0.0
      %682 = vmatprep.subr.mxu0 0.0
      %683 = vmatpush1.msra.mxu0 0.0
      %684 = vmatprep.subr.mxu0 0.0
      %685 = vmatpush1.msra.mxu0 0.0
      %686 = vmatprep.subr.mxu0 0.0
      %687 = vmatpush1.msra.mxu0 0.0
      %688 = vmatprep.subr.mxu0 0.0
      %689 = vmatpush1.msra.mxu0 0.0
      %690 = vmatprep.subr.mxu0 0.0
      %691 = vmatpush1.msra.mxu0 0.0
      %692 = vmatprep.subr.mxu0 0.0
      %693 = vmatpush1.msra.mxu0 0.0
      %694 = vmatprep.subr.mxu0 0.0
      %695 = vmatpush1.msra.mxu0 0.0
      %696 = vmatprep.subr.mxu0 0.0
      %697 = vmatpush1.msra.mxu0 0.0
      %698 = vmatprep.subr.mxu0 0.0
      %699 = vmatpush1.msra.mxu0 0.0
      %700 = vmatprep.subr.mxu0 0.0
      %701 = vmatpush1.msra.mxu0 0.0
      %702 = vmatprep.subr.mxu0 0.0
      %703 = vmatpush1.msra.mxu0 0.0
      %704 = vmatprep.subr.mxu0 0.0
      %705 = vmatpush1.msra.mxu0 0.0
      %706 = vmatprep.subr.mxu0 0.0
      %707 = vmatpush1.msra.mxu0 0.0
      %708 = vmatprep.subr.mxu0 0.0
      %709 = vmatpush1.msra.mxu0 0.0
      %710 = vmatprep.mubr.f32.mxu0 0.0
      %711 = vmatmul.mubr.f32.gmra.mrb[0].mxu0 %v638
      %v712 = vpop.f32.mrb[0].mxu0
      %v713 = vadd.f32 0.0, %v712
      %v714 = vpop.f32.mrb[0].mxu0
      %v715 = vadd.f32 0.0, %v714
      %716 = vdwg.mxu0
      %717 = vmatprep.subr.mxu0 0.0
      %718 = vmatpush1.msra.mxu0 %v644
      %719 = vmatprep.subr.mxu0 0.0
      %720 = vmatpush1.msra.mxu0 0.0
      %721 = vmatprep.subr.mxu0 0.0
      %722 = vmatpush1.msra.mxu0 0.0
      %723 = vmatprep.subr.mxu0 0.0
      %724 = vmatpush1.msra.mxu0 0.0
      %725 = vmatprep.subr.mxu0 0.0
      %726 = vmatpush1.msra.mxu0 0.0
      %727 = vmatprep.subr.mxu0 0.0
      %728 = vmatpush1.msra.mxu0 0.0
      %729 = vmatprep.subr.mxu0 0.0
      %730 = vmatpush1.msra.mxu0 0.0
      %731 = vmatprep.subr.mxu0 0.0
      %732 = vmatpush1.msra.mxu0 0.0
      %733 = vmatprep.subr.mxu0 0.0
      %734 = vmatpush1.msra.mxu0 0.0
      %735 = vmatprep.subr.mxu0 0.0
      %736 = vmatpush1.msra.mxu0 0.0
      %737 = vmatprep.subr.mxu0 0.0
      %738 = vmatpush1.msra.mxu0 0.0
      %739 = vmatprep.subr.mxu0 0.0
      %740 = vmatpush1.msra.mxu0 0.0
      %741 = vmatprep.subr.mxu0 0.0
      %742 = vmatpush1.msra.mxu0 0.0
      %743 = vmatprep.subr.mxu0 0.0
      %744 = vmatpush1.msra.mxu0 0.0
      %745 = vmatprep.subr.mxu0 0.0
      %746 = vmatpush1.msra.mxu0 0.0
      %747 = vmatprep.subr.mxu0 0.0
      %748 = vmatpush1.msra.mxu0 0.0
      %749 = vmatprep.subr.mxu0 0.0
      %750 = vmatpush1.msra.mxu0 0.0
      %751 = vmatprep.subr.mxu0 0.0
      %752 = vmatpush1.msra.mxu0 0.0
      %753 = vmatprep.subr.mxu0 0.0
      %754 = vmatpush1.msra.mxu0 0.0
      %755 = vmatprep.subr.mxu0 0.0
      %756 = vmatpush1.msra.mxu0 0.0
      %757 = vmatprep.subr.mxu0 0.0
      %758 = vmatpush1.msra.mxu0 0.0
      %759 = vmatprep.subr.mxu0 0.0
      %760 = vmatpush1.msra.mxu0 0.0
      %761 = vmatprep.subr.mxu0 0.0
      %762 = vmatpush1.msra.mxu0 0.0
      %763 = vmatprep.subr.mxu0 0.0
      %764 = vmatpush1.msra.mxu0 0.0
      %765 = vmatprep.subr.mxu0 0.0
      %766 = vmatpush1.msra.mxu0 0.0
      %767 = vmatprep.subr.mxu0 0.0
      %768 = vmatpush1.msra.mxu0 0.0
      %769 = vmatprep.subr.mxu0 0.0
      %770 = vmatpush1.msra.mxu0 0.0
      %771 = vmatprep.subr.mxu0 0.0
      %772 = vmatpush1.msra.mxu0 0.0
      %773 = vmatprep.subr.mxu0 0.0
      %774 = vmatpush1.msra.mxu0 0.0
      %775 = vmatprep.subr.mxu0 0.0
      %776 = vmatpush1.msra.mxu0 0.0
      %777 = vmatprep.subr.mxu0 0.0
      %778 = vmatpush1.msra.mxu0 0.0
      %779 = vmatprep.subr.mxu0 0.0
      %780 = vmatpush1.msra.mxu0 0.0
      %781 = vmatprep.mubr.f32.mxu0 0.0
      %782 = vmatmul.mubr.f32.gmra.mrb[0].mxu0 %v638
      %v783 = vpop.f32.mrb[0].mxu0
      %v784 = vadd.f32 0.0, %v783
      %v785 = vpop.f32.mrb[0].mxu0
      %786 = vdwg.mxu0
      %v787 = vadd.f32 %v552, %v713
      %v788 = vadd.f32 %v554, %v715
      %v789 = vadd.f32 %v623, %v784
      %s790 = scalar_lea.vmem %s1, 12
      %v791 = vld [vmem:[%s790] sm:$0xf]
      %792 = vrot.lane.b32.xlu0 %v306, 110
      %v793 = vpop.permute.xlu0 %792
      %794 = vrot.lane.b32.xlu0 %v314, 110
      %v795 = vpop.permute.xlu0 %794
      %796 = vrot.lane.b32.xlu0 %v307, 110
      %v797 = vpop.permute.xlu0 %796
      %vm798 = vcmask 900096
      %v799 = vsel %vm798, %v793, %v795
      %v800 = vsel %vm798, %v795, %v797
      %v802 = vsel %vm324, %v791, 0
      %v804 = vsel %vm328, %v799, 0
      %v806 = vsel %vm328, %v800, 0
      %v808 = vsel %vm328, %v797, 0
      %810 = vmatprep.subr.mxu0 %v806
      %811 = vmatpush1.msra.mxu0 %v804
      %812 = vmatprep.subr.mxu0 0.0
      %813 = vmatpush1.msra.mxu0 0.0
      %814 = vmatprep.subr.mxu0 0.0
      %815 = vmatpush1.msra.mxu0 0.0
      %816 = vmatprep.subr.mxu0 0.0
      %817 = vmatpush1.msra.mxu0 0.0
      %818 = vmatprep.subr.mxu0 0.0
      %819 = vmatpush1.msra.mxu0 0.0
      %820 = vmatprep.subr.mxu0 0.0
      %821 = vmatpush1.msra.mxu0 0.0
      %822 = vmatprep.subr.mxu0 0.0
      %823 = vmatpush1.msra.mxu0 0.0
      %824 = vmatprep.subr.mxu0 0.0
      %825 = vmatpush1.msra.mxu0 0.0
      %826 = vmatprep.subr.mxu0 0.0
      %827 = vmatpush1.msra.mxu0 0.0
      %828 = vmatprep.subr.mxu0 0.0
      %829 = vmatpush1.msra.mxu0 0.0
      %830 = vmatprep.subr.mxu0 0.0
      %831 = vmatpush1.msra.mxu0 0.0
      %832 = vmatprep.subr.mxu0 0.0
      %833 = vmatpush1.msra.mxu0 0.0
      %834 = vmatprep.subr.mxu0 0.0
      %835 = vmatpush1.msra.mxu0 0.0
      %836 = vmatprep.subr.mxu0 0.0
      %837 = vmatpush1.msra.mxu0 0.0
      %838 = vmatprep.subr.mxu0 0.0
      %839 = vmatpush1.msra.mxu0 0.0
      %840 = vmatprep.subr.mxu0 0.0
      %841 = vmatpush1.msra.mxu0 0.0
      %842 = vmatprep.subr.mxu0 0.0
      %843 = vmatpush1.msra.mxu0 0.0
      %844 = vmatprep.subr.mxu0 0.0
      %845 = vmatpush1.msra.mxu0 0.0
      %846 = vmatprep.subr.mxu0 0.0
      %847 = vmatpush1.msra.mxu0 0.0
      %848 = vmatprep.subr.mxu0 0.0
      %849 = vmatpush1.msra.mxu0 0.0
      %850 = vmatprep.subr.mxu0 0.0
      %851 = vmatpush1.msra.mxu0 0.0
      %852 = vmatprep.subr.mxu0 0.0
      %853 = vmatpush1.msra.mxu0 0.0
      %854 = vmatprep.subr.mxu0 0.0
      %855 = vmatpush1.msra.mxu0 0.0
      %856 = vmatprep.subr.mxu0 0.0
      %857 = vmatpush1.msra.mxu0 0.0
      %858 = vmatprep.subr.mxu0 0.0
      %859 = vmatpush1.msra.mxu0 0.0
      %860 = vmatprep.subr.mxu0 0.0
      %861 = vmatpush1.msra.mxu0 0.0
      %862 = vmatprep.subr.mxu0 0.0
      %863 = vmatpush1.msra.mxu0 0.0
      %864 = vmatprep.subr.mxu0 0.0
      %865 = vmatpush1.msra.mxu0 0.0
      %866 = vmatprep.subr.mxu0 0.0
      %867 = vmatpush1.msra.mxu0 0.0
      %868 = vmatprep.subr.mxu0 0.0
      %869 = vmatpush1.msra.mxu0 0.0
      %870 = vmatprep.subr.mxu0 0.0
      %871 = vmatpush1.msra.mxu0 0.0
      %872 = vmatprep.subr.mxu0 0.0
      %873 = vmatpush1.msra.mxu0 0.0
      %874 = vmatprep.mubr.f32.mxu0 0.0
      %875 = vmatmul.mubr.f32.gmra.mrb[0].mxu0 %v802
      %v876 = vpop.f32.mrb[0].mxu0
      %v877 = vadd.f32 0.0, %v876
      %v878 = vpop.f32.mrb[0].mxu0
      %v879 = vadd.f32 0.0, %v878
      %880 = vdwg.mxu0
      %881 = vmatprep.subr.mxu0 0.0
      %882 = vmatpush1.msra.mxu0 %v808
      %883 = vmatprep.subr.mxu0 0.0
      %884 = vmatpush1.msra.mxu0 0.0
      %885 = vmatprep.subr.mxu0 0.0
      %886 = vmatpush1.msra.mxu0 0.0
      %887 = vmatprep.subr.mxu0 0.0
      %888 = vmatpush1.msra.mxu0 0.0
      %889 = vmatprep.subr.mxu0 0.0
      %890 = vmatpush1.msra.mxu0 0.0
      %891 = vmatprep.subr.mxu0 0.0
      %892 = vmatpush1.msra.mxu0 0.0
      %893 = vmatprep.subr.mxu0 0.0
      %894 = vmatpush1.msra.mxu0 0.0
      %895 = vmatprep.subr.mxu0 0.0
      %896 = vmatpush1.msra.mxu0 0.0
      %897 = vmatprep.subr.mxu0 0.0
      %898 = vmatpush1.msra.mxu0 0.0
      %899 = vmatprep.subr.mxu0 0.0
      %900 = vmatpush1.msra.mxu0 0.0
      %901 = vmatprep.subr.mxu0 0.0
      %902 = vmatpush1.msra.mxu0 0.0
      %903 = vmatprep.subr.mxu0 0.0
      %904 = vmatpush1.msra.mxu0 0.0
      %905 = vmatprep.subr.mxu0 0.0
      %906 = vmatpush1.msra.mxu0 0.0
      %907 = vmatprep.subr.mxu0 0.0
      %908 = vmatpush1.msra.mxu0 0.0
      %909 = vmatprep.subr.mxu0 0.0
      %910 = vmatpush1.msra.mxu0 0.0
      %911 = vmatprep.subr.mxu0 0.0
      %912 = vmatpush1.msra.mxu0 0.0
      %913 = vmatprep.subr.mxu0 0.0
      %914 = vmatpush1.msra.mxu0 0.0
      %915 = vmatprep.subr.mxu0 0.0
      %916 = vmatpush1.msra.mxu0 0.0
      %917 = vmatprep.subr.mxu0 0.0
      %918 = vmatpush1.msra.mxu0 0.0
      %919 = vmatprep.subr.mxu0 0.0
      %920 = vmatpush1.msra.mxu0 0.0
      %921 = vmatprep.subr.mxu0 0.0
      %922 = vmatpush1.msra.mxu0 0.0
      %923 = vmatprep.subr.mxu0 0.0
      %924 = vmatpush1.msra.mxu0 0.0
      %925 = vmatprep.subr.mxu0 0.0
      %926 = vmatpush1.msra.mxu0 0.0
      %927 = vmatprep.subr.mxu0 0.0
      %928 = vmatpush1.msra.mxu0 0.0
      %929 = vmatprep.subr.mxu0 0.0
      %930 = vmatpush1.msra.mxu0 0.0
      %931 = vmatprep.subr.mxu0 0.0
      %932 = vmatpush1.msra.mxu0 0.0
      %933 = vmatprep.subr.mxu0 0.0
      %934 = vmatpush1.msra.mxu0 0.0
      %935 = vmatprep.subr.mxu0 0.0
      %936 = vmatpush1.msra.mxu0 0.0
      %937 = vmatprep.subr.mxu0 0.0
      %938 = vmatpush1.msra.mxu0 0.0
      %939 = vmatprep.subr.mxu0 0.0
      %940 = vmatpush1.msra.mxu0 0.0
      %941 = vmatprep.subr.mxu0 0.0
      %942 = vmatpush1.msra.mxu0 0.0
      %943 = vmatprep.subr.mxu0 0.0
      %944 = vmatpush1.msra.mxu0 0.0
      %945 = vmatprep.mubr.f32.mxu0 0.0
      %946 = vmatmul.mubr.f32.gmra.mrb[0].mxu0 %v802
      %v947 = vpop.f32.mrb[0].mxu0
      %v948 = vadd.f32 0.0, %v947
      %v949 = vpop.f32.mrb[0].mxu0
      %950 = vdwg.mxu0
      %v951 = vadd.f32 %v787, %v877
      %v952 = vadd.f32 %v788, %v879
      %v953 = vadd.f32 %v789, %v948
      %s954 = scalar_lea.vmem %s1, 16
      %v955 = vld [vmem:[%s954] sm:$0xf]
      %956 = vrot.lane.b32.xlu0 %v306, 109
      %v957 = vpop.permute.xlu0 %956
      %958 = vrot.lane.b32.xlu0 %v314, 109
      %v959 = vpop.permute.xlu0 %958
      %960 = vrot.lane.b32.xlu0 %v307, 109
      %v961 = vpop.permute.xlu0 %960
      %vm962 = vcmask 891904
      %v963 = vsel %vm962, %v957, %v959
      %v964 = vsel %vm962, %v959, %v961
      %v966 = vsel %vm324, %v955, 0
      %v968 = vsel %vm328, %v963, 0
      %v970 = vsel %vm328, %v964, 0
      %v972 = vsel %vm328, %v961, 0
      %974 = vmatprep.subr.mxu0 %v970
      %975 = vmatpush1.msra.mxu0 %v968
      %976 = vmatprep.subr.mxu0 0.0
      %977 = vmatpush1.msra.mxu0 0.0
      %978 = vmatprep.subr.mxu0 0.0
      %979 = vmatpush1.msra.mxu0 0.0
      %980 = vmatprep.subr.mxu0 0.0
      %981 = vmatpush1.msra.mxu0 0.0
      %982 = vmatprep.subr.mxu0 0.0
      %983 = vmatpush1.msra.mxu0 0.0
      %984 = vmatprep.subr.mxu0 0.0
      %985 = vmatpush1.msra.mxu0 0.0
      %986 = vmatprep.subr.mxu0 0.0
      %987 = vmatpush1.msra.mxu0 0.0
      %988 = vmatprep.subr.mxu0 0.0
      %989 = vmatpush1.msra.mxu0 0.0
      %990 = vmatprep.subr.mxu0 0.0
      %991 = vmatpush1.msra.mxu0 0.0
      %992 = vmatprep.subr.mxu0 0.0
      %993 = vmatpush1.msra.mxu0 0.0
      %994 = vmatprep.subr.mxu0 0.0
      %995 = vmatpush1.msra.mxu0 0.0
      %996 = vmatprep.subr.mxu0 0.0
      %997 = vmatpush1.msra.mxu0 0.0
      %998 = vmatprep.subr.mxu0 0.0
      %999 = vmatpush1.msra.mxu0 0.0
      %1000 = vmatprep.subr.mxu0 0.0
      %1001 = vmatpush1.msra.mxu0 0.0
      %1002 = vmatprep.subr.mxu0 0.0
      %1003 = vmatpush1.msra.mxu0 0.0
      %1004 = vmatprep.subr.mxu0 0.0
      %1005 = vmatpush1.msra.mxu0 0.0
      %1006 = vmatprep.subr.mxu0 0.0
      %1007 = vmatpush1.msra.mxu0 0.0
      %1008 = vmatprep.subr.mxu0 0.0
      %1009 = vmatpush1.msra.mxu0 0.0
      %1010 = vmatprep.subr.mxu0 0.0
      %1011 = vmatpush1.msra.mxu0 0.0
      %1012 = vmatprep.subr.mxu0 0.0
      %1013 = vmatpush1.msra.mxu0 0.0
      %1014 = vmatprep.subr.mxu0 0.0
      %1015 = vmatpush1.msra.mxu0 0.0
      %1016 = vmatprep.subr.mxu0 0.0
      %1017 = vmatpush1.msra.mxu0 0.0
      %1018 = vmatprep.subr.mxu0 0.0
      %1019 = vmatpush1.msra.mxu0 0.0
      %1020 = vmatprep.subr.mxu0 0.0
      %1021 = vmatpush1.msra.mxu0 0.0
      %1022 = vmatprep.subr.mxu0 0.0
      %1023 = vmatpush1.msra.mxu0 0.0
      %1024 = vmatprep.subr.mxu0 0.0
      %1025 = vmatpush1.msra.mxu0 0.0
      %1026 = vmatprep.subr.mxu0 0.0
      %1027 = vmatpush1.msra.mxu0 0.0
      %1028 = vmatprep.subr.mxu0 0.0
      %1029 = vmatpush1.msra.mxu0 0.0
      %1030 = vmatprep.subr.mxu0 0.0
      %1031 = vmatpush1.msra.mxu0 0.0
      %1032 = vmatprep.subr.mxu0 0.0
      %1033 = vmatpush1.msra.mxu0 0.0
      %1034 = vmatprep.subr.mxu0 0.0
      %1035 = vmatpush1.msra.mxu0 0.0
      %1036 = vmatprep.subr.mxu0 0.0
      %1037 = vmatpush1.msra.mxu0 0.0
      %1038 = vmatprep.mubr.f32.mxu0 0.0
      %1039 = vmatmul.mubr.f32.gmra.mrb[0].mxu0 %v966
      %v1040 = vpop.f32.mrb[0].mxu0
      %v1041 = vadd.f32 0.0, %v1040
      %v1042 = vpop.f32.mrb[0].mxu0
      %v1043 = vadd.f32 0.0, %v1042
      %1044 = vdwg.mxu0
      %1045 = vmatprep.subr.mxu0 0.0
      %1046 = vmatpush1.msra.mxu0 %v972
      %1047 = vmatprep.subr.mxu0 0.0
      %1048 = vmatpush1.msra.mxu0 0.0
      %1049 = vmatprep.subr.mxu0 0.0
      %1050 = vmatpush1.msra.mxu0 0.0
      %1051 = vmatprep.subr.mxu0 0.0
      %1052 = vmatpush1.msra.mxu0 0.0
      %1053 = vmatprep.subr.mxu0 0.0
      %1054 = vmatpush1.msra.mxu0 0.0
      %1055 = vmatprep.subr.mxu0 0.0
      %1056 = vmatpush1.msra.mxu0 0.0
      %1057 = vmatprep.subr.mxu0 0.0
      %1058 = vmatpush1.msra.mxu0 0.0
      %1059 = vmatprep.subr.mxu0 0.0
      %1060 = vmatpush1.msra.mxu0 0.0
      %1061 = vmatprep.subr.mxu0 0.0
      %1062 = vmatpush1.msra.mxu0 0.0
      %1063 = vmatprep.subr.mxu0 0.0
      %1064 = vmatpush1.msra.mxu0 0.0
      %1065 = vmatprep.subr.mxu0 0.0
      %1066 = vmatpush1.msra.mxu0 0.0
      %1067 = vmatprep.subr.mxu0 0.0
      %1068 = vmatpush1.msra.mxu0 0.0
      %1069 = vmatprep.subr.mxu0 0.0
      %1070 = vmatpush1.msra.mxu0 0.0
      %1071 = vmatprep.subr.mxu0 0.0
      %1072 = vmatpush1.msra.mxu0 0.0
      %1073 = vmatprep.subr.mxu0 0.0
      %1074 = vmatpush1.msra.mxu0 0.0
      %1075 = vmatprep.subr.mxu0 0.0
      %1076 = vmatpush1.msra.mxu0 0.0
      %1077 = vmatprep.subr.mxu0 0.0
      %1078 = vmatpush1.msra.mxu0 0.0
      %1079 = vmatprep.subr.mxu0 0.0
      %1080 = vmatpush1.msra.mxu0 0.0
      %1081 = vmatprep.subr.mxu0 0.0
      %1082 = vmatpush1.msra.mxu0 0.0
      %1083 = vmatprep.subr.mxu0 0.0
      %1084 = vmatpush1.msra.mxu0 0.0
      %1085 = vmatprep.subr.mxu0 0.0
      %1086 = vmatpush1.msra.mxu0 0.0
      %1087 = vmatprep.subr.mxu0 0.0
      %1088 = vmatpush1.msra.mxu0 0.0
      %1089 = vmatprep.subr.mxu0 0.0
      %1090 = vmatpush1.msra.mxu0 0.0
      %1091 = vmatprep.subr.mxu0 0.0
      %1092 = vmatpush1.msra.mxu0 0.0
      %1093 = vmatprep.subr.mxu0 0.0
      %1094 = vmatpush1.msra.mxu0 0.0
      %1095 = vmatprep.subr.mxu0 0.0
      %1096 = vmatpush1.msra.mxu0 0.0
      %1097 = vmatprep.subr.mxu0 0.0
      %1098 = vmatpush1.msra.mxu0 0.0
      %1099 = vmatprep.subr.mxu0 0.0
      %1100 = vmatpush1.msra.mxu0 0.0
      %1101 = vmatprep.subr.mxu0 0.0
      %1102 = vmatpush1.msra.mxu0 0.0
      %1103 = vmatprep.subr.mxu0 0.0
      %1104 = vmatpush1.msra.mxu0 0.0
      %1105 = vmatprep.subr.mxu0 0.0
      %1106 = vmatpush1.msra.mxu0 0.0
      %1107 = vmatprep.subr.mxu0 0.0
      %1108 = vmatpush1.msra.mxu0 0.0
      %1109 = vmatprep.mubr.f32.mxu0 0.0
      %1110 = vmatmul.mubr.f32.gmra.mrb[0].mxu0 %v966
      %v1111 = vpop.f32.mrb[0].mxu0
      %v1112 = vadd.f32 0.0, %v1111
      %v1113 = vpop.f32.mrb[0].mxu0
      %1114 = vdwg.mxu0
      %v1115 = vadd.f32 %v951, %v1041
      %v1116 = vadd.f32 %v952, %v1043
      %v1117 = vadd.f32 %v953, %v1112
      %s1118 = scalar_lea.vmem %s1, 20
      %v1119 = vld [vmem:[%s1118] sm:$0xf]
      %1120 = vrot.lane.b32.xlu0 %v306, 108
      %v1121 = vpop.permute.xlu0 %1120
      %1122 = vrot.lane.b32.xlu0 %v314, 108
      %v1123 = vpop.permute.xlu0 %1122
      %1124 = vrot.lane.b32.xlu0 %v307, 108
      %v1125 = vpop.permute.xlu0 %1124
      %vm1126 = vcmask 883712
      %v1127 = vsel %vm1126, %v1121, %v1123
      %v1128 = vsel %vm1126, %v1123, %v1125
      %v1130 = vsel %vm324, %v1119, 0
      %v1132 = vsel %vm328, %v1127, 0
      %v1134 = vsel %vm328, %v1128, 0
      %v1136 = vsel %vm328, %v1125, 0
      %1138 = vmatprep.subr.mxu0 %v1134
      %1139 = vmatpush1.msra.mxu0 %v1132
      %1140 = vmatprep.subr.mxu0 0.0
      %1141 = vmatpush1.msra.mxu0 0.0
      %1142 = vmatprep.subr.mxu0 0.0
      %1143 = vmatpush1.msra.mxu0 0.0
      %1144 = vmatprep.subr.mxu0 0.0
      %1145 = vmatpush1.msra.mxu0 0.0
      %1146 = vmatprep.subr.mxu0 0.0
      %1147 = vmatpush1.msra.mxu0 0.0
      %1148 = vmatprep.subr.mxu0 0.0
      %1149 = vmatpush1.msra.mxu0 0.0
      %1150 = vmatprep.subr.mxu0 0.0
      %1151 = vmatpush1.msra.mxu0 0.0
      %1152 = vmatprep.subr.mxu0 0.0
      %1153 = vmatpush1.msra.mxu0 0.0
      %1154 = vmatprep.subr.mxu0 0.0
      %1155 = vmatpush1.msra.mxu0 0.0
      %1156 = vmatprep.subr.mxu0 0.0
      %1157 = vmatpush1.msra.mxu0 0.0
      %1158 = vmatprep.subr.mxu0 0.0
      %1159 = vmatpush1.msra.mxu0 0.0
      %1160 = vmatprep.subr.mxu0 0.0
      %1161 = vmatpush1.msra.mxu0 0.0
      %1162 = vmatprep.subr.mxu0 0.0
      %1163 = vmatpush1.msra.mxu0 0.0
      %1164 = vmatprep.subr.mxu0 0.0
      %1165 = vmatpush1.msra.mxu0 0.0
      %1166 = vmatprep.subr.mxu0 0.0
      %1167 = vmatpush1.msra.mxu0 0.0
      %1168 = vmatprep.subr.mxu0 0.0
      %1169 = vmatpush1.msra.mxu0 0.0
      %1170 = vmatprep.subr.mxu0 0.0
      %1171 = vmatpush1.msra.mxu0 0.0
      %1172 = vmatprep.subr.mxu0 0.0
      %1173 = vmatpush1.msra.mxu0 0.0
      %1174 = vmatprep.subr.mxu0 0.0
      %1175 = vmatpush1.msra.mxu0 0.0
      %1176 = vmatprep.subr.mxu0 0.0
      %1177 = vmatpush1.msra.mxu0 0.0
      %1178 = vmatprep.subr.mxu0 0.0
      %1179 = vmatpush1.msra.mxu0 0.0
      %1180 = vmatprep.subr.mxu0 0.0
      %1181 = vmatpush1.msra.mxu0 0.0
      %1182 = vmatprep.subr.mxu0 0.0
      %1183 = vmatpush1.msra.mxu0 0.0
      %1184 = vmatprep.subr.mxu0 0.0
      %1185 = vmatpush1.msra.mxu0 0.0
      %1186 = vmatprep.subr.mxu0 0.0
      %1187 = vmatpush1.msra.mxu0 0.0
      %1188 = vmatprep.subr.mxu0 0.0
      %1189 = vmatpush1.msra.mxu0 0.0
      %1190 = vmatprep.subr.mxu0 0.0
      %1191 = vmatpush1.msra.mxu0 0.0
      %1192 = vmatprep.subr.mxu0 0.0
      %1193 = vmatpush1.msra.mxu0 0.0
      %1194 = vmatprep.subr.mxu0 0.0
      %1195 = vmatpush1.msra.mxu0 0.0
      %1196 = vmatprep.subr.mxu0 0.0
      %1197 = vmatpush1.msra.mxu0 0.0
      %1198 = vmatprep.subr.mxu0 0.0
      %1199 = vmatpush1.msra.mxu0 0.0
      %1200 = vmatprep.subr.mxu0 0.0
      %1201 = vmatpush1.msra.mxu0 0.0
      %1202 = vmatprep.mubr.f32.mxu0 0.0
      %1203 = vmatmul.mubr.f32.gmra.mrb[0].mxu0 %v1130
      %v1204 = vpop.f32.mrb[0].mxu0
      %v1205 = vadd.f32 0.0, %v1204
      %v1206 = vpop.f32.mrb[0].mxu0
      %v1207 = vadd.f32 0.0, %v1206
      %1208 = vdwg.mxu0
      %1209 = vmatprep.subr.mxu0 0.0
      %1210 = vmatpush1.msra.mxu0 %v1136
      %1211 = vmatprep.subr.mxu0 0.0
      %1212 = vmatpush1.msra.mxu0 0.0
      %1213 = vmatprep.subr.mxu0 0.0
      %1214 = vmatpush1.msra.mxu0 0.0
      %1215 = vmatprep.subr.mxu0 0.0
      %1216 = vmatpush1.msra.mxu0 0.0
      %1217 = vmatprep.subr.mxu0 0.0
      %1218 = vmatpush1.msra.mxu0 0.0
      %1219 = vmatprep.subr.mxu0 0.0
      %1220 = vmatpush1.msra.mxu0 0.0
      %1221 = vmatprep.subr.mxu0 0.0
      %1222 = vmatpush1.msra.mxu0 0.0
      %1223 = vmatprep.subr.mxu0 0.0
      %1224 = vmatpush1.msra.mxu0 0.0
      %1225 = vmatprep.subr.mxu0 0.0
      %1226 = vmatpush1.msra.mxu0 0.0
      %1227 = vmatprep.subr.mxu0 0.0
      %1228 = vmatpush1.msra.mxu0 0.0
      %1229 = vmatprep.subr.mxu0 0.0
      %1230 = vmatpush1.msra.mxu0 0.0
      %1231 = vmatprep.subr.mxu0 0.0
      %1232 = vmatpush1.msra.mxu0 0.0
      %1233 = vmatprep.subr.mxu0 0.0
      %1234 = vmatpush1.msra.mxu0 0.0
      %1235 = vmatprep.subr.mxu0 0.0
      %1236 = vmatpush1.msra.mxu0 0.0
      %1237 = vmatprep.subr.mxu0 0.0
      %1238 = vmatpush1.msra.mxu0 0.0
      %1239 = vmatprep.subr.mxu0 0.0
      %1240 = vmatpush1.msra.mxu0 0.0
      %1241 = vmatprep.subr.mxu0 0.0
      %1242 = vmatpush1.msra.mxu0 0.0
      %1243 = vmatprep.subr.mxu0 0.0
      %1244 = vmatpush1.msra.mxu0 0.0
      %1245 = vmatprep.subr.mxu0 0.0
      %1246 = vmatpush1.msra.mxu0 0.0
      %1247 = vmatprep.subr.mxu0 0.0
      %1248 = vmatpush1.msra.mxu0 0.0
      %1249 = vmatprep.subr.mxu0 0.0
      %1250 = vmatpush1.msra.mxu0 0.0
      %1251 = vmatprep.subr.mxu0 0.0
      %1252 = vmatpush1.msra.mxu0 0.0
      %1253 = vmatprep.subr.mxu0 0.0
      %1254 = vmatpush1.msra.mxu0 0.0
      %1255 = vmatprep.subr.mxu0 0.0
      %1256 = vmatpush1.msra.mxu0 0.0
      %1257 = vmatprep.subr.mxu0 0.0
      %1258 = vmatpush1.msra.mxu0 0.0
      %1259 = vmatprep.subr.mxu0 0.0
      %1260 = vmatpush1.msra.mxu0 0.0
      %1261 = vmatprep.subr.mxu0 0.0
      %1262 = vmatpush1.msra.mxu0 0.0
      %1263 = vmatprep.subr.mxu0 0.0
      %1264 = vmatpush1.msra.mxu0 0.0
      %1265 = vmatprep.subr.mxu0 0.0
      %1266 = vmatpush1.msra.mxu0 0.0
      %1267 = vmatprep.subr.mxu0 0.0
      %1268 = vmatpush1.msra.mxu0 0.0
      %1269 = vmatprep.subr.mxu0 0.0
      %1270 = vmatpush1.msra.mxu0 0.0
      %1271 = vmatprep.subr.mxu0 0.0
      %1272 = vmatpush1.msra.mxu0 0.0
      %1273 = vmatprep.mubr.f32.mxu0 0.0
      %1274 = vmatmul.mubr.f32.gmra.mrb[0].mxu0 %v1130
      %v1275 = vpop.f32.mrb[0].mxu0
      %v1276 = vadd.f32 0.0, %v1275
      %v1277 = vpop.f32.mrb[0].mxu0
      %1278 = vdwg.mxu0
      %v1279 = vadd.f32 %v1115, %v1205
      %v1280 = vadd.f32 %v1116, %v1207
      %v1281 = vadd.f32 %v1117, %v1276
      %s1282 = scalar_lea.vmem %s1, 24
      %v1283 = vld [vmem:[%s1282] sm:$0xf]
      %1284 = vrot.lane.b32.xlu0 %v306, 92
      %v1285 = vpop.permute.xlu0 %1284
      %1286 = vrot.lane.b32.xlu0 %v314, 92
      %v1287 = vpop.permute.xlu0 %1286
      %1288 = vrot.lane.b32.xlu0 %v307, 92
      %v1289 = vpop.permute.xlu0 %1288
      %vm1290 = vcmask 752640
      %v1291 = vsel %vm1290, %v1285, %v1287
      %v1292 = vsel %vm1290, %v1287, %v1289
      %v1294 = vsel %vm324, %v1283, 0
      %v1296 = vsel %vm328, %v1291, 0
      %v1298 = vsel %vm328, %v1292, 0
      %v1300 = vsel %vm328, %v1289, 0
      %1302 = vmatprep.subr.mxu0 %v1298
      %1303 = vmatpush1.msra.mxu0 %v1296
      %1304 = vmatprep.subr.mxu0 0.0
      %1305 = vmatpush1.msra.mxu0 0.0
      %1306 = vmatprep.subr.mxu0 0.0
      %1307 = vmatpush1.msra.mxu0 0.0
      %1308 = vmatprep.subr.mxu0 0.0
      %1309 = vmatpush1.msra.mxu0 0.0
      %1310 = vmatprep.subr.mxu0 0.0
      %1311 = vmatpush1.msra.mxu0 0.0
      %1312 = vmatprep.subr.mxu0 0.0
      %1313 = vmatpush1.msra.mxu0 0.0
      %1314 = vmatprep.subr.mxu0 0.0
      %1315 = vmatpush1.msra.mxu0 0.0
      %1316 = vmatprep.subr.mxu0 0.0
      %1317 = vmatpush1.msra.mxu0 0.0
      %1318 = vmatprep.subr.mxu0 0.0
      %1319 = vmatpush1.msra.mxu0 0.0
      %1320 = vmatprep.subr.mxu0 0.0
      %1321 = vmatpush1.msra.mxu0 0.0
      %1322 = vmatprep.subr.mxu0 0.0
      %1323 = vmatpush1.msra.mxu0 0.0
      %1324 = vmatprep.subr.mxu0 0.0
      %1325 = vmatpush1.msra.mxu0 0.0
      %1326 = vmatprep.subr.mxu0 0.0
      %1327 = vmatpush1.msra.mxu0 0.0
      %1328 = vmatprep.subr.mxu0 0.0
      %1329 = vmatpush1.msra.mxu0 0.0
      %1330 = vmatprep.subr.mxu0 0.0
      %1331 = vmatpush1.msra.mxu0 0.0
      %1332 = vmatprep.subr.mxu0 0.0
      %1333 = vmatpush1.msra.mxu0 0.0
      %1334 = vmatprep.subr.mxu0 0.0
      %1335 = vmatpush1.msra.mxu0 0.0
      %1336 = vmatprep.subr.mxu0 0.0
      %1337 = vmatpush1.msra.mxu0 0.0
      %1338 = vmatprep.subr.mxu0 0.0
      %1339 = vmatpush1.msra.mxu0 0.0
      %1340 = vmatprep.subr.mxu0 0.0
      %1341 = vmatpush1.msra.mxu0 0.0
      %1342 = vmatprep.subr.mxu0 0.0
      %1343 = vmatpush1.msra.mxu0 0.0
      %1344 = vmatprep.subr.mxu0 0.0
      %1345 = vmatpush1.msra.mxu0 0.0
      %1346 = vmatprep.subr.mxu0 0.0
      %1347 = vmatpush1.msra.mxu0 0.0
      %1348 = vmatprep.subr.mxu0 0.0
      %1349 = vmatpush1.msra.mxu0 0.0
      %1350 = vmatprep.subr.mxu0 0.0
      %1351 = vmatpush1.msra.mxu0 0.0
      %1352 = vmatprep.subr.mxu0 0.0
      %1353 = vmatpush1.msra.mxu0 0.0
      %1354 = vmatprep.subr.mxu0 0.0
      %1355 = vmatpush1.msra.mxu0 0.0
      %1356 = vmatprep.subr.mxu0 0.0
      %1357 = vmatpush1.msra.mxu0 0.0
      %1358 = vmatprep.subr.mxu0 0.0
      %1359 = vmatpush1.msra.mxu0 0.0
      %1360 = vmatprep.subr.mxu0 0.0
      %1361 = vmatpush1.msra.mxu0 0.0
      %1362 = vmatprep.subr.mxu0 0.0
      %1363 = vmatpush1.msra.mxu0 0.0
      %1364 = vmatprep.subr.mxu0 0.0
      %1365 = vmatpush1.msra.mxu0 0.0
      %1366 = vmatprep.mubr.f32.mxu0 0.0
      %1367 = vmatmul.mubr.f32.gmra.mrb[0].mxu0 %v1294
      %v1368 = vpop.f32.mrb[0].mxu0
      %v1369 = vadd.f32 0.0, %v1368
      %v1370 = vpop.f32.mrb[0].mxu0
      %v1371 = vadd.f32 0.0, %v1370
      %1372 = vdwg.mxu0
      %1373 = vmatprep.subr.mxu0 0.0
      %1374 = vmatpush1.msra.mxu0 %v1300
      %1375 = vmatprep.subr.mxu0 0.0
      %1376 = vmatpush1.msra.mxu0 0.0
      %1377 = vmatprep.subr.mxu0 0.0
      %1378 = vmatpush1.msra.mxu0 0.0
      %1379 = vmatprep.subr.mxu0 0.0
      %1380 = vmatpush1.msra.mxu0 0.0
      %1381 = vmatprep.subr.mxu0 0.0
      %1382 = vmatpush1.msra.mxu0 0.0
      %1383 = vmatprep.subr.mxu0 0.0
      %1384 = vmatpush1.msra.mxu0 0.0
      %1385 = vmatprep.subr.mxu0 0.0
      %1386 = vmatpush1.msra.mxu0 0.0
      %1387 = vmatprep.subr.mxu0 0.0
      %1388 = vmatpush1.msra.mxu0 0.0
      %1389 = vmatprep.subr.mxu0 0.0
      %1390 = vmatpush1.msra.mxu0 0.0
      %1391 = vmatprep.subr.mxu0 0.0
      %1392 = vmatpush1.msra.mxu0 0.0
      %1393 = vmatprep.subr.mxu0 0.0
      %1394 = vmatpush1.msra.mxu0 0.0
      %1395 = vmatprep.subr.mxu0 0.0
      %1396 = vmatpush1.msra.mxu0 0.0
      %1397 = vmatprep.subr.mxu0 0.0
      %1398 = vmatpush1.msra.mxu0 0.0
      %1399 = vmatprep.subr.mxu0 0.0
      %1400 = vmatpush1.msra.mxu0 0.0
      %1401 = vmatprep.subr.mxu0 0.0
      %1402 = vmatpush1.msra.mxu0 0.0
      %1403 = vmatprep.subr.mxu0 0.0
      %1404 = vmatpush1.msra.mxu0 0.0
      %1405 = vmatprep.subr.mxu0 0.0
      %1406 = vmatpush1.msra.mxu0 0.0
      %1407 = vmatprep.subr.mxu0 0.0
      %1408 = vmatpush1.msra.mxu0 0.0
      %1409 = vmatprep.subr.mxu0 0.0
      %1410 = vmatpush1.msra.mxu0 0.0
      %1411 = vmatprep.subr.mxu0 0.0
      %1412 = vmatpush1.msra.mxu0 0.0
      %1413 = vmatprep.subr.mxu0 0.0
      %1414 = vmatpush1.msra.mxu0 0.0
      %1415 = vmatprep.subr.mxu0 0.0
      %1416 = vmatpush1.msra.mxu0 0.0
      %1417 = vmatprep.subr.mxu0 0.0
      %1418 = vmatpush1.msra.mxu0 0.0
      %1419 = vmatprep.subr.mxu0 0.0
      %1420 = vmatpush1.msra.mxu0 0.0
      %1421 = vmatprep.subr.mxu0 0.0
      %1422 = vmatpush1.msra.mxu0 0.0
      %1423 = vmatprep.subr.mxu0 0.0
      %1424 = vmatpush1.msra.mxu0 0.0
      %1425 = vmatprep.subr.mxu0 0.0
      %1426 = vmatpush1.msra.mxu0 0.0
      %1427 = vmatprep.subr.mxu0 0.0
      %1428 = vmatpush1.msra.mxu0 0.0
      %1429 = vmatprep.subr.mxu0 0.0
      %1430 = vmatpush1.msra.mxu0 0.0
      %1431 = vmatprep.subr.mxu0 0.0
      %1432 = vmatpush1.msra.mxu0 0.0
      %1433 = vmatprep.subr.mxu0 0.0
      %1434 = vmatpush1.msra.mxu0 0.0
      %1435 = vmatprep.subr.mxu0 0.0
      %1436 = vmatpush1.msra.mxu0 0.0
      %1437 = vmatprep.mubr.f32.mxu0 0.0
      %1438 = vmatmul.mubr.f32.gmra.mrb[0].mxu0 %v1294
      %v1439 = vpop.f32.mrb[0].mxu0
      %v1440 = vadd.f32 0.0, %v1439
      %v1441 = vpop.f32.mrb[0].mxu0
      %1442 = vdwg.mxu0
      %v1443 = vadd.f32 %v1279, %v1369
      %v1444 = vadd.f32 %v1280, %v1371
      %v1445 = vadd.f32 %v1281, %v1440
      %s1446 = scalar_lea.vmem %s1, 28
      %v1447 = vld [vmem:[%s1446] sm:$0xf]
      %1448 = vrot.lane.b32.xlu0 %v306, 91
      %v1449 = vpop.permute.xlu0 %1448
      %1450 = vrot.lane.b32.xlu0 %v314, 91
      %v1451 = vpop.permute.xlu0 %1450
      %1452 = vrot.lane.b32.xlu0 %v307, 91
      %v1453 = vpop.permute.xlu0 %1452
      %vm1454 = vcmask 744448
      %v1455 = vsel %vm1454, %v1449, %v1451
      %v1456 = vsel %vm1454, %v1451, %v1453
      %v1458 = vsel %vm324, %v1447, 0
      %v1460 = vsel %vm328, %v1455, 0
      %v1462 = vsel %vm328, %v1456, 0
      %v1464 = vsel %vm328, %v1453, 0
      %1466 = vmatprep.subr.mxu0 %v1462
      %1467 = vmatpush1.msra.mxu0 %v1460
      %1468 = vmatprep.subr.mxu0 0.0
      %1469 = vmatpush1.msra.mxu0 0.0
      %1470 = vmatprep.subr.mxu0 0.0
      %1471 = vmatpush1.msra.mxu0 0.0
      %1472 = vmatprep.subr.mxu0 0.0
      %1473 = vmatpush1.msra.mxu0 0.0
      %1474 = vmatprep.subr.mxu0 0.0
      %1475 = vmatpush1.msra.mxu0 0.0
      %1476 = vmatprep.subr.mxu0 0.0
      %1477 = vmatpush1.msra.mxu0 0.0
      %1478 = vmatprep.subr.mxu0 0.0
      %1479 = vmatpush1.msra.mxu0 0.0
      %1480 = vmatprep.subr.mxu0 0.0
      %1481 = vmatpush1.msra.mxu0 0.0
      %1482 = vmatprep.subr.mxu0 0.0
      %1483 = vmatpush1.msra.mxu0 0.0
      %1484 = vmatprep.subr.mxu0 0.0
      %1485 = vmatpush1.msra.mxu0 0.0
      %1486 = vmatprep.subr.mxu0 0.0
      %1487 = vmatpush1.msra.mxu0 0.0
      %1488 = vmatprep.subr.mxu0 0.0
      %1489 = vmatpush1.msra.mxu0 0.0
      %1490 = vmatprep.subr.mxu0 0.0
      %1491 = vmatpush1.msra.mxu0 0.0
      %1492 = vmatprep.subr.mxu0 0.0
      %1493 = vmatpush1.msra.mxu0 0.0
      %1494 = vmatprep.subr.mxu0 0.0
      %1495 = vmatpush1.msra.mxu0 0.0
      %1496 = vmatprep.subr.mxu0 0.0
      %1497 = vmatpush1.msra.mxu0 0.0
      %1498 = vmatprep.subr.mxu0 0.0
      %1499 = vmatpush1.msra.mxu0 0.0
      %1500 = vmatprep.subr.mxu0 0.0
      %1501 = vmatpush1.msra.mxu0 0.0
      %1502 = vmatprep.subr.mxu0 0.0
      %1503 = vmatpush1.msra.mxu0 0.0
      %1504 = vmatprep.subr.mxu0 0.0
      %1505 = vmatpush1.msra.mxu0 0.0
      %1506 = vmatprep.subr.mxu0 0.0
      %1507 = vmatpush1.msra.mxu0 0.0
      %1508 = vmatprep.subr.mxu0 0.0
      %1509 = vmatpush1.msra.mxu0 0.0
      %1510 = vmatprep.subr.mxu0 0.0
      %1511 = vmatpush1.msra.mxu0 0.0
      %1512 = vmatprep.subr.mxu0 0.0
      %1513 = vmatpush1.msra.mxu0 0.0
      %1514 = vmatprep.subr.mxu0 0.0
      %1515 = vmatpush1.msra.mxu0 0.0
      %1516 = vmatprep.subr.mxu0 0.0
      %1517 = vmatpush1.msra.mxu0 0.0
      %1518 = vmatprep.subr.mxu0 0.0
      %1519 = vmatpush1.msra.mxu0 0.0
      %1520 = vmatprep.subr.mxu0 0.0
      %1521 = vmatpush1.msra.mxu0 0.0
      %1522 = vmatprep.subr.mxu0 0.0
      %1523 = vmatpush1.msra.mxu0 0.0
      %1524 = vmatprep.subr.mxu0 0.0
      %1525 = vmatpush1.msra.mxu0 0.0
      %1526 = vmatprep.subr.mxu0 0.0
      %1527 = vmatpush1.msra.mxu0 0.0
      %1528 = vmatprep.subr.mxu0 0.0
      %1529 = vmatpush1.msra.mxu0 0.0
      %1530 = vmatprep.mubr.f32.mxu0 0.0
      %1531 = vmatmul.mubr.f32.gmra.mrb[0].mxu0 %v1458
      %v1532 = vpop.f32.mrb[0].mxu0
      %v1533 = vadd.f32 0.0, %v1532
      %v1534 = vpop.f32.mrb[0].mxu0
      %v1535 = vadd.f32 0.0, %v1534
      %1536 = vdwg.mxu0
      %1537 = vmatprep.subr.mxu0 0.0
      %1538 = vmatpush1.msra.mxu0 %v1464
      %1539 = vmatprep.subr.mxu0 0.0
      %1540 = vmatpush1.msra.mxu0 0.0
      %1541 = vmatprep.subr.mxu0 0.0
      %1542 = vmatpush1.msra.mxu0 0.0
      %1543 = vmatprep.subr.mxu0 0.0
      %1544 = vmatpush1.msra.mxu0 0.0
      %1545 = vmatprep.subr.mxu0 0.0
      %1546 = vmatpush1.msra.mxu0 0.0
      %1547 = vmatprep.subr.mxu0 0.0
      %1548 = vmatpush1.msra.mxu0 0.0
      %1549 = vmatprep.subr.mxu0 0.0
      %1550 = vmatpush1.msra.mxu0 0.0
      %1551 = vmatprep.subr.mxu0 0.0
      %1552 = vmatpush1.msra.mxu0 0.0
      %1553 = vmatprep.subr.mxu0 0.0
      %1554 = vmatpush1.msra.mxu0 0.0
      %1555 = vmatprep.subr.mxu0 0.0
      %1556 = vmatpush1.msra.mxu0 0.0
      %1557 = vmatprep.subr.mxu0 0.0
      %1558 = vmatpush1.msra.mxu0 0.0
      %1559 = vmatprep.subr.mxu0 0.0
      %1560 = vmatpush1.msra.mxu0 0.0
      %1561 = vmatprep.subr.mxu0 0.0
      %1562 = vmatpush1.msra.mxu0 0.0
      %1563 = vmatprep.subr.mxu0 0.0
      %1564 = vmatpush1.msra.mxu0 0.0
      %1565 = vmatprep.subr.mxu0 0.0
      %1566 = vmatpush1.msra.mxu0 0.0
      %1567 = vmatprep.subr.mxu0 0.0
      %1568 = vmatpush1.msra.mxu0 0.0
      %1569 = vmatprep.subr.mxu0 0.0
      %1570 = vmatpush1.msra.mxu0 0.0
      %1571 = vmatprep.subr.mxu0 0.0
      %1572 = vmatpush1.msra.mxu0 0.0
      %1573 = vmatprep.subr.mxu0 0.0
      %1574 = vmatpush1.msra.mxu0 0.0
      %1575 = vmatprep.subr.mxu0 0.0
      %1576 = vmatpush1.msra.mxu0 0.0
      %1577 = vmatprep.subr.mxu0 0.0
      %1578 = vmatpush1.msra.mxu0 0.0
      %1579 = vmatprep.subr.mxu0 0.0
      %1580 = vmatpush1.msra.mxu0 0.0
      %1581 = vmatprep.subr.mxu0 0.0
      %1582 = vmatpush1.msra.mxu0 0.0
      %1583 = vmatprep.subr.mxu0 0.0
      %1584 = vmatpush1.msra.mxu0 0.0
      %1585 = vmatprep.subr.mxu0 0.0
      %1586 = vmatpush1.msra.mxu0 0.0
      %1587 = vmatprep.subr.mxu0 0.0
      %1588 = vmatpush1.msra.mxu0 0.0
      %1589 = vmatprep.subr.mxu0 0.0
      %1590 = vmatpush1.msra.mxu0 0.0
      %1591 = vmatprep.subr.mxu0 0.0
      %1592 = vmatpush1.msra.mxu0 0.0
      %1593 = vmatprep.subr.mxu0 0.0
      %1594 = vmatpush1.msra.mxu0 0.0
      %1595 = vmatprep.subr.mxu0 0.0
      %1596 = vmatpush1.msra.mxu0 0.0
      %1597 = vmatprep.subr.mxu0 0.0
      %1598 = vmatpush1.msra.mxu0 0.0
      %1599 = vmatprep.subr.mxu0 0.0
      %1600 = vmatpush1.msra.mxu0 0.0
      %1601 = vmatprep.mubr.f32.mxu0 0.0
      %1602 = vmatmul.mubr.f32.gmra.mrb[0].mxu0 %v1458
      %v1603 = vpop.f32.mrb[0].mxu0
      %v1604 = vadd.f32 0.0, %v1603
      %v1605 = vpop.f32.mrb[0].mxu0
      %1606 = vdwg.mxu0
      %v1607 = vadd.f32 %v1443, %v1533
      %v1608 = vadd.f32 %v1444, %v1535
      %v1609 = vadd.f32 %v1445, %v1604
      %s1610 = scalar_lea.vmem %s1, 32
      %v1611 = vld [vmem:[%s1610] sm:$0xf]
      %1612 = vrot.lane.b32.xlu0 %v306, 90
      %v1613 = vpop.permute.xlu0 %1612
      %1614 = vrot.lane.b32.xlu0 %v314, 90
      %v1615 = vpop.permute.xlu0 %1614
      %1616 = vrot.lane.b32.xlu0 %v307, 90
      %v1617 = vpop.permute.xlu0 %1616
      %vm1618 = vcmask 736256
      %v1619 = vsel %vm1618, %v1613, %v1615
      %v1620 = vsel %vm1618, %v1615, %v1617
      %v1622 = vsel %vm324, %v1611, 0
      %v1624 = vsel %vm328, %v1619, 0
      %v1626 = vsel %vm328, %v1620, 0
      %v1628 = vsel %vm328, %v1617, 0
      %1630 = vmatprep.subr.mxu0 %v1626
      %1631 = vmatpush1.msra.mxu0 %v1624
      %1632 = vmatprep.subr.mxu0 0.0
      %1633 = vmatpush1.msra.mxu0 0.0
      %1634 = vmatprep.subr.mxu0 0.0
      %1635 = vmatpush1.msra.mxu0 0.0
      %1636 = vmatprep.subr.mxu0 0.0
      %1637 = vmatpush1.msra.mxu0 0.0
      %1638 = vmatprep.subr.mxu0 0.0
      %1639 = vmatpush1.msra.mxu0 0.0
      %1640 = vmatprep.subr.mxu0 0.0
      %1641 = vmatpush1.msra.mxu0 0.0
      %1642 = vmatprep.subr.mxu0 0.0
      %1643 = vmatpush1.msra.mxu0 0.0
      %1644 = vmatprep.subr.mxu0 0.0
      %1645 = vmatpush1.msra.mxu0 0.0
      %1646 = vmatprep.subr.mxu0 0.0
      %1647 = vmatpush1.msra.mxu0 0.0
      %1648 = vmatprep.subr.mxu0 0.0
      %1649 = vmatpush1.msra.mxu0 0.0
      %1650 = vmatprep.subr.mxu0 0.0
      %1651 = vmatpush1.msra.mxu0 0.0
      %1652 = vmatprep.subr.mxu0 0.0
      %1653 = vmatpush1.msra.mxu0 0.0
      %1654 = vmatprep.subr.mxu0 0.0
      %1655 = vmatpush1.msra.mxu0 0.0
      %1656 = vmatprep.subr.mxu0 0.0
      %1657 = vmatpush1.msra.mxu0 0.0
      %1658 = vmatprep.subr.mxu0 0.0
      %1659 = vmatpush1.msra.mxu0 0.0
      %1660 = vmatprep.subr.mxu0 0.0
      %1661 = vmatpush1.msra.mxu0 0.0
      %1662 = vmatprep.subr.mxu0 0.0
      %1663 = vmatpush1.msra.mxu0 0.0
      %1664 = vmatprep.subr.mxu0 0.0
      %1665 = vmatpush1.msra.mxu0 0.0
      %1666 = vmatprep.subr.mxu0 0.0
      %1667 = vmatpush1.msra.mxu0 0.0
      %1668 = vmatprep.subr.mxu0 0.0
      %1669 = vmatpush1.msra.mxu0 0.0
      %1670 = vmatprep.subr.mxu0 0.0
      %1671 = vmatpush1.msra.mxu0 0.0
      %1672 = vmatprep.subr.mxu0 0.0
      %1673 = vmatpush1.msra.mxu0 0.0
      %1674 = vmatprep.subr.mxu0 0.0
      %1675 = vmatpush1.msra.mxu0 0.0
      %1676 = vmatprep.subr.mxu0 0.0
      %1677 = vmatpush1.msra.mxu0 0.0
      %1678 = vmatprep.subr.mxu0 0.0
      %1679 = vmatpush1.msra.mxu0 0.0
      %1680 = vmatprep.subr.mxu0 0.0
      %1681 = vmatpush1.msra.mxu0 0.0
      %1682 = vmatprep.subr.mxu0 0.0
      %1683 = vmatpush1.msra.mxu0 0.0
      %1684 = vmatprep.subr.mxu0 0.0
      %1685 = vmatpush1.msra.mxu0 0.0
      %1686 = vmatprep.subr.mxu0 0.0
      %1687 = vmatpush1.msra.mxu0 0.0
      %1688 = vmatprep.subr.mxu0 0.0
      %1689 = vmatpush1.msra.mxu0 0.0
      %1690 = vmatprep.subr.mxu0 0.0
      %1691 = vmatpush1.msra.mxu0 0.0
      %1692 = vmatprep.subr.mxu0 0.0
      %1693 = vmatpush1.msra.mxu0 0.0
      %1694 = vmatprep.mubr.f32.mxu0 0.0
      %1695 = vmatmul.mubr.f32.gmra.mrb[0].mxu0 %v1622
      %v1696 = vpop.f32.mrb[0].mxu0
      %v1697 = vadd.f32 0.0, %v1696
      %v1698 = vpop.f32.mrb[0].mxu0
      %v1699 = vadd.f32 0.0, %v1698
      %1700 = vdwg.mxu0
      %1701 = vmatprep.subr.mxu0 0.0
      %1702 = vmatpush1.msra.mxu0 %v1628
      %1703 = vmatprep.subr.mxu0 0.0
      %1704 = vmatpush1.msra.mxu0 0.0
      %1705 = vmatprep.subr.mxu0 0.0
      %1706 = vmatpush1.msra.mxu0 0.0
      %1707 = vmatprep.subr.mxu0 0.0
      %1708 = vmatpush1.msra.mxu0 0.0
      %1709 = vmatprep.subr.mxu0 0.0
      %1710 = vmatpush1.msra.mxu0 0.0
      %1711 = vmatprep.subr.mxu0 0.0
      %1712 = vmatpush1.msra.mxu0 0.0
      %1713 = vmatprep.subr.mxu0 0.0
      %1714 = vmatpush1.msra.mxu0 0.0
      %1715 = vmatprep.subr.mxu0 0.0
      %1716 = vmatpush1.msra.mxu0 0.0
      %1717 = vmatprep.subr.mxu0 0.0
      %1718 = vmatpush1.msra.mxu0 0.0
      %1719 = vmatprep.subr.mxu0 0.0
      %1720 = vmatpush1.msra.mxu0 0.0
      %1721 = vmatprep.subr.mxu0 0.0
      %1722 = vmatpush1.msra.mxu0 0.0
      %1723 = vmatprep.subr.mxu0 0.0
      %1724 = vmatpush1.msra.mxu0 0.0
      %1725 = vmatprep.subr.mxu0 0.0
      %1726 = vmatpush1.msra.mxu0 0.0
      %1727 = vmatprep.subr.mxu0 0.0
      %1728 = vmatpush1.msra.mxu0 0.0
      %1729 = vmatprep.subr.mxu0 0.0
      %1730 = vmatpush1.msra.mxu0 0.0
      %1731 = vmatprep.subr.mxu0 0.0
      %1732 = vmatpush1.msra.mxu0 0.0
      %1733 = vmatprep.subr.mxu0 0.0
      %1734 = vmatpush1.msra.mxu0 0.0
      %1735 = vmatprep.subr.mxu0 0.0
      %1736 = vmatpush1.msra.mxu0 0.0
      %1737 = vmatprep.subr.mxu0 0.0
      %1738 = vmatpush1.msra.mxu0 0.0
      %1739 = vmatprep.subr.mxu0 0.0
      %1740 = vmatpush1.msra.mxu0 0.0
      %1741 = vmatprep.subr.mxu0 0.0
      %1742 = vmatpush1.msra.mxu0 0.0
      %1743 = vmatprep.subr.mxu0 0.0
      %1744 = vmatpush1.msra.mxu0 0.0
      %1745 = vmatprep.subr.mxu0 0.0
      %1746 = vmatpush1.msra.mxu0 0.0
      %1747 = vmatprep.subr.mxu0 0.0
      %1748 = vmatpush1.msra.mxu0 0.0
      %1749 = vmatprep.subr.mxu0 0.0
      %1750 = vmatpush1.msra.mxu0 0.0
      %1751 = vmatprep.subr.mxu0 0.0
      %1752 = vmatpush1.msra.mxu0 0.0
      %1753 = vmatprep.subr.mxu0 0.0
      %1754 = vmatpush1.msra.mxu0 0.0
      %1755 = vmatprep.subr.mxu0 0.0
      %1756 = vmatpush1.msra.mxu0 0.0
      %1757 = vmatprep.subr.mxu0 0.0
      %1758 = vmatpush1.msra.mxu0 0.0
      %1759 = vmatprep.subr.mxu0 0.0
      %1760 = vmatpush1.msra.mxu0 0.0
      %1761 = vmatprep.subr.mxu0 0.0
      %1762 = vmatpush1.msra.mxu0 0.0
      %1763 = vmatprep.subr.mxu0 0.0
      %1764 = vmatpush1.msra.mxu0 0.0
      %1765 = vmatprep.mubr.f32.mxu0 0.0
      %1766 = vmatmul.mubr.f32.gmra.mrb[0].mxu0 %v1622
      %v1767 = vpop.f32.mrb[0].mxu0
      %v1768 = vadd.f32 0.0, %v1767
      %v1769 = vpop.f32.mrb[0].mxu0
      %1770 = vdwg.mxu0
      %v1771 = vadd.f32 %v1607, %v1697
      %v1772 = vadd.f32 %v1608, %v1699
      %v1773 = vadd.f32 %v1609, %v1768
      %v1774 = vld [vmem:[%s2] sm:$0xf]
      %1776 = vset.pattern.permute.xlu0 0
      %1777 = vperm.xlu0 %1776, %v1774
      %v1778 = vpop.permute.xlu0 %1777
      %v1780 = vadd.f32 %v1771, %v1778
      %v1781 = vadd.f32 %v1772, %v1778
      %v1782 = vadd.f32 %v1773, %v1778
      %v1783 = vmax.f32 %v1780, 0.0
      %v1784 = vmax.f32 %v1781, 0.0
      %v1785 = vmax.f32 %v1782, 0.0
      %s1786 = scalar_lea.vmem %s1, 36
      %v1787 = vld [vmem:[%s1786] sm:$0xf]
      %s1788 = scalar_lea.vmem %s1, 40
      %v1789 = vld [vmem:[%s1788] sm:$0xf]
      %v1790 = vrot.slane %v306, 2
      %v1791 = vrot.slane %v314, 2
      %v1792 = vrot.slane %v307, 2
      %1793 = vrot.lane.b32.xlu0 %v1790, 127
      %v1794 = vpop.permute.xlu0 %1793
      %1795 = vrot.lane.b32.xlu0 %v1791, 127
      %v1796 = vpop.permute.xlu0 %1795
      %1797 = vrot.lane.b32.xlu0 %v1792, 127
      %v1798 = vpop.permute.xlu0 %1797
      %v1799 = vsel %vm321, %v1794, %v1796
      %v1800 = vsel %vm321, %v1796, %v1798
      %v1802 = vsel %vm324, %v1789, 0
      %v1804 = vsel %vm328, %v1799, 0
      %v1806 = vsel %vm328, %v1800, 0
      %v1808 = vsel %vm328, %v1798, 0
      %1810 = vmatprep.subr.mxu0 %v1806
      %1811 = vmatpush1.msra.mxu0 %v1804
      %1812 = vmatprep.subr.mxu0 0.0
      %1813 = vmatpush1.msra.mxu0 0.0
      %1814 = vmatprep.subr.mxu0 0.0
      %1815 = vmatpush1.msra.mxu0 0.0
      %1816 = vmatprep.subr.mxu0 0.0
      %1817 = vmatpush1.msra.mxu0 0.0
      %1818 = vmatprep.subr.mxu0 0.0
      %1819 = vmatpush1.msra.mxu0 0.0
      %1820 = vmatprep.subr.mxu0 0.0
      %1821 = vmatpush1.msra.mxu0 0.0
      %1822 = vmatprep.subr.mxu0 0.0
      %1823 = vmatpush1.msra.mxu0 0.0
      %1824 = vmatprep.subr.mxu0 0.0
      %1825 = vmatpush1.msra.mxu0 0.0
      %1826 = vmatprep.subr.mxu0 0.0
      %1827 = vmatpush1.msra.mxu0 0.0
      %1828 = vmatprep.subr.mxu0 0.0
      %1829 = vmatpush1.msra.mxu0 0.0
      %1830 = vmatprep.subr.mxu0 0.0
      %1831 = vmatpush1.msra.mxu0 0.0
      %1832 = vmatprep.subr.mxu0 0.0
      %1833 = vmatpush1.msra.mxu0 0.0
      %1834 = vmatprep.subr.mxu0 0.0
      %1835 = vmatpush1.msra.mxu0 0.0
      %1836 = vmatprep.subr.mxu0 0.0
      %1837 = vmatpush1.msra.mxu0 0.0
      %1838 = vmatprep.subr.mxu0 0.0
      %1839 = vmatpush1.msra.mxu0 0.0
      %1840 = vmatprep.subr.mxu0 0.0
      %1841 = vmatpush1.msra.mxu0 0.0
      %1842 = vmatprep.subr.mxu0 0.0
      %1843 = vmatpush1.msra.mxu0 0.0
      %1844 = vmatprep.subr.mxu0 0.0
      %1845 = vmatpush1.msra.mxu0 0.0
      %1846 = vmatprep.subr.mxu0 0.0
      %1847 = vmatpush1.msra.mxu0 0.0
      %1848 = vmatprep.subr.mxu0 0.0
      %1849 = vmatpush1.msra.mxu0 0.0
      %1850 = vmatprep.subr.mxu0 0.0
      %1851 = vmatpush1.msra.mxu0 0.0
      %1852 = vmatprep.subr.mxu0 0.0
      %1853 = vmatpush1.msra.mxu0 0.0
      %1854 = vmatprep.subr.mxu0 0.0
      %1855 = vmatpush1.msra.mxu0 0.0
      %1856 = vmatprep.subr.mxu0 0.0
      %1857 = vmatpush1.msra.mxu0 0.0
      %1858 = vmatprep.subr.mxu0 0.0
      %1859 = vmatpush1.msra.mxu0 0.0
      %1860 = vmatprep.subr.mxu0 0.0
      %1861 = vmatpush1.msra.mxu0 0.0
      %1862 = vmatprep.subr.mxu0 0.0
      %1863 = vmatpush1.msra.mxu0 0.0
      %1864 = vmatprep.subr.mxu0 0.0
      %1865 = vmatpush1.msra.mxu0 0.0
      %1866 = vmatprep.subr.mxu0 0.0
      %1867 = vmatpush1.msra.mxu0 0.0
      %1868 = vmatprep.subr.mxu0 0.0
      %1869 = vmatpush1.msra.mxu0 0.0
      %1870 = vmatprep.subr.mxu0 0.0
      %1871 = vmatpush1.msra.mxu0 0.0
      %1872 = vmatprep.subr.mxu0 0.0
      %1873 = vmatpush1.msra.mxu0 0.0
      %1874 = vmatprep.mubr.f32.mxu0 0.0
      %1875 = vmatmul.mubr.f32.gmra.mrb[0].mxu0 %v1802
      %v1876 = vpop.f32.mrb[0].mxu0
      %v1877 = vadd.f32 0.0, %v1876
      %v1878 = vpop.f32.mrb[0].mxu0
      %v1879 = vadd.f32 0.0, %v1878
      %1880 = vdwg.mxu0
      %1881 = vmatprep.subr.mxu0 0.0
      %1882 = vmatpush1.msra.mxu0 %v1808
      %1883 = vmatprep.subr.mxu0 0.0
      %1884 = vmatpush1.msra.mxu0 0.0
      %1885 = vmatprep.subr.mxu0 0.0
      %1886 = vmatpush1.msra.mxu0 0.0
      %1887 = vmatprep.subr.mxu0 0.0
      %1888 = vmatpush1.msra.mxu0 0.0
      %1889 = vmatprep.subr.mxu0 0.0
      %1890 = vmatpush1.msra.mxu0 0.0
      %1891 = vmatprep.subr.mxu0 0.0
      %1892 = vmatpush1.msra.mxu0 0.0
      %1893 = vmatprep.subr.mxu0 0.0
      %1894 = vmatpush1.msra.mxu0 0.0
      %1895 = vmatprep.subr.mxu0 0.0
      %1896 = vmatpush1.msra.mxu0 0.0
      %1897 = vmatprep.subr.mxu0 0.0
      %1898 = vmatpush1.msra.mxu0 0.0
      %1899 = vmatprep.subr.mxu0 0.0
      %1900 = vmatpush1.msra.mxu0 0.0
      %1901 = vmatprep.subr.mxu0 0.0
      %1902 = vmatpush1.msra.mxu0 0.0
      %1903 = vmatprep.subr.mxu0 0.0
      %1904 = vmatpush1.msra.mxu0 0.0
      %1905 = vmatprep.subr.mxu0 0.0
      %1906 = vmatpush1.msra.mxu0 0.0
      %1907 = vmatprep.subr.mxu0 0.0
      %1908 = vmatpush1.msra.mxu0 0.0
      %1909 = vmatprep.subr.mxu0 0.0
      %1910 = vmatpush1.msra.mxu0 0.0
      %1911 = vmatprep.subr.mxu0 0.0
      %1912 = vmatpush1.msra.mxu0 0.0
      %1913 = vmatprep.subr.mxu0 0.0
      %1914 = vmatpush1.msra.mxu0 0.0
      %1915 = vmatprep.subr.mxu0 0.0
      %1916 = vmatpush1.msra.mxu0 0.0
      %1917 = vmatprep.subr.mxu0 0.0
      %1918 = vmatpush1.msra.mxu0 0.0
      %1919 = vmatprep.subr.mxu0 0.0
      %1920 = vmatpush1.msra.mxu0 0.0
      %1921 = vmatprep.subr.mxu0 0.0
      %1922 = vmatpush1.msra.mxu0 0.0
      %1923 = vmatprep.subr.mxu0 0.0
      %1924 = vmatpush1.msra.mxu0 0.0
      %1925 = vmatprep.subr.mxu0 0.0
      %1926 = vmatpush1.msra.mxu0 0.0
      %1927 = vmatprep.subr.mxu0 0.0
      %1928 = vmatpush1.msra.mxu0 0.0
      %1929 = vmatprep.subr.mxu0 0.0
      %1930 = vmatpush1.msra.mxu0 0.0
      %1931 = vmatprep.subr.mxu0 0.0
      %1932 = vmatpush1.msra.mxu0 0.0
      %1933 = vmatprep.subr.mxu0 0.0
      %1934 = vmatpush1.msra.mxu0 0.0
      %1935 = vmatprep.subr.mxu0 0.0
      %1936 = vmatpush1.msra.mxu0 0.0
      %1937 = vmatprep.subr.mxu0 0.0
      %1938 = vmatpush1.msra.mxu0 0.0
      %1939 = vmatprep.subr.mxu0 0.0
      %1940 = vmatpush1.msra.mxu0 0.0
      %1941 = vmatprep.subr.mxu0 0.0
      %1942 = vmatpush1.msra.mxu0 0.0
      %1943 = vmatprep.subr.mxu0 0.0
      %1944 = vmatpush1.msra.mxu0 0.0
      %1945 = vmatprep.mubr.f32.mxu0 0.0
      %1946 = vmatmul.mubr.f32.gmra.mrb[0].mxu0 %v1802
      %v1947 = vpop.f32.mrb[0].mxu0
      %v1948 = vadd.f32 0.0, %v1947
      %v1949 = vpop.f32.mrb[0].mxu0
      %1950 = vdwg.mxu0
      %v1952 = vsel %vm324, %v1787, 0
      %v1954 = vsel %vm328, %v1790, 0
      %v1956 = vsel %vm328, %v1791, 0
      %v1958 = vsel %vm328, %v1792, 0
      %1960 = vmatprep.subr.mxu0 %v1956
      %1961 = vmatpush1.msra.mxu0 %v1954
      %1962 = vmatprep.subr.mxu0 0.0
      %1963 = vmatpush1.msra.mxu0 0.0
      %1964 = vmatprep.subr.mxu0 0.0
      %1965 = vmatpush1.msra.mxu0 0.0
      %1966 = vmatprep.subr.mxu0 0.0
      %1967 = vmatpush1.msra.mxu0 0.0
      %1968 = vmatprep.subr.mxu0 0.0
      %1969 = vmatpush1.msra.mxu0 0.0
      %1970 = vmatprep.subr.mxu0 0.0
      %1971 = vmatpush1.msra.mxu0 0.0
      %1972 = vmatprep.subr.mxu0 0.0
      %1973 = vmatpush1.msra.mxu0 0.0
      %1974 = vmatprep.subr.mxu0 0.0
      %1975 = vmatpush1.msra.mxu0 0.0
      %1976 = vmatprep.subr.mxu0 0.0
      %1977 = vmatpush1.msra.mxu0 0.0
      %1978 = vmatprep.subr.mxu0 0.0
      %1979 = vmatpush1.msra.mxu0 0.0
      %1980 = vmatprep.subr.mxu0 0.0
      %1981 = vmatpush1.msra.mxu0 0.0
      %1982 = vmatprep.subr.mxu0 0.0
      %1983 = vmatpush1.msra.mxu0 0.0
      %1984 = vmatprep.subr.mxu0 0.0
      %1985 = vmatpush1.msra.mxu0 0.0
      %1986 = vmatprep.subr.mxu0 0.0
      %1987 = vmatpush1.msra.mxu0 0.0
      %1988 = vmatprep.subr.mxu0 0.0
      %1989 = vmatpush1.msra.mxu0 0.0
      %1990 = vmatprep.subr.mxu0 0.0
      %1991 = vmatpush1.msra.mxu0 0.0
      %1992 = vmatprep.subr.mxu0 0.0
      %1993 = vmatpush1.msra.mxu0 0.0
      %1994 = vmatprep.subr.mxu0 0.0
      %1995 = vmatpush1.msra.mxu0 0.0
      %1996 = vmatprep.subr.mxu0 0.0
      %1997 = vmatpush1.msra.mxu0 0.0
      %1998 = vmatprep.subr.mxu0 0.0
      %1999 = vmatpush1.msra.mxu0 0.0
      %2000 = vmatprep.subr.mxu0 0.0
      %2001 = vmatpush1.msra.mxu0 0.0
      %2002 = vmatprep.subr.mxu0 0.0
      %2003 = vmatpush1.msra.mxu0 0.0
      %2004 = vmatprep.subr.mxu0 0.0
      %2005 = vmatpush1.msra.mxu0 0.0
      %2006 = vmatprep.subr.mxu0 0.0
      %2007 = vmatpush1.msra.mxu0 0.0
      %2008 = vmatprep.subr.mxu0 0.0
      %2009 = vmatpush1.msra.mxu0 0.0
      %2010 = vmatprep.subr.mxu0 0.0
      %2011 = vmatpush1.msra.mxu0 0.0
      %2012 = vmatprep.subr.mxu0 0.0
      %2013 = vmatpush1.msra.mxu0 0.0
      %2014 = vmatprep.subr.mxu0 0.0
      %2015 = vmatpush1.msra.mxu0 0.0
      %2016 = vmatprep.subr.mxu0 0.0
      %2017 = vmatpush1.msra.mxu0 0.0
      %2018 = vmatprep.subr.mxu0 0.0
      %2019 = vmatpush1.msra.mxu0 0.0
      %2020 = vmatprep.subr.mxu0 0.0
      %2021 = vmatpush1.msra.mxu0 0.0
      %2022 = vmatprep.subr.mxu0 0.0
      %2023 = vmatpush1.msra.mxu0 0.0
      %2024 = vmatprep.mubr.f32.mxu0 0.0
      %2025 = vmatmul.mubr.f32.gmra.mrb[0].mxu0 %v1952
      %v2026 = vpop.f32.mrb[0].mxu0
      %v2027 = vadd.f32 %v1877, %v2026
      %v2028 = vpop.f32.mrb[0].mxu0
      %v2029 = vadd.f32 %v1879, %v2028
      %2030 = vdwg.mxu0
      %2031 = vmatprep.subr.mxu0 0.0
      %2032 = vmatpush1.msra.mxu0 %v1958
      %2033 = vmatprep.subr.mxu0 0.0
      %2034 = vmatpush1.msra.mxu0 0.0
      %2035 = vmatprep.subr.mxu0 0.0
      %2036 = vmatpush1.msra.mxu0 0.0
      %2037 = vmatprep.subr.mxu0 0.0
      %2038 = vmatpush1.msra.mxu0 0.0
      %2039 = vmatprep.subr.mxu0 0.0
      %2040 = vmatpush1.msra.mxu0 0.0
      %2041 = vmatprep.subr.mxu0 0.0
      %2042 = vmatpush1.msra.mxu0 0.0
      %2043 = vmatprep.subr.mxu0 0.0
      %2044 = vmatpush1.msra.mxu0 0.0
      %2045 = vmatprep.subr.mxu0 0.0
      %2046 = vmatpush1.msra.mxu0 0.0
      %2047 = vmatprep.subr.mxu0 0.0
      %2048 = vmatpush1.msra.mxu0 0.0
      %2049 = vmatprep.subr.mxu0 0.0
      %2050 = vmatpush1.msra.mxu0 0.0
      %2051 = vmatprep.subr.mxu0 0.0
      %2052 = vmatpush1.msra.mxu0 0.0
      %2053 = vmatprep.subr.mxu0 0.0
      %2054 = vmatpush1.msra.mxu0 0.0
      %2055 = vmatprep.subr.mxu0 0.0
      %2056 = vmatpush1.msra.mxu0 0.0
      %2057 = vmatprep.subr.mxu0 0.0
      %2058 = vmatpush1.msra.mxu0 0.0
      %2059 = vmatprep.subr.mxu0 0.0
      %2060 = vmatpush1.msra.mxu0 0.0
      %2061 = vmatprep.subr.mxu0 0.0
      %2062 = vmatpush1.msra.mxu0 0.0
      %2063 = vmatprep.subr.mxu0 0.0
      %2064 = vmatpush1.msra.mxu0 0.0
      %2065 = vmatprep.subr.mxu0 0.0
      %2066 = vmatpush1.msra.mxu0 0.0
      %2067 = vmatprep.subr.mxu0 0.0
      %2068 = vmatpush1.msra.mxu0 0.0
      %2069 = vmatprep.subr.mxu0 0.0
      %2070 = vmatpush1.msra.mxu0 0.0
      %2071 = vmatprep.subr.mxu0 0.0
      %2072 = vmatpush1.msra.mxu0 0.0
      %2073 = vmatprep.subr.mxu0 0.0
      %2074 = vmatpush1.msra.mxu0 0.0
      %2075 = vmatprep.subr.mxu0 0.0
      %2076 = vmatpush1.msra.mxu0 0.0
      %2077 = vmatprep.subr.mxu0 0.0
      %2078 = vmatpush1.msra.mxu0 0.0
      %2079 = vmatprep.subr.mxu0 0.0
      %2080 = vmatpush1.msra.mxu0 0.0
      %2081 = vmatprep.subr.mxu0 0.0
      %2082 = vmatpush1.msra.mxu0 0.0
      %2083 = vmatprep.subr.mxu0 0.0
      %2084 = vmatpush1.msra.mxu0 0.0
      %2085 = vmatprep.subr.mxu0 0.0
      %2086 = vmatpush1.msra.mxu0 0.0
      %2087 = vmatprep.subr.mxu0 0.0
      %2088 = vmatpush1.msra.mxu0 0.0
      %2089 = vmatprep.subr.mxu0 0.0
      %2090 = vmatpush1.msra.mxu0 0.0
      %2091 = vmatprep.subr.mxu0 0.0
      %2092 = vmatpush1.msra.mxu0 0.0
      %2093 = vmatprep.subr.mxu0 0.0
      %2094 = vmatpush1.msra.mxu0 0.0
      %2095 = vmatprep.mubr.f32.mxu0 0.0
      %2096 = vmatmul.mubr.f32.gmra.mrb[0].mxu0 %v1952
      %v2097 = vpop.f32.mrb[0].mxu0
      %v2098 = vadd.f32 %v1948, %v2097
      %v2099 = vpop.f32.mrb[0].mxu0
      %2100 = vdwg.mxu0
      %s2101 = scalar_lea.vmem %s1, 44
      %v2102 = vld [vmem:[%s2101] sm:$0xf]
      %2103 = vrot.lane.b32.xlu0 %v1790, 126
      %v2104 = vpop.permute.xlu0 %2103
      %2105 = vrot.lane.b32.xlu0 %v1791, 126
      %v2106 = vpop.permute.xlu0 %2105
      %2107 = vrot.lane.b32.xlu0 %v1792, 126
      %v2108 = vpop.permute.xlu0 %2107
      %v2109 = vsel %vm634, %v2104, %v2106
      %v2110 = vsel %vm634, %v2106, %v2108
      %v2112 = vsel %vm324, %v2102, 0
      %v2114 = vsel %vm328, %v2109, 0
      %v2116 = vsel %vm328, %v2110, 0
      %v2118 = vsel %vm328, %v2108, 0
      %2120 = vmatprep.subr.mxu0 %v2116
      %2121 = vmatpush1.msra.mxu0 %v2114
      %2122 = vmatprep.subr.mxu0 0.0
      %2123 = vmatpush1.msra.mxu0 0.0
      %2124 = vmatprep.subr.mxu0 0.0
      %2125 = vmatpush1.msra.mxu0 0.0
      %2126 = vmatprep.subr.mxu0 0.0
      %2127 = vmatpush1.msra.mxu0 0.0
      %2128 = vmatprep.subr.mxu0 0.0
      %2129 = vmatpush1.msra.mxu0 0.0
      %2130 = vmatprep.subr.mxu0 0.0
      %2131 = vmatpush1.msra.mxu0 0.0
      %2132 = vmatprep.subr.mxu0 0.0
      %2133 = vmatpush1.msra.mxu0 0.0
      %2134 = vmatprep.subr.mxu0 0.0
      %2135 = vmatpush1.msra.mxu0 0.0
      %2136 = vmatprep.subr.mxu0 0.0
      %2137 = vmatpush1.msra.mxu0 0.0
      %2138 = vmatprep.subr.mxu0 0.0
      %2139 = vmatpush1.msra.mxu0 0.0
      %2140 = vmatprep.subr.mxu0 0.0
      %2141 = vmatpush1.msra.mxu0 0.0
      %2142 = vmatprep.subr.mxu0 0.0
      %2143 = vmatpush1.msra.mxu0 0.0
      %2144 = vmatprep.subr.mxu0 0.0
      %2145 = vmatpush1.msra.mxu0 0.0
      %2146 = vmatprep.subr.mxu0 0.0
      %2147 = vmatpush1.msra.mxu0 0.0
      %2148 = vmatprep.subr.mxu0 0.0
      %2149 = vmatpush1.msra.mxu0 0.0
      %2150 = vmatprep.subr.mxu0 0.0
      %2151 = vmatpush1.msra.mxu0 0.0
      %2152 = vmatprep.subr.mxu0 0.0
      %2153 = vmatpush1.msra.mxu0 0.0
      %2154 = vmatprep.subr.mxu0 0.0
      %2155 = vmatpush1.msra.mxu0 0.0
      %2156 = vmatprep.subr.mxu0 0.0
      %2157 = vmatpush1.msra.mxu0 0.0
      %2158 = vmatprep.subr.mxu0 0.0
      %2159 = vmatpush1.msra.mxu0 0.0
      %2160 = vmatprep.subr.mxu0 0.0
      %2161 = vmatpush1.msra.mxu0 0.0
      %2162 = vmatprep.subr.mxu0 0.0
      %2163 = vmatpush1.msra.mxu0 0.0
      %2164 = vmatprep.subr.mxu0 0.0
      %2165 = vmatpush1.msra.mxu0 0.0
      %2166 = vmatprep.subr.mxu0 0.0
      %2167 = vmatpush1.msra.mxu0 0.0
      %2168 = vmatprep.subr.mxu0 0.0
      %2169 = vmatpush1.msra.mxu0 0.0
      %2170 = vmatprep.subr.mxu0 0.0
      %2171 = vmatpush1.msra.mxu0 0.0
      %2172 = vmatprep.subr.mxu0 0.0
      %2173 = vmatpush1.msra.mxu0 0.0
      %2174 = vmatprep.subr.mxu0 0.0
      %2175 = vmatpush1.msra.mxu0 0.0
      %2176 = vmatprep.subr.mxu0 0.0
      %2177 = vmatpush1.msra.mxu0 0.0
      %2178 = vmatprep.subr.mxu0 0.0
      %2179 = vmatpush1.msra.mxu0 0.0
      %2180 = vmatprep.subr.mxu0 0.0
      %2181 = vmatpush1.msra.mxu0 0.0
      %2182 = vmatprep.subr.mxu0 0.0
      %2183 = vmatpush1.msra.mxu0 0.0
      %2184 = vmatprep.mubr.f32.mxu0 0.0
      %2185 = vmatmul.mubr.f32.gmra.mrb[0].mxu0 %v2112
      %v2186 = vpop.f32.mrb[0].mxu0
      %v2187 = vadd.f32 0.0, %v2186
      %v2188 = vpop.f32.mrb[0].mxu0
      %v2189 = vadd.f32 0.0, %v2188
      %2190 = vdwg.mxu0
      %2191 = vmatprep.subr.mxu0 0.0
      %2192 = vmatpush1.msra.mxu0 %v2118
      %2193 = vmatprep.subr.mxu0 0.0
      %2194 = vmatpush1.msra.mxu0 0.0
      %2195 = vmatprep.subr.mxu0 0.0
      %2196 = vmatpush1.msra.mxu0 0.0
      %2197 = vmatprep.subr.mxu0 0.0
      %2198 = vmatpush1.msra.mxu0 0.0
      %2199 = vmatprep.subr.mxu0 0.0
      %2200 = vmatpush1.msra.mxu0 0.0
      %2201 = vmatprep.subr.mxu0 0.0
      %2202 = vmatpush1.msra.mxu0 0.0
      %2203 = vmatprep.subr.mxu0 0.0
      %2204 = vmatpush1.msra.mxu0 0.0
      %2205 = vmatprep.subr.mxu0 0.0
      %2206 = vmatpush1.msra.mxu0 0.0
      %2207 = vmatprep.subr.mxu0 0.0
      %2208 = vmatpush1.msra.mxu0 0.0
      %2209 = vmatprep.subr.mxu0 0.0
      %2210 = vmatpush1.msra.mxu0 0.0
      %2211 = vmatprep.subr.mxu0 0.0
      %2212 = vmatpush1.msra.mxu0 0.0
      %2213 = vmatprep.subr.mxu0 0.0
      %2214 = vmatpush1.msra.mxu0 0.0
      %2215 = vmatprep.subr.mxu0 0.0
      %2216 = vmatpush1.msra.mxu0 0.0
      %2217 = vmatprep.subr.mxu0 0.0
      %2218 = vmatpush1.msra.mxu0 0.0
      %2219 = vmatprep.subr.mxu0 0.0
      %2220 = vmatpush1.msra.mxu0 0.0
      %2221 = vmatprep.subr.mxu0 0.0
      %2222 = vmatpush1.msra.mxu0 0.0
      %2223 = vmatprep.subr.mxu0 0.0
      %2224 = vmatpush1.msra.mxu0 0.0
      %2225 = vmatprep.subr.mxu0 0.0
      %2226 = vmatpush1.msra.mxu0 0.0
      %2227 = vmatprep.subr.mxu0 0.0
      %2228 = vmatpush1.msra.mxu0 0.0
      %2229 = vmatprep.subr.mxu0 0.0
      %2230 = vmatpush1.msra.mxu0 0.0
      %2231 = vmatprep.subr.mxu0 0.0
      %2232 = vmatpush1.msra.mxu0 0.0
      %2233 = vmatprep.subr.mxu0 0.0
      %2234 = vmatpush1.msra.mxu0 0.0
      %2235 = vmatprep.subr.mxu0 0.0
      %2236 = vmatpush1.msra.mxu0 0.0
      %2237 = vmatprep.subr.mxu0 0.0
      %2238 = vmatpush1.msra.mxu0 0.0
      %2239 = vmatprep.subr.mxu0 0.0
      %2240 = vmatpush1.msra.mxu0 0.0
      %2241 = vmatprep.subr.mxu0 0.0
      %2242 = vmatpush1.msra.mxu0 0.0
      %2243 = vmatprep.subr.mxu0 0.0
      %2244 = vmatpush1.msra.mxu0 0.0
      %2245 = vmatprep.subr.mxu0 0.0
      %2246 = vmatpush1.msra.mxu0 0.0
      %2247 = vmatprep.subr.mxu0 0.0
      %2248 = vmatpush1.msra.mxu0 0.0
      %2249 = vmatprep.subr.mxu0 0.0
      %2250 = vmatpush1.msra.mxu0 0.0
      %2251 = vmatprep.subr.mxu0 0.0
      %2252 = vmatpush1.msra.mxu0 0.0
      %2253 = vmatprep.subr.mxu0 0.0
      %2254 = vmatpush1.msra.mxu0 0.0
      %2255 = vmatprep.mubr.f32.mxu0 0.0
      %2256 = vmatmul.mubr.f32.gmra.mrb[0].mxu0 %v2112
      %v2257 = vpop.f32.mrb[0].mxu0
      %v2258 = vadd.f32 0.0, %v2257
      %v2259 = vpop.f32.mrb[0].mxu0
      %2260 = vdwg.mxu0
      %v2261 = vadd.f32 %v2027, %v2187
      %v2262 = vadd.f32 %v2029, %v2189
      %v2263 = vadd.f32 %v2098, %v2258
      %s2264 = scalar_lea.vmem %s1, 48
      %v2265 = vld [vmem:[%s2264] sm:$0xf]
      %2266 = vrot.lane.b32.xlu0 %v1790, 110
      %v2267 = vpop.permute.xlu0 %2266
      %2268 = vrot.lane.b32.xlu0 %v1791, 110
      %v2269 = vpop.permute.xlu0 %2268
      %2270 = vrot.lane.b32.xlu0 %v1792, 110
      %v2271 = vpop.permute.xlu0 %2270
      %v2272 = vsel %vm798, %v2267, %v2269
      %v2273 = vsel %vm798, %v2269, %v2271
      %v2275 = vsel %vm324, %v2265, 0
      %v2277 = vsel %vm328, %v2272, 0
      %v2279 = vsel %vm328, %v2273, 0
      %v2281 = vsel %vm328, %v2271, 0
      %2283 = vmatprep.subr.mxu0 %v2279
      %2284 = vmatpush1.msra.mxu0 %v2277
      %2285 = vmatprep.subr.mxu0 0.0
      %2286 = vmatpush1.msra.mxu0 0.0
      %2287 = vmatprep.subr.mxu0 0.0
      %2288 = vmatpush1.msra.mxu0 0.0
      %2289 = vmatprep.subr.mxu0 0.0
      %2290 = vmatpush1.msra.mxu0 0.0
      %2291 = vmatprep.subr.mxu0 0.0
      %2292 = vmatpush1.msra.mxu0 0.0
      %2293 = vmatprep.subr.mxu0 0.0
      %2294 = vmatpush1.msra.mxu0 0.0
      %2295 = vmatprep.subr.mxu0 0.0
      %2296 = vmatpush1.msra.mxu0 0.0
      %2297 = vmatprep.subr.mxu0 0.0
      %2298 = vmatpush1.msra.mxu0 0.0
      %2299 = vmatprep.subr.mxu0 0.0
      %2300 = vmatpush1.msra.mxu0 0.0
      %2301 = vmatprep.subr.mxu0 0.0
      %2302 = vmatpush1.msra.mxu0 0.0
      %2303 = vmatprep.subr.mxu0 0.0
      %2304 = vmatpush1.msra.mxu0 0.0
      %2305 = vmatprep.subr.mxu0 0.0
      %2306 = vmatpush1.msra.mxu0 0.0
      %2307 = vmatprep.subr.mxu0 0.0
      %2308 = vmatpush1.msra.mxu0 0.0
      %2309 = vmatprep.subr.mxu0 0.0
      %2310 = vmatpush1.msra.mxu0 0.0
      %2311 = vmatprep.subr.mxu0 0.0
      %2312 = vmatpush1.msra.mxu0 0.0
      %2313 = vmatprep.subr.mxu0 0.0
      %2314 = vmatpush1.msra.mxu0 0.0
      %2315 = vmatprep.subr.mxu0 0.0
      %2316 = vmatpush1.msra.mxu0 0.0
      %2317 = vmatprep.subr.mxu0 0.0
      %2318 = vmatpush1.msra.mxu0 0.0
      %2319 = vmatprep.subr.mxu0 0.0
      %2320 = vmatpush1.msra.mxu0 0.0
      %2321 = vmatprep.subr.mxu0 0.0
      %2322 = vmatpush1.msra.mxu0 0.0
      %2323 = vmatprep.subr.mxu0 0.0
      %2324 = vmatpush1.msra.mxu0 0.0
      %2325 = vmatprep.subr.mxu0 0.0
      %2326 = vmatpush1.msra.mxu0 0.0
      %2327 = vmatprep.subr.mxu0 0.0
      %2328 = vmatpush1.msra.mxu0 0.0
      %2329 = vmatprep.subr.mxu0 0.0
      %2330 = vmatpush1.msra.mxu0 0.0
      %2331 = vmatprep.subr.mxu0 0.0
      %2332 = vmatpush1.msra.mxu0 0.0
      %2333 = vmatprep.subr.mxu0 0.0
      %2334 = vmatpush1.msra.mxu0 0.0
      %2335 = vmatprep.subr.mxu0 0.0
      %2336 = vmatpush1.msra.mxu0 0.0
      %2337 = vmatprep.subr.mxu0 0.0
      %2338 = vmatpush1.msra.mxu0 0.0
      %2339 = vmatprep.subr.mxu0 0.0
      %2340 = vmatpush1.msra.mxu0 0.0
      %2341 = vmatprep.subr.mxu0 0.0
      %2342 = vmatpush1.msra.mxu0 0.0
      %2343 = vmatprep.subr.mxu0 0.0
      %2344 = vmatpush1.msra.mxu0 0.0
      %2345 = vmatprep.subr.mxu0 0.0
      %2346 = vmatpush1.msra.mxu0 0.0
      %2347 = vmatprep.mubr.f32.mxu0 0.0
      %2348 = vmatmul.mubr.f32.gmra.mrb[0].mxu0 %v2275
      %v2349 = vpop.f32.mrb[0].mxu0
      %v2350 = vadd.f32 0.0, %v2349
      %v2351 = vpop.f32.mrb[0].mxu0
      %v2352 = vadd.f32 0.0, %v2351
      %2353 = vdwg.mxu0
      %2354 = vmatprep.subr.mxu0 0.0
      %2355 = vmatpush1.msra.mxu0 %v2281
      %2356 = vmatprep.subr.mxu0 0.0
      %2357 = vmatpush1.msra.mxu0 0.0
      %2358 = vmatprep.subr.mxu0 0.0
      %2359 = vmatpush1.msra.mxu0 0.0
      %2360 = vmatprep.subr.mxu0 0.0
      %2361 = vmatpush1.msra.mxu0 0.0
      %2362 = vmatprep.subr.mxu0 0.0
      %2363 = vmatpush1.msra.mxu0 0.0
      %2364 = vmatprep.subr.mxu0 0.0
      %2365 = vmatpush1.msra.mxu0 0.0
      %2366 = vmatprep.subr.mxu0 0.0
      %2367 = vmatpush1.msra.mxu0 0.0
      %2368 = vmatprep.subr.mxu0 0.0
      %2369 = vmatpush1.msra.mxu0 0.0
      %2370 = vmatprep.subr.mxu0 0.0
      %2371 = vmatpush1.msra.mxu0 0.0
      %2372 = vmatprep.subr.mxu0 0.0
      %2373 = vmatpush1.msra.mxu0 0.0
      %2374 = vmatprep.subr.mxu0 0.0
      %2375 = vmatpush1.msra.mxu0 0.0
      %2376 = vmatprep.subr.mxu0 0.0
      %2377 = vmatpush1.msra.mxu0 0.0
      %2378 = vmatprep.subr.mxu0 0.0
      %2379 = vmatpush1.msra.mxu0 0.0
      %2380 = vmatprep.subr.mxu0 0.0
      %2381 = vmatpush1.msra.mxu0 0.0
      %2382 = vmatprep.subr.mxu0 0.0
      %2383 = vmatpush1.msra.mxu0 0.0
      %2384 = vmatprep.subr.mxu0 0.0
      %2385 = vmatpush1.msra.mxu0 0.0
      %2386 = vmatprep.subr.mxu0 0.0
      %2387 = vmatpush1.msra.mxu0 0.0
      %2388 = vmatprep.subr.mxu0 0.0
      %2389 = vmatpush1.msra.mxu0 0.0
      %2390 = vmatprep.subr.mxu0 0.0
      %2391 = vmatpush1.msra.mxu0 0.0
      %2392 = vmatprep.subr.mxu0 0.0
      %2393 = vmatpush1.msra.mxu0 0.0
      %2394 = vmatprep.subr.mxu0 0.0
      %2395 = vmatpush1.msra.mxu0 0.0
      %2396 = vmatprep.subr.mxu0 0.0
      %2397 = vmatpush1.msra.mxu0 0.0
      %2398 = vmatprep.subr.mxu0 0.0
      %2399 = vmatpush1.msra.mxu0 0.0
      %2400 = vmatprep.subr.mxu0 0.0
      %2401 = vmatpush1.msra.mxu0 0.0
      %2402 = vmatprep.subr.mxu0 0.0
      %2403 = vmatpush1.msra.mxu0 0.0
      %2404 = vmatprep.subr.mxu0 0.0
      %2405 = vmatpush1.msra.mxu0 0.0
      %2406 = vmatprep.subr.mxu0 0.0
      %2407 = vmatpush1.msra.mxu0 0.0
      %2408 = vmatprep.subr.mxu0 0.0
      %2409 = vmatpush1.msra.mxu0 0.0
      %2410 = vmatprep.subr.mxu0 0.0
      %2411 = vmatpush1.msra.mxu0 0.0
      %2412 = vmatprep.subr.mxu0 0.0
      %2413 = vmatpush1.msra.mxu0 0.0
      %2414 = vmatprep.subr.mxu0 0.0
      %2415 = vmatpush1.msra.mxu0 0.0
      %2416 = vmatprep.subr.mxu0 0.0
      %2417 = vmatpush1.msra.mxu0 0.0
      %2418 = vmatprep.mubr.f32.mxu0 0.0
      %2419 = vmatmul.mubr.f32.gmra.mrb[0].mxu0 %v2275
      %v2420 = vpop.f32.mrb[0].mxu0
      %v2421 = vadd.f32 0.0, %v2420
      %v2422 = vpop.f32.mrb[0].mxu0
      %2423 = vdwg.mxu0
      %v2424 = vadd.f32 %v2261, %v2350
      %v2425 = vadd.f32 %v2262, %v2352
      %v2426 = vadd.f32 %v2263, %v2421
      %s2427 = scalar_lea.vmem %s1, 52
      %v2428 = vld [vmem:[%s2427] sm:$0xf]
      %2429 = vrot.lane.b32.xlu0 %v1790, 109
      %v2430 = vpop.permute.xlu0 %2429
      %2431 = vrot.lane.b32.xlu0 %v1791, 109
      %v2432 = vpop.permute.xlu0 %2431
      %2433 = vrot.lane.b32.xlu0 %v1792, 109
      %v2434 = vpop.permute.xlu0 %2433
      %v2435 = vsel %vm962, %v2430, %v2432
      %v2436 = vsel %vm962, %v2432, %v2434
      %v2438 = vsel %vm324, %v2428, 0
      %v2440 = vsel %vm328, %v2435, 0
      %v2442 = vsel %vm328, %v2436, 0
      %v2444 = vsel %vm328, %v2434, 0
      %2446 = vmatprep.subr.mxu0 %v2442
      %2447 = vmatpush1.msra.mxu0 %v2440
      %2448 = vmatprep.subr.mxu0 0.0
      %2449 = vmatpush1.msra.mxu0 0.0
      %2450 = vmatprep.subr.mxu0 0.0
      %2451 = vmatpush1.msra.mxu0 0.0
      %2452 = vmatprep.subr.mxu0 0.0
      %2453 = vmatpush1.msra.mxu0 0.0
      %2454 = vmatprep.subr.mxu0 0.0
      %2455 = vmatpush1.msra.mxu0 0.0
      %2456 = vmatprep.subr.mxu0 0.0
      %2457 = vmatpush1.msra.mxu0 0.0
      %2458 = vmatprep.subr.mxu0 0.0
      %2459 = vmatpush1.msra.mxu0 0.0
      %2460 = vmatprep.subr.mxu0 0.0
      %2461 = vmatpush1.msra.mxu0 0.0
      %2462 = vmatprep.subr.mxu0 0.0
      %2463 = vmatpush1.msra.mxu0 0.0
      %2464 = vmatprep.subr.mxu0 0.0
      %2465 = vmatpush1.msra.mxu0 0.0
      %2466 = vmatprep.subr.mxu0 0.0
      %2467 = vmatpush1.msra.mxu0 0.0
      %2468 = vmatprep.subr.mxu0 0.0
      %2469 = vmatpush1.msra.mxu0 0.0
      %2470 = vmatprep.subr.mxu0 0.0
      %2471 = vmatpush1.msra.mxu0 0.0
      %2472 = vmatprep.subr.mxu0 0.0
      %2473 = vmatpush1.msra.mxu0 0.0
      %2474 = vmatprep.subr.mxu0 0.0
      %2475 = vmatpush1.msra.mxu0 0.0
      %2476 = vmatprep.subr.mxu0 0.0
      %2477 = vmatpush1.msra.mxu0 0.0
      %2478 = vmatprep.subr.mxu0 0.0
      %2479 = vmatpush1.msra.mxu0 0.0
      %2480 = vmatprep.subr.mxu0 0.0
      %2481 = vmatpush1.msra.mxu0 0.0
      %2482 = vmatprep.subr.mxu0 0.0
      %2483 = vmatpush1.msra.mxu0 0.0
      %2484 = vmatprep.subr.mxu0 0.0
      %2485 = vmatpush1.msra.mxu0 0.0
      %2486 = vmatprep.subr.mxu0 0.0
      %2487 = vmatpush1.msra.mxu0 0.0
      %2488 = vmatprep.subr.mxu0 0.0
      %2489 = vmatpush1.msra.mxu0 0.0
      %2490 = vmatprep.subr.mxu0 0.0
      %2491 = vmatpush1.msra.mxu0 0.0
      %2492 = vmatprep.subr.mxu0 0.0
      %2493 = vmatpush1.msra.mxu0 0.0
      %2494 = vmatprep.subr.mxu0 0.0
      %2495 = vmatpush1.msra.mxu0 0.0
      %2496 = vmatprep.subr.mxu0 0.0
      %2497 = vmatpush1.msra.mxu0 0.0
      %2498 = vmatprep.subr.mxu0 0.0
      %2499 = vmatpush1.msra.mxu0 0.0
      %2500 = vmatprep.subr.mxu0 0.0
      %2501 = vmatpush1.msra.mxu0 0.0
      %2502 = vmatprep.subr.mxu0 0.0
      %2503 = vmatpush1.msra.mxu0 0.0
      %2504 = vmatprep.subr.mxu0 0.0
      %2505 = vmatpush1.msra.mxu0 0.0
      %2506 = vmatprep.subr.mxu0 0.0
      %2507 = vmatpush1.msra.mxu0 0.0
      %2508 = vmatprep.subr.mxu0 0.0
      %2509 = vmatpush1.msra.mxu0 0.0
      %2510 = vmatprep.mubr.f32.mxu0 0.0
      %2511 = vmatmul.mubr.f32.gmra.mrb[0].mxu0 %v2438
      %v2512 = vpop.f32.mrb[0].mxu0
      %v2513 = vadd.f32 0.0, %v2512
      %v2514 = vpop.f32.mrb[0].mxu0
      %v2515 = vadd.f32 0.0, %v2514
      %2516 = vdwg.mxu0
      %2517 = vmatprep.subr.mxu0 0.0
      %2518 = vmatpush1.msra.mxu0 %v2444
      %2519 = vmatprep.subr.mxu0 0.0
      %2520 = vmatpush1.msra.mxu0 0.0
      %2521 = vmatprep.subr.mxu0 0.0
      %2522 = vmatpush1.msra.mxu0 0.0
      %2523 = vmatprep.subr.mxu0 0.0
      %2524 = vmatpush1.msra.mxu0 0.0
      %2525 = vmatprep.subr.mxu0 0.0
      %2526 = vmatpush1.msra.mxu0 0.0
      %2527 = vmatprep.subr.mxu0 0.0
      %2528 = vmatpush1.msra.mxu0 0.0
      %2529 = vmatprep.subr.mxu0 0.0
      %2530 = vmatpush1.msra.mxu0 0.0
      %2531 = vmatprep.subr.mxu0 0.0
      %2532 = vmatpush1.msra.mxu0 0.0
      %2533 = vmatprep.subr.mxu0 0.0
      %2534 = vmatpush1.msra.mxu0 0.0
      %2535 = vmatprep.subr.mxu0 0.0
      %2536 = vmatpush1.msra.mxu0 0.0
      %2537 = vmatprep.subr.mxu0 0.0
      %2538 = vmatpush1.msra.mxu0 0.0
      %2539 = vmatprep.subr.mxu0 0.0
      %2540 = vmatpush1.msra.mxu0 0.0
      %2541 = vmatprep.subr.mxu0 0.0
      %2542 = vmatpush1.msra.mxu0 0.0
      %2543 = vmatprep.subr.mxu0 0.0
      %2544 = vmatpush1.msra.mxu0 0.0
      %2545 = vmatprep.subr.mxu0 0.0
      %2546 = vmatpush1.msra.mxu0 0.0
      %2547 = vmatprep.subr.mxu0 0.0
      %2548 = vmatpush1.msra.mxu0 0.0
      %2549 = vmatprep.subr.mxu0 0.0
      %2550 = vmatpush1.msra.mxu0 0.0
      %2551 = vmatprep.subr.mxu0 0.0
      %2552 = vmatpush1.msra.mxu0 0.0
      %2553 = vmatprep.subr.mxu0 0.0
      %2554 = vmatpush1.msra.mxu0 0.0
      %2555 = vmatprep.subr.mxu0 0.0
      %2556 = vmatpush1.msra.mxu0 0.0
      %2557 = vmatprep.subr.mxu0 0.0
      %2558 = vmatpush1.msra.mxu0 0.0
      %2559 = vmatprep.subr.mxu0 0.0
      %2560 = vmatpush1.msra.mxu0 0.0
      %2561 = vmatprep.subr.mxu0 0.0
      %2562 = vmatpush1.msra.mxu0 0.0
      %2563 = vmatprep.subr.mxu0 0.0
      %2564 = vmatpush1.msra.mxu0 0.0
      %2565 = vmatprep.subr.mxu0 0.0
      %2566 = vmatpush1.msra.mxu0 0.0
      %2567 = vmatprep.subr.mxu0 0.0
      %2568 = vmatpush1.msra.mxu0 0.0
      %2569 = vmatprep.subr.mxu0 0.0
      %2570 = vmatpush1.msra.mxu0 0.0
      %2571 = vmatprep.subr.mxu0 0.0
      %2572 = vmatpush1.msra.mxu0 0.0
      %2573 = vmatprep.subr.mxu0 0.0
      %2574 = vmatpush1.msra.mxu0 0.0
      %2575 = vmatprep.subr.mxu0 0.0
      %2576 = vmatpush1.msra.mxu0 0.0
      %2577 = vmatprep.subr.mxu0 0.0
      %2578 = vmatpush1.msra.mxu0 0.0
      %2579 = vmatprep.subr.mxu0 0.0
      %2580 = vmatpush1.msra.mxu0 0.0
      %2581 = vmatprep.mubr.f32.mxu0 0.0
      %2582 = vmatmul.mubr.f32.gmra.mrb[0].mxu0 %v2438
      %v2583 = vpop.f32.mrb[0].mxu0
      %v2584 = vadd.f32 0.0, %v2583
      %v2585 = vpop.f32.mrb[0].mxu0
      %2586 = vdwg.mxu0
      %v2587 = vadd.f32 %v2424, %v2513
      %v2588 = vadd.f32 %v2425, %v2515
      %v2589 = vadd.f32 %v2426, %v2584
      %s2590 = scalar_lea.vmem %s1, 56
      %v2591 = vld [vmem:[%s2590] sm:$0xf]
      %2592 = vrot.lane.b32.xlu0 %v1790, 108
      %v2593 = vpop.permute.xlu0 %2592
      %2594 = vrot.lane.b32.xlu0 %v1791, 108
      %v2595 = vpop.permute.xlu0 %2594
      %2596 = vrot.lane.b32.xlu0 %v1792, 108
      %v2597 = vpop.permute.xlu0 %2596
      %v2598 = vsel %vm1126, %v2593, %v2595
      %v2599 = vsel %vm1126, %v2595, %v2597
      %v2601 = vsel %vm324, %v2591, 0
      %v2603 = vsel %vm328, %v2598, 0
      %v2605 = vsel %vm328, %v2599, 0
      %v2607 = vsel %vm328, %v2597, 0
      %2609 = vmatprep.subr.mxu0 %v2605
      %2610 = vmatpush1.msra.mxu0 %v2603
      %2611 = vmatprep.subr.mxu0 0.0
      %2612 = vmatpush1.msra.mxu0 0.0
      %2613 = vmatprep.subr.mxu0 0.0
      %2614 = vmatpush1.msra.mxu0 0.0
      %2615 = vmatprep.subr.mxu0 0.0
      %2616 = vmatpush1.msra.mxu0 0.0
      %2617 = vmatprep.subr.mxu0 0.0
      %2618 = vmatpush1.msra.mxu0 0.0
      %2619 = vmatprep.subr.mxu0 0.0
      %2620 = vmatpush1.msra.mxu0 0.0
      %2621 = vmatprep.subr.mxu0 0.0
      %2622 = vmatpush1.msra.mxu0 0.0
      %2623 = vmatprep.subr.mxu0 0.0
      %2624 = vmatpush1.msra.mxu0 0.0
      %2625 = vmatprep.subr.mxu0 0.0
      %2626 = vmatpush1.msra.mxu0 0.0
      %2627 = vmatprep.subr.mxu0 0.0
      %2628 = vmatpush1.msra.mxu0 0.0
      %2629 = vmatprep.subr.mxu0 0.0
      %2630 = vmatpush1.msra.mxu0 0.0
      %2631 = vmatprep.subr.mxu0 0.0
      %2632 = vmatpush1.msra.mxu0 0.0
      %2633 = vmatprep.subr.mxu0 0.0
      %2634 = vmatpush1.msra.mxu0 0.0
      %2635 = vmatprep.subr.mxu0 0.0
      %2636 = vmatpush1.msra.mxu0 0.0
      %2637 = vmatprep.subr.mxu0 0.0
      %2638 = vmatpush1.msra.mxu0 0.0
      %2639 = vmatprep.subr.mxu0 0.0
      %2640 = vmatpush1.msra.mxu0 0.0
      %2641 = vmatprep.subr.mxu0 0.0
      %2642 = vmatpush1.msra.mxu0 0.0
      %2643 = vmatprep.subr.mxu0 0.0
      %2644 = vmatpush1.msra.mxu0 0.0
      %2645 = vmatprep.subr.mxu0 0.0
      %2646 = vmatpush1.msra.mxu0 0.0
      %2647 = vmatprep.subr.mxu0 0.0
      %2648 = vmatpush1.msra.mxu0 0.0
      %2649 = vmatprep.subr.mxu0 0.0
      %2650 = vmatpush1.msra.mxu0 0.0
      %2651 = vmatprep.subr.mxu0 0.0
      %2652 = vmatpush1.msra.mxu0 0.0
      %2653 = vmatprep.subr.mxu0 0.0
      %2654 = vmatpush1.msra.mxu0 0.0
      %2655 = vmatprep.subr.mxu0 0.0
      %2656 = vmatpush1.msra.mxu0 0.0
      %2657 = vmatprep.subr.mxu0 0.0
      %2658 = vmatpush1.msra.mxu0 0.0
      %2659 = vmatprep.subr.mxu0 0.0
      %2660 = vmatpush1.msra.mxu0 0.0
      %2661 = vmatprep.subr.mxu0 0.0
      %2662 = vmatpush1.msra.mxu0 0.0
      %2663 = vmatprep.subr.mxu0 0.0
      %2664 = vmatpush1.msra.mxu0 0.0
      %2665 = vmatprep.subr.mxu0 0.0
      %2666 = vmatpush1.msra.mxu0 0.0
      %2667 = vmatprep.subr.mxu0 0.0
      %2668 = vmatpush1.msra.mxu0 0.0
      %2669 = vmatprep.subr.mxu0 0.0
      %2670 = vmatpush1.msra.mxu0 0.0
      %2671 = vmatprep.subr.mxu0 0.0
      %2672 = vmatpush1.msra.mxu0 0.0
      %2673 = vmatprep.mubr.f32.mxu0 0.0
      %2674 = vmatmul.mubr.f32.gmra.mrb[0].mxu0 %v2601
      %v2675 = vpop.f32.mrb[0].mxu0
      %v2676 = vadd.f32 0.0, %v2675
      %v2677 = vpop.f32.mrb[0].mxu0
      %v2678 = vadd.f32 0.0, %v2677
      %2679 = vdwg.mxu0
      %2680 = vmatprep.subr.mxu0 0.0
      %2681 = vmatpush1.msra.mxu0 %v2607
      %2682 = vmatprep.subr.mxu0 0.0
      %2683 = vmatpush1.msra.mxu0 0.0
      %2684 = vmatprep.subr.mxu0 0.0
      %2685 = vmatpush1.msra.mxu0 0.0
      %2686 = vmatprep.subr.mxu0 0.0
      %2687 = vmatpush1.msra.mxu0 0.0
      %2688 = vmatprep.subr.mxu0 0.0
      %2689 = vmatpush1.msra.mxu0 0.0
      %2690 = vmatprep.subr.mxu0 0.0
      %2691 = vmatpush1.msra.mxu0 0.0
      %2692 = vmatprep.subr.mxu0 0.0
      %2693 = vmatpush1.msra.mxu0 0.0
      %2694 = vmatprep.subr.mxu0 0.0
      %2695 = vmatpush1.msra.mxu0 0.0
      %2696 = vmatprep.subr.mxu0 0.0
      %2697 = vmatpush1.msra.mxu0 0.0
      %2698 = vmatprep.subr.mxu0 0.0
      %2699 = vmatpush1.msra.mxu0 0.0
      %2700 = vmatprep.subr.mxu0 0.0
      %2701 = vmatpush1.msra.mxu0 0.0
      %2702 = vmatprep.subr.mxu0 0.0
      %2703 = vmatpush1.msra.mxu0 0.0
      %2704 = vmatprep.subr.mxu0 0.0
      %2705 = vmatpush1.msra.mxu0 0.0
      %2706 = vmatprep.subr.mxu0 0.0
      %2707 = vmatpush1.msra.mxu0 0.0
      %2708 = vmatprep.subr.mxu0 0.0
      %2709 = vmatpush1.msra.mxu0 0.0
      %2710 = vmatprep.subr.mxu0 0.0
      %2711 = vmatpush1.msra.mxu0 0.0
      %2712 = vmatprep.subr.mxu0 0.0
      %2713 = vmatpush1.msra.mxu0 0.0
      %2714 = vmatprep.subr.mxu0 0.0
      %2715 = vmatpush1.msra.mxu0 0.0
      %2716 = vmatprep.subr.mxu0 0.0
      %2717 = vmatpush1.msra.mxu0 0.0
      %2718 = vmatprep.subr.mxu0 0.0
      %2719 = vmatpush1.msra.mxu0 0.0
      %2720 = vmatprep.subr.mxu0 0.0
      %2721 = vmatpush1.msra.mxu0 0.0
      %2722 = vmatprep.subr.mxu0 0.0
      %2723 = vmatpush1.msra.mxu0 0.0
      %2724 = vmatprep.subr.mxu0 0.0
      %2725 = vmatpush1.msra.mxu0 0.0
      %2726 = vmatprep.subr.mxu0 0.0
      %2727 = vmatpush1.msra.mxu0 0.0
      %2728 = vmatprep.subr.mxu0 0.0
      %2729 = vmatpush1.msra.mxu0 0.0
      %2730 = vmatprep.subr.mxu0 0.0
      %2731 = vmatpush1.msra.mxu0 0.0
      %2732 = vmatprep.subr.mxu0 0.0
      %2733 = vmatpush1.msra.mxu0 0.0
      %2734 = vmatprep.subr.mxu0 0.0
      %2735 = vmatpush1.msra.mxu0 0.0
      %2736 = vmatprep.subr.mxu0 0.0
      %2737 = vmatpush1.msra.mxu0 0.0
      %2738 = vmatprep.subr.mxu0 0.0
      %2739 = vmatpush1.msra.mxu0 0.0
      %2740 = vmatprep.subr.mxu0 0.0
      %2741 = vmatpush1.msra.mxu0 0.0
      %2742 = vmatprep.subr.mxu0 0.0
      %2743 = vmatpush1.msra.mxu0 0.0
      %2744 = vmatprep.mubr.f32.mxu0 0.0
      %2745 = vmatmul.mubr.f32.gmra.mrb[0].mxu0 %v2601
      %v2746 = vpop.f32.mrb[0].mxu0
      %v2747 = vadd.f32 0.0, %v2746
      %v2748 = vpop.f32.mrb[0].mxu0
      %2749 = vdwg.mxu0
      %v2750 = vadd.f32 %v2587, %v2676
      %v2751 = vadd.f32 %v2588, %v2678
      %v2752 = vadd.f32 %v2589, %v2747
      %s2753 = scalar_lea.vmem %s1, 60
      %v2754 = vld [vmem:[%s2753] sm:$0xf]
      %2755 = vrot.lane.b32.xlu0 %v1790, 92
      %v2756 = vpop.permute.xlu0 %2755
      %2757 = vrot.lane.b32.xlu0 %v1791, 92
      %v2758 = vpop.permute.xlu0 %2757
      %2759 = vrot.lane.b32.xlu0 %v1792, 92
      %v2760 = vpop.permute.xlu0 %2759
      %v2761 = vsel %vm1290, %v2756, %v2758
      %v2762 = vsel %vm1290, %v2758, %v2760
      %v2764 = vsel %vm324, %v2754, 0
      %v2766 = vsel %vm328, %v2761, 0
      %v2768 = vsel %vm328, %v2762, 0
      %v2770 = vsel %vm328, %v2760, 0
      %2772 = vmatprep.subr.mxu0 %v2768
      %2773 = vmatpush1.msra.mxu0 %v2766
      %2774 = vmatprep.subr.mxu0 0.0
      %2775 = vmatpush1.msra.mxu0 0.0
      %2776 = vmatprep.subr.mxu0 0.0
      %2777 = vmatpush1.msra.mxu0 0.0
      %2778 = vmatprep.subr.mxu0 0.0
      %2779 = vmatpush1.msra.mxu0 0.0
      %2780 = vmatprep.subr.mxu0 0.0
      %2781 = vmatpush1.msra.mxu0 0.0
      %2782 = vmatprep.subr.mxu0 0.0
      %2783 = vmatpush1.msra.mxu0 0.0
      %2784 = vmatprep.subr.mxu0 0.0
      %2785 = vmatpush1.msra.mxu0 0.0
      %2786 = vmatprep.subr.mxu0 0.0
      %2787 = vmatpush1.msra.mxu0 0.0
      %2788 = vmatprep.subr.mxu0 0.0
      %2789 = vmatpush1.msra.mxu0 0.0
      %2790 = vmatprep.subr.mxu0 0.0
      %2791 = vmatpush1.msra.mxu0 0.0
      %2792 = vmatprep.subr.mxu0 0.0
      %2793 = vmatpush1.msra.mxu0 0.0
      %2794 = vmatprep.subr.mxu0 0.0
      %2795 = vmatpush1.msra.mxu0 0.0
      %2796 = vmatprep.subr.mxu0 0.0
      %2797 = vmatpush1.msra.mxu0 0.0
      %2798 = vmatprep.subr.mxu0 0.0
      %2799 = vmatpush1.msra.mxu0 0.0
      %2800 = vmatprep.subr.mxu0 0.0
      %2801 = vmatpush1.msra.mxu0 0.0
      %2802 = vmatprep.subr.mxu0 0.0
      %2803 = vmatpush1.msra.mxu0 0.0
      %2804 = vmatprep.subr.mxu0 0.0
      %2805 = vmatpush1.msra.mxu0 0.0
      %2806 = vmatprep.subr.mxu0 0.0
      %2807 = vmatpush1.msra.mxu0 0.0
      %2808 = vmatprep.subr.mxu0 0.0
      %2809 = vmatpush1.msra.mxu0 0.0
      %2810 = vmatprep.subr.mxu0 0.0
      %2811 = vmatpush1.msra.mxu0 0.0
      %2812 = vmatprep.subr.mxu0 0.0
      %2813 = vmatpush1.msra.mxu0 0.0
      %2814 = vmatprep.subr.mxu0 0.0
      %2815 = vmatpush1.msra.mxu0 0.0
      %2816 = vmatprep.subr.mxu0 0.0
      %2817 = vmatpush1.msra.mxu0 0.0
      %2818 = vmatprep.subr.mxu0 0.0
      %2819 = vmatpush1.msra.mxu0 0.0
      %2820 = vmatprep.subr.mxu0 0.0
      %2821 = vmatpush1.msra.mxu0 0.0
      %2822 = vmatprep.subr.mxu0 0.0
      %2823 = vmatpush1.msra.mxu0 0.0
      %2824 = vmatprep.subr.mxu0 0.0
      %2825 = vmatpush1.msra.mxu0 0.0
      %2826 = vmatprep.subr.mxu0 0.0
      %2827 = vmatpush1.msra.mxu0 0.0
      %2828 = vmatprep.subr.mxu0 0.0
      %2829 = vmatpush1.msra.mxu0 0.0
      %2830 = vmatprep.subr.mxu0 0.0
      %2831 = vmatpush1.msra.mxu0 0.0
      %2832 = vmatprep.subr.mxu0 0.0
      %2833 = vmatpush1.msra.mxu0 0.0
      %2834 = vmatprep.subr.mxu0 0.0
      %2835 = vmatpush1.msra.mxu0 0.0
      %2836 = vmatprep.mubr.f32.mxu0 0.0
      %2837 = vmatmul.mubr.f32.gmra.mrb[0].mxu0 %v2764
      %v2838 = vpop.f32.mrb[0].mxu0
      %v2839 = vadd.f32 0.0, %v2838
      %v2840 = vpop.f32.mrb[0].mxu0
      %v2841 = vadd.f32 0.0, %v2840
      %2842 = vdwg.mxu0
      %2843 = vmatprep.subr.mxu0 0.0
      %2844 = vmatpush1.msra.mxu0 %v2770
      %2845 = vmatprep.subr.mxu0 0.0
      %2846 = vmatpush1.msra.mxu0 0.0
      %2847 = vmatprep.subr.mxu0 0.0
      %2848 = vmatpush1.msra.mxu0 0.0
      %2849 = vmatprep.subr.mxu0 0.0
      %2850 = vmatpush1.msra.mxu0 0.0
      %2851 = vmatprep.subr.mxu0 0.0
      %2852 = vmatpush1.msra.mxu0 0.0
      %2853 = vmatprep.subr.mxu0 0.0
      %2854 = vmatpush1.msra.mxu0 0.0
      %2855 = vmatprep.subr.mxu0 0.0
      %2856 = vmatpush1.msra.mxu0 0.0
      %2857 = vmatprep.subr.mxu0 0.0
      %2858 = vmatpush1.msra.mxu0 0.0
      %2859 = vmatprep.subr.mxu0 0.0
      %2860 = vmatpush1.msra.mxu0 0.0
      %2861 = vmatprep.subr.mxu0 0.0
      %2862 = vmatpush1.msra.mxu0 0.0
      %2863 = vmatprep.subr.mxu0 0.0
      %2864 = vmatpush1.msra.mxu0 0.0
      %2865 = vmatprep.subr.mxu0 0.0
      %2866 = vmatpush1.msra.mxu0 0.0
      %2867 = vmatprep.subr.mxu0 0.0
      %2868 = vmatpush1.msra.mxu0 0.0
      %2869 = vmatprep.subr.mxu0 0.0
      %2870 = vmatpush1.msra.mxu0 0.0
      %2871 = vmatprep.subr.mxu0 0.0
      %2872 = vmatpush1.msra.mxu0 0.0
      %2873 = vmatprep.subr.mxu0 0.0
      %2874 = vmatpush1.msra.mxu0 0.0
      %2875 = vmatprep.subr.mxu0 0.0
      %2876 = vmatpush1.msra.mxu0 0.0
      %2877 = vmatprep.subr.mxu0 0.0
      %2878 = vmatpush1.msra.mxu0 0.0
      %2879 = vmatprep.subr.mxu0 0.0
      %2880 = vmatpush1.msra.mxu0 0.0
      %2881 = vmatprep.subr.mxu0 0.0
      %2882 = vmatpush1.msra.mxu0 0.0
      %2883 = vmatprep.subr.mxu0 0.0
      %2884 = vmatpush1.msra.mxu0 0.0
      %2885 = vmatprep.subr.mxu0 0.0
      %2886 = vmatpush1.msra.mxu0 0.0
      %2887 = vmatprep.subr.mxu0 0.0
      %2888 = vmatpush1.msra.mxu0 0.0
      %2889 = vmatprep.subr.mxu0 0.0
      %2890 = vmatpush1.msra.mxu0 0.0
      %2891 = vmatprep.subr.mxu0 0.0
      %2892 = vmatpush1.msra.mxu0 0.0
      %2893 = vmatprep.subr.mxu0 0.0
      %2894 = vmatpush1.msra.mxu0 0.0
      %2895 = vmatprep.subr.mxu0 0.0
      %2896 = vmatpush1.msra.mxu0 0.0
      %2897 = vmatprep.subr.mxu0 0.0
      %2898 = vmatpush1.msra.mxu0 0.0
      %2899 = vmatprep.subr.mxu0 0.0
      %2900 = vmatpush1.msra.mxu0 0.0
      %2901 = vmatprep.subr.mxu0 0.0
      %2902 = vmatpush1.msra.mxu0 0.0
      %2903 = vmatprep.subr.mxu0 0.0
      %2904 = vmatpush1.msra.mxu0 0.0
      %2905 = vmatprep.subr.mxu0 0.0
      %2906 = vmatpush1.msra.mxu0 0.0
      %2907 = vmatprep.mubr.f32.mxu0 0.0
      %2908 = vmatmul.mubr.f32.gmra.mrb[0].mxu0 %v2764
      %v2909 = vpop.f32.mrb[0].mxu0
      %v2910 = vadd.f32 0.0, %v2909
      %v2911 = vpop.f32.mrb[0].mxu0
      %2912 = vdwg.mxu0
      %v2913 = vadd.f32 %v2750, %v2839
      %v2914 = vadd.f32 %v2751, %v2841
      %v2915 = vadd.f32 %v2752, %v2910
      %s2916 = scalar_lea.vmem %s1, 64
      %v2917 = vld [vmem:[%s2916] sm:$0xf]
      %2918 = vrot.lane.b32.xlu0 %v1790, 91
      %v2919 = vpop.permute.xlu0 %2918
      %2920 = vrot.lane.b32.xlu0 %v1791, 91
      %v2921 = vpop.permute.xlu0 %2920
      %2922 = vrot.lane.b32.xlu0 %v1792, 91
      %v2923 = vpop.permute.xlu0 %2922
      %v2924 = vsel %vm1454, %v2919, %v2921
      %v2925 = vsel %vm1454, %v2921, %v2923
      %v2927 = vsel %vm324, %v2917, 0
      %v2929 = vsel %vm328, %v2924, 0
      %v2931 = vsel %vm328, %v2925, 0
      %v2933 = vsel %vm328, %v2923, 0
      %2935 = vmatprep.subr.mxu0 %v2931
      %2936 = vmatpush1.msra.mxu0 %v2929
      %2937 = vmatprep.subr.mxu0 0.0
      %2938 = vmatpush1.msra.mxu0 0.0
      %2939 = vmatprep.subr.mxu0 0.0
      %2940 = vmatpush1.msra.mxu0 0.0
      %2941 = vmatprep.subr.mxu0 0.0
      %2942 = vmatpush1.msra.mxu0 0.0
      %2943 = vmatprep.subr.mxu0 0.0
      %2944 = vmatpush1.msra.mxu0 0.0
      %2945 = vmatprep.subr.mxu0 0.0
      %2946 = vmatpush1.msra.mxu0 0.0
      %2947 = vmatprep.subr.mxu0 0.0
      %2948 = vmatpush1.msra.mxu0 0.0
      %2949 = vmatprep.subr.mxu0 0.0
      %2950 = vmatpush1.msra.mxu0 0.0
      %2951 = vmatprep.subr.mxu0 0.0
      %2952 = vmatpush1.msra.mxu0 0.0
      %2953 = vmatprep.subr.mxu0 0.0
      %2954 = vmatpush1.msra.mxu0 0.0
      %2955 = vmatprep.subr.mxu0 0.0
      %2956 = vmatpush1.msra.mxu0 0.0
      %2957 = vmatprep.subr.mxu0 0.0
      %2958 = vmatpush1.msra.mxu0 0.0
      %2959 = vmatprep.subr.mxu0 0.0
      %2960 = vmatpush1.msra.mxu0 0.0
      %2961 = vmatprep.subr.mxu0 0.0
      %2962 = vmatpush1.msra.mxu0 0.0
      %2963 = vmatprep.subr.mxu0 0.0
      %2964 = vmatpush1.msra.mxu0 0.0
      %2965 = vmatprep.subr.mxu0 0.0
      %2966 = vmatpush1.msra.mxu0 0.0
      %2967 = vmatprep.subr.mxu0 0.0
      %2968 = vmatpush1.msra.mxu0 0.0
      %2969 = vmatprep.subr.mxu0 0.0
      %2970 = vmatpush1.msra.mxu0 0.0
      %2971 = vmatprep.subr.mxu0 0.0
      %2972 = vmatpush1.msra.mxu0 0.0
      %2973 = vmatprep.subr.mxu0 0.0
      %2974 = vmatpush1.msra.mxu0 0.0
      %2975 = vmatprep.subr.mxu0 0.0
      %2976 = vmatpush1.msra.mxu0 0.0
      %2977 = vmatprep.subr.mxu0 0.0
      %2978 = vmatpush1.msra.mxu0 0.0
      %2979 = vmatprep.subr.mxu0 0.0
      %2980 = vmatpush1.msra.mxu0 0.0
      %2981 = vmatprep.subr.mxu0 0.0
      %2982 = vmatpush1.msra.mxu0 0.0
      %2983 = vmatprep.subr.mxu0 0.0
      %2984 = vmatpush1.msra.mxu0 0.0
      %2985 = vmatprep.subr.mxu0 0.0
      %2986 = vmatpush1.msra.mxu0 0.0
      %2987 = vmatprep.subr.mxu0 0.0
      %2988 = vmatpush1.msra.mxu0 0.0
      %2989 = vmatprep.subr.mxu0 0.0
      %2990 = vmatpush1.msra.mxu0 0.0
      %2991 = vmatprep.subr.mxu0 0.0
      %2992 = vmatpush1.msra.mxu0 0.0
      %2993 = vmatprep.subr.mxu0 0.0
      %2994 = vmatpush1.msra.mxu0 0.0
      %2995 = vmatprep.subr.mxu0 0.0
      %2996 = vmatpush1.msra.mxu0 0.0
      %2997 = vmatprep.subr.mxu0 0.0
      %2998 = vmatpush1.msra.mxu0 0.0
      %2999 = vmatprep.mubr.f32.mxu0 0.0
      %3000 = vmatmul.mubr.f32.gmra.mrb[0].mxu0 %v2927
      %v3001 = vpop.f32.mrb[0].mxu0
      %v3002 = vadd.f32 0.0, %v3001
      %v3003 = vpop.f32.mrb[0].mxu0
      %v3004 = vadd.f32 0.0, %v3003
      %3005 = vdwg.mxu0
      %3006 = vmatprep.subr.mxu0 0.0
      %3007 = vmatpush1.msra.mxu0 %v2933
      %3008 = vmatprep.subr.mxu0 0.0
      %3009 = vmatpush1.msra.mxu0 0.0
      %3010 = vmatprep.subr.mxu0 0.0
      %3011 = vmatpush1.msra.mxu0 0.0
      %3012 = vmatprep.subr.mxu0 0.0
      %3013 = vmatpush1.msra.mxu0 0.0
      %3014 = vmatprep.subr.mxu0 0.0
      %3015 = vmatpush1.msra.mxu0 0.0
      %3016 = vmatprep.subr.mxu0 0.0
      %3017 = vmatpush1.msra.mxu0 0.0
      %3018 = vmatprep.subr.mxu0 0.0
      %3019 = vmatpush1.msra.mxu0 0.0
      %3020 = vmatprep.subr.mxu0 0.0
      %3021 = vmatpush1.msra.mxu0 0.0
      %3022 = vmatprep.subr.mxu0 0.0
      %3023 = vmatpush1.msra.mxu0 0.0
      %3024 = vmatprep.subr.mxu0 0.0
      %3025 = vmatpush1.msra.mxu0 0.0
      %3026 = vmatprep.subr.mxu0 0.0
      %3027 = vmatpush1.msra.mxu0 0.0
      %3028 = vmatprep.subr.mxu0 0.0
      %3029 = vmatpush1.msra.mxu0 0.0
      %3030 = vmatprep.subr.mxu0 0.0
      %3031 = vmatpush1.msra.mxu0 0.0
      %3032 = vmatprep.subr.mxu0 0.0
      %3033 = vmatpush1.msra.mxu0 0.0
      %3034 = vmatprep.subr.mxu0 0.0
      %3035 = vmatpush1.msra.mxu0 0.0
      %3036 = vmatprep.subr.mxu0 0.0
      %3037 = vmatpush1.msra.mxu0 0.0
      %3038 = vmatprep.subr.mxu0 0.0
      %3039 = vmatpush1.msra.mxu0 0.0
      %3040 = vmatprep.subr.mxu0 0.0
      %3041 = vmatpush1.msra.mxu0 0.0
      %3042 = vmatprep.subr.mxu0 0.0
      %3043 = vmatpush1.msra.mxu0 0.0
      %3044 = vmatprep.subr.mxu0 0.0
      %3045 = vmatpush1.msra.mxu0 0.0
      %3046 = vmatprep.subr.mxu0 0.0
      %3047 = vmatpush1.msra.mxu0 0.0
      %3048 = vmatprep.subr.mxu0 0.0
      %3049 = vmatpush1.msra.mxu0 0.0
      %3050 = vmatprep.subr.mxu0 0.0
      %3051 = vmatpush1.msra.mxu0 0.0
      %3052 = vmatprep.subr.mxu0 0.0
      %3053 = vmatpush1.msra.mxu0 0.0
      %3054 = vmatprep.subr.mxu0 0.0
      %3055 = vmatpush1.msra.mxu0 0.0
      %3056 = vmatprep.subr.mxu0 0.0
      %3057 = vmatpush1.msra.mxu0 0.0
      %3058 = vmatprep.subr.mxu0 0.0
      %3059 = vmatpush1.msra.mxu0 0.0
      %3060 = vmatprep.subr.mxu0 0.0
      %3061 = vmatpush1.msra.mxu0 0.0
      %3062 = vmatprep.subr.mxu0 0.0
      %3063 = vmatpush1.msra.mxu0 0.0
      %3064 = vmatprep.subr.mxu0 0.0
      %3065 = vmatpush1.msra.mxu0 0.0
      %3066 = vmatprep.subr.mxu0 0.0
      %3067 = vmatpush1.msra.mxu0 0.0
      %3068 = vmatprep.subr.mxu0 0.0
      %3069 = vmatpush1.msra.mxu0 0.0
      %3070 = vmatprep.mubr.f32.mxu0 0.0
      %3071 = vmatmul.mubr.f32.gmra.mrb[0].mxu0 %v2927
      %v3072 = vpop.f32.mrb[0].mxu0
      %v3073 = vadd.f32 0.0, %v3072
      %v3074 = vpop.f32.mrb[0].mxu0
      %3075 = vdwg.mxu0
      %v3076 = vadd.f32 %v2913, %v3002
      %v3077 = vadd.f32 %v2914, %v3004
      %v3078 = vadd.f32 %v2915, %v3073
      %s3079 = scalar_lea.vmem %s1, 68
      %v3080 = vld [vmem:[%s3079] sm:$0xf]
      %3081 = vrot.lane.b32.xlu0 %v1790, 90
      %v3082 = vpop.permute.xlu0 %3081
      %3083 = vrot.lane.b32.xlu0 %v1791, 90
      %v3084 = vpop.permute.xlu0 %3083
      %3085 = vrot.lane.b32.xlu0 %v1792, 90
      %v3086 = vpop.permute.xlu0 %3085
      %v3087 = vsel %vm1618, %v3082, %v3084
      %v3088 = vsel %vm1618, %v3084, %v3086
      %v3090 = vsel %vm324, %v3080, 0
      %v3092 = vsel %vm328, %v3087, 0
      %v3094 = vsel %vm328, %v3088, 0
      %v3096 = vsel %vm328, %v3086, 0
      %3098 = vmatprep.subr.mxu0 %v3094
      %3099 = vmatpush1.msra.mxu0 %v3092
      %3100 = vmatprep.subr.mxu0 0.0
      %3101 = vmatpush1.msra.mxu0 0.0
      %3102 = vmatprep.subr.mxu0 0.0
      %3103 = vmatpush1.msra.mxu0 0.0
      %3104 = vmatprep.subr.mxu0 0.0
      %3105 = vmatpush1.msra.mxu0 0.0
      %3106 = vmatprep.subr.mxu0 0.0
      %3107 = vmatpush1.msra.mxu0 0.0
      %3108 = vmatprep.subr.mxu0 0.0
      %3109 = vmatpush1.msra.mxu0 0.0
      %3110 = vmatprep.subr.mxu0 0.0
      %3111 = vmatpush1.msra.mxu0 0.0
      %3112 = vmatprep.subr.mxu0 0.0
      %3113 = vmatpush1.msra.mxu0 0.0
      %3114 = vmatprep.subr.mxu0 0.0
      %3115 = vmatpush1.msra.mxu0 0.0
      %3116 = vmatprep.subr.mxu0 0.0
      %3117 = vmatpush1.msra.mxu0 0.0
      %3118 = vmatprep.subr.mxu0 0.0
      %3119 = vmatpush1.msra.mxu0 0.0
      %3120 = vmatprep.subr.mxu0 0.0
      %3121 = vmatpush1.msra.mxu0 0.0
      %3122 = vmatprep.subr.mxu0 0.0
      %3123 = vmatpush1.msra.mxu0 0.0
      %3124 = vmatprep.subr.mxu0 0.0
      %3125 = vmatpush1.msra.mxu0 0.0
      %3126 = vmatprep.subr.mxu0 0.0
      %3127 = vmatpush1.msra.mxu0 0.0
      %3128 = vmatprep.subr.mxu0 0.0
      %3129 = vmatpush1.msra.mxu0 0.0
      %3130 = vmatprep.subr.mxu0 0.0
      %3131 = vmatpush1.msra.mxu0 0.0
      %3132 = vmatprep.subr.mxu0 0.0
      %3133 = vmatpush1.msra.mxu0 0.0
      %3134 = vmatprep.subr.mxu0 0.0
      %3135 = vmatpush1.msra.mxu0 0.0
      %3136 = vmatprep.subr.mxu0 0.0
      %3137 = vmatpush1.msra.mxu0 0.0
      %3138 = vmatprep.subr.mxu0 0.0
      %3139 = vmatpush1.msra.mxu0 0.0
      %3140 = vmatprep.subr.mxu0 0.0
      %3141 = vmatpush1.msra.mxu0 0.0
      %3142 = vmatprep.subr.mxu0 0.0
      %3143 = vmatpush1.msra.mxu0 0.0
      %3144 = vmatprep.subr.mxu0 0.0
      %3145 = vmatpush1.msra.mxu0 0.0
      %3146 = vmatprep.subr.mxu0 0.0
      %3147 = vmatpush1.msra.mxu0 0.0
      %3148 = vmatprep.subr.mxu0 0.0
      %3149 = vmatpush1.msra.mxu0 0.0
      %3150 = vmatprep.subr.mxu0 0.0
      %3151 = vmatpush1.msra.mxu0 0.0
      %3152 = vmatprep.subr.mxu0 0.0
      %3153 = vmatpush1.msra.mxu0 0.0
      %3154 = vmatprep.subr.mxu0 0.0
      %3155 = vmatpush1.msra.mxu0 0.0
      %3156 = vmatprep.subr.mxu0 0.0
      %3157 = vmatpush1.msra.mxu0 0.0
      %3158 = vmatprep.subr.mxu0 0.0
      %3159 = vmatpush1.msra.mxu0 0.0
      %3160 = vmatprep.subr.mxu0 0.0
      %3161 = vmatpush1.msra.mxu0 0.0
      %3162 = vmatprep.mubr.f32.mxu0 0.0
      %3163 = vmatmul.mubr.f32.gmra.mrb[0].mxu0 %v3090
      %v3164 = vpop.f32.mrb[0].mxu0
      %v3165 = vadd.f32 0.0, %v3164
      %v3166 = vpop.f32.mrb[0].mxu0
      %v3167 = vadd.f32 0.0, %v3166
      %3168 = vdwg.mxu0
      %3169 = vmatprep.subr.mxu0 0.0
      %3170 = vmatpush1.msra.mxu0 %v3096
      %3171 = vmatprep.subr.mxu0 0.0
      %3172 = vmatpush1.msra.mxu0 0.0
      %3173 = vmatprep.subr.mxu0 0.0
      %3174 = vmatpush1.msra.mxu0 0.0
      %3175 = vmatprep.subr.mxu0 0.0
      %3176 = vmatpush1.msra.mxu0 0.0
      %3177 = vmatprep.subr.mxu0 0.0
      %3178 = vmatpush1.msra.mxu0 0.0
      %3179 = vmatprep.subr.mxu0 0.0
      %3180 = vmatpush1.msra.mxu0 0.0
      %3181 = vmatprep.subr.mxu0 0.0
      %3182 = vmatpush1.msra.mxu0 0.0
      %3183 = vmatprep.subr.mxu0 0.0
      %3184 = vmatpush1.msra.mxu0 0.0
      %3185 = vmatprep.subr.mxu0 0.0
      %3186 = vmatpush1.msra.mxu0 0.0
      %3187 = vmatprep.subr.mxu0 0.0
      %3188 = vmatpush1.msra.mxu0 0.0
      %3189 = vmatprep.subr.mxu0 0.0
      %3190 = vmatpush1.msra.mxu0 0.0
      %3191 = vmatprep.subr.mxu0 0.0
      %3192 = vmatpush1.msra.mxu0 0.0
      %3193 = vmatprep.subr.mxu0 0.0
      %3194 = vmatpush1.msra.mxu0 0.0
      %3195 = vmatprep.subr.mxu0 0.0
      %3196 = vmatpush1.msra.mxu0 0.0
      %3197 = vmatprep.subr.mxu0 0.0
      %3198 = vmatpush1.msra.mxu0 0.0
      %3199 = vmatprep.subr.mxu0 0.0
      %3200 = vmatpush1.msra.mxu0 0.0
      %3201 = vmatprep.subr.mxu0 0.0
      %3202 = vmatpush1.msra.mxu0 0.0
      %3203 = vmatprep.subr.mxu0 0.0
      %3204 = vmatpush1.msra.mxu0 0.0
      %3205 = vmatprep.subr.mxu0 0.0
      %3206 = vmatpush1.msra.mxu0 0.0
      %3207 = vmatprep.subr.mxu0 0.0
      %3208 = vmatpush1.msra.mxu0 0.0
      %3209 = vmatprep.subr.mxu0 0.0
      %3210 = vmatpush1.msra.mxu0 0.0
      %3211 = vmatprep.subr.mxu0 0.0
      %3212 = vmatpush1.msra.mxu0 0.0
      %3213 = vmatprep.subr.mxu0 0.0
      %3214 = vmatpush1.msra.mxu0 0.0
      %3215 = vmatprep.subr.mxu0 0.0
      %3216 = vmatpush1.msra.mxu0 0.0
      %3217 = vmatprep.subr.mxu0 0.0
      %3218 = vmatpush1.msra.mxu0 0.0
      %3219 = vmatprep.subr.mxu0 0.0
      %3220 = vmatpush1.msra.mxu0 0.0
      %3221 = vmatprep.subr.mxu0 0.0
      %3222 = vmatpush1.msra.mxu0 0.0
      %3223 = vmatprep.subr.mxu0 0.0
      %3224 = vmatpush1.msra.mxu0 0.0
      %3225 = vmatprep.subr.mxu0 0.0
      %3226 = vmatpush1.msra.mxu0 0.0
      %3227 = vmatprep.subr.mxu0 0.0
      %3228 = vmatpush1.msra.mxu0 0.0
      %3229 = vmatprep.subr.mxu0 0.0
      %3230 = vmatpush1.msra.mxu0 0.0
      %3231 = vmatprep.subr.mxu0 0.0
      %3232 = vmatpush1.msra.mxu0 0.0
      %3233 = vmatprep.mubr.f32.mxu0 0.0
      %3234 = vmatmul.mubr.f32.gmra.mrb[0].mxu0 %v3090
      %v3235 = vpop.f32.mrb[0].mxu0
      %v3236 = vadd.f32 0.0, %v3235
      %v3237 = vpop.f32.mrb[0].mxu0
      %3238 = vdwg.mxu0
      %v3239 = vadd.f32 %v3076, %v3165
      %v3240 = vadd.f32 %v3077, %v3167
      %v3241 = vadd.f32 %v3078, %v3236
      %s3242 = scalar_lea.vmem %s2, 4
      %v3243 = vld [vmem:[%s3242] sm:$0xf]
      %3245 = vset.pattern.permute.xlu0 0
      %3246 = vperm.xlu0 %3245, %v3243
      %v3247 = vpop.permute.xlu0 %3246
      %v3249 = vadd.f32 %v3239, %v3247
      %v3250 = vadd.f32 %v3240, %v3247
      %v3251 = vadd.f32 %v3241, %v3247
      %v3252 = vmax.f32 %v3249, 0.0
      %v3253 = vmax.f32 %v3250, 0.0
      %v3254 = vmax.f32 %v3251, 0.0
      %v3255 = vadd.f32 %v1783, %v3252
      %v3256 = vadd.f32 %v1784, %v3253
      %v3257 = vadd.f32 %v1785, %v3254
      %v3259 = vlaneseq
      %v3260 = vshrl.u32 %v3259, 7
      %v3261 = vsub.s32 0, %v3260
      %v3262 = vrot.slane %v308, %v3261
      %v3263 = vlaneseq
      %v3264 = vshrl.u32 %v3263, 7
      %v3265 = vsub.s32 1, %v3264
      %v3266 = vrot.slane %v308, %v3265
      %v3267 = vlaneseq
      %v3268 = vshrl.u32 %v3267, 7
      %v3269 = vsub.s32 2, %v3268
      %v3270 = vrot.slane %v308, %v3269
      %v3274 = vmul.f32 %v3255, %v3262
      %v3275 = vmul.f32 %v3256, %v3266
      %v3276 = vmul.f32 %v3257, %v3270
      %vm3277 = vcmask 1043456
      %v3278 = vsel %vm3277, %v3274, 0.0
      %v3279 = vsel %vm3277, %v3275, 0.0
      %v3280 = vadd.f32 %v3278, %v3279
      %vm3281 = vcmask 257024
      %v3282 = vsel %vm3281, %v3276, 0.0
      %v3283 = vadd.f32 %v3280, %v3282
      %3284 = vadd.xlane.f32.xlu0 %v3283
      %v3285 = vpop.xlane.xlu0 %3284
      %v3286 = vmul.f32 %v3285, 0.00390625
      %v3287 = vld [vmem:[%s3] sm:$0xff]
      %v3288 = vld [vmem:[%s3 + $0x8] sm:$0xff]
      %v3289 = vld [vmem:[%s3 + $0x10] sm:$0xff]
      %v3290 = vld [vmem:[%s3 + $0x18] sm:$0xff]
      %v3291 = vld [vmem:[%s4] sm:$0xff]
      %v3292 = vld [vmem:[%s4 + $0x8] sm:$0xff]
      %v3293 = vld [vmem:[%s4 + $0x10] sm:$0xff]
      %v3294 = vld [vmem:[%s4 + $0x18] sm:$0xff]
      %vm3295 = vcmask 31744
      %v3297 = vsel %vm3295, %v3287, 0
      %v3300 = vsel %vm3295, %v3288, 0
      %v3303 = vsel %vm3295, %v3289, 0
      %v3306 = vsel %vm3295, %v3290, 0
      %v3309 = vsel %vm3277, %v3286, 0
      %3311 = vmatprep.subr.mxu0 0.0
      %3312 = vmatpush1.msra.mxu0 %v3309
      %3313 = vmatprep.subr.mxu0 0.0
      %3314 = vmatpush1.msra.mxu0 0.0
      %3315 = vmatprep.subr.mxu0 0.0
      %3316 = vmatpush1.msra.mxu0 0.0
      %3317 = vmatprep.subr.mxu0 0.0
      %3318 = vmatpush1.msra.mxu0 0.0
      %3319 = vmatprep.subr.mxu0 0.0
      %3320 = vmatpush1.msra.mxu0 0.0
      %3321 = vmatprep.subr.mxu0 0.0
      %3322 = vmatpush1.msra.mxu0 0.0
      %3323 = vmatprep.subr.mxu0 0.0
      %3324 = vmatpush1.msra.mxu0 0.0
      %3325 = vmatprep.subr.mxu0 0.0
      %3326 = vmatpush1.msra.mxu0 0.0
      %3327 = vmatprep.subr.mxu0 0.0
      %3328 = vmatpush1.msra.mxu0 0.0
      %3329 = vmatprep.subr.mxu0 0.0
      %3330 = vmatpush1.msra.mxu0 0.0
      %3331 = vmatprep.subr.mxu0 0.0
      %3332 = vmatpush1.msra.mxu0 0.0
      %3333 = vmatprep.subr.mxu0 0.0
      %3334 = vmatpush1.msra.mxu0 0.0
      %3335 = vmatprep.subr.mxu0 0.0
      %3336 = vmatpush1.msra.mxu0 0.0
      %3337 = vmatprep.subr.mxu0 0.0
      %3338 = vmatpush1.msra.mxu0 0.0
      %3339 = vmatprep.subr.mxu0 0.0
      %3340 = vmatpush1.msra.mxu0 0.0
      %3341 = vmatprep.subr.mxu0 0.0
      %3342 = vmatpush1.msra.mxu0 0.0
      %3343 = vmatprep.subr.mxu0 0.0
      %3344 = vmatpush1.msra.mxu0 0.0
      %3345 = vmatprep.subr.mxu0 0.0
      %3346 = vmatpush1.msra.mxu0 0.0
      %3347 = vmatprep.subr.mxu0 0.0
      %3348 = vmatpush1.msra.mxu0 0.0
      %3349 = vmatprep.subr.mxu0 0.0
      %3350 = vmatpush1.msra.mxu0 0.0
      %3351 = vmatprep.subr.mxu0 0.0
      %3352 = vmatpush1.msra.mxu0 0.0
      %3353 = vmatprep.subr.mxu0 0.0
      %3354 = vmatpush1.msra.mxu0 0.0
      %3355 = vmatprep.subr.mxu0 0.0
      %3356 = vmatpush1.msra.mxu0 0.0
      %3357 = vmatprep.subr.mxu0 0.0
      %3358 = vmatpush1.msra.mxu0 0.0
      %3359 = vmatprep.subr.mxu0 0.0
      %3360 = vmatpush1.msra.mxu0 0.0
      %3361 = vmatprep.subr.mxu0 0.0
      %3362 = vmatpush1.msra.mxu0 0.0
      %3363 = vmatprep.subr.mxu0 0.0
      %3364 = vmatpush1.msra.mxu0 0.0
      %3365 = vmatprep.subr.mxu0 0.0
      %3366 = vmatpush1.msra.mxu0 0.0
      %3367 = vmatprep.subr.mxu0 0.0
      %3368 = vmatpush1.msra.mxu0 0.0
      %3369 = vmatprep.subr.mxu0 0.0
      %3370 = vmatpush1.msra.mxu0 0.0
      %3371 = vmatprep.subr.mxu0 0.0
      %3372 = vmatpush1.msra.mxu0 0.0
      %3373 = vmatprep.subr.mxu0 0.0
      %3374 = vmatpush1.msra.mxu0 0.0
      %3375 = vmatprep.mubr.f32.mxu0 0.0
      %3376 = vmatmul.mubr.f32.gmra.mrb[0].mxu0 %v3297
      %v3377 = vpop.f32.mrb[0].mxu0
      %v3378 = vadd.f32 %v3291, %v3377
      %v3379 = vpop.f32.mrb[0].mxu0
      %3380 = vmatprep.mubr.f32.mxu0 0.0
      %3381 = vmatmul.mubr.f32.gmra.mrb[0].mxu0 %v3300
      %v3382 = vpop.f32.mrb[0].mxu0
      %v3383 = vadd.f32 %v3292, %v3382
      %v3384 = vpop.f32.mrb[0].mxu0
      %3385 = vmatprep.mubr.f32.mxu0 0.0
      %3386 = vmatmul.mubr.f32.gmra.mrb[0].mxu0 %v3303
      %v3387 = vpop.f32.mrb[0].mxu0
      %v3388 = vadd.f32 %v3293, %v3387
      %v3389 = vpop.f32.mrb[0].mxu0
      %3390 = vmatprep.mubr.f32.mxu0 0.0
      %3391 = vmatmul.mubr.f32.gmra.mrb[0].mxu0 %v3306
      %v3392 = vpop.f32.mrb[0].mxu0
      %v3393 = vadd.f32 %v3294, %v3392
      %v3394 = vpop.f32.mrb[0].mxu0
      %3395 = vdwg.mxu0
      %v3396 = vmax.f32 %v3378, 0.0
      %v3397 = vmax.f32 %v3383, 0.0
      %v3398 = vmax.f32 %v3388, 0.0
      %v3399 = vmax.f32 %v3393, 0.0
      %v3400 = vld [vmem:[%s5] sm:$0xff]
      %v3401 = vld [vmem:[%s6] sm:$0xff]
      %vm3402 = vcmask 261120
      %v3404 = vsel %vm3402, %v3400, 0
      %3406 = vmatprep.subr.mxu0 0.0
      %3407 = vmatpush1.msra.mxu0 %v3396
      %3408 = vmatprep.subr.mxu0 0.0
      %3409 = vmatpush1.msra.mxu0 %v3397
      %3410 = vmatprep.subr.mxu0 0.0
      %3411 = vmatpush1.msra.mxu0 %v3398
      %3412 = vmatprep.subr.mxu0 0.0
      %3413 = vmatpush1.msra.mxu0 %v3399
      %3414 = vmatprep.subr.mxu0 0.0
      %3415 = vmatpush1.msra.mxu0 0.0
      %3416 = vmatprep.subr.mxu0 0.0
      %3417 = vmatpush1.msra.mxu0 0.0
      %3418 = vmatprep.subr.mxu0 0.0
      %3419 = vmatpush1.msra.mxu0 0.0
      %3420 = vmatprep.subr.mxu0 0.0
      %3421 = vmatpush1.msra.mxu0 0.0
      %3422 = vmatprep.subr.mxu0 0.0
      %3423 = vmatpush1.msra.mxu0 0.0
      %3424 = vmatprep.subr.mxu0 0.0
      %3425 = vmatpush1.msra.mxu0 0.0
      %3426 = vmatprep.subr.mxu0 0.0
      %3427 = vmatpush1.msra.mxu0 0.0
      %3428 = vmatprep.subr.mxu0 0.0
      %3429 = vmatpush1.msra.mxu0 0.0
      %3430 = vmatprep.subr.mxu0 0.0
      %3431 = vmatpush1.msra.mxu0 0.0
      %3432 = vmatprep.subr.mxu0 0.0
      %3433 = vmatpush1.msra.mxu0 0.0
      %3434 = vmatprep.subr.mxu0 0.0
      %3435 = vmatpush1.msra.mxu0 0.0
      %3436 = vmatprep.subr.mxu0 0.0
      %3437 = vmatpush1.msra.mxu0 0.0
      %3438 = vmatprep.subr.mxu0 0.0
      %3439 = vmatpush1.msra.mxu0 0.0
      %3440 = vmatprep.subr.mxu0 0.0
      %3441 = vmatpush1.msra.mxu0 0.0
      %3442 = vmatprep.subr.mxu0 0.0
      %3443 = vmatpush1.msra.mxu0 0.0
      %3444 = vmatprep.subr.mxu0 0.0
      %3445 = vmatpush1.msra.mxu0 0.0
      %3446 = vmatprep.subr.mxu0 0.0
      %3447 = vmatpush1.msra.mxu0 0.0
      %3448 = vmatprep.subr.mxu0 0.0
      %3449 = vmatpush1.msra.mxu0 0.0
      %3450 = vmatprep.subr.mxu0 0.0
      %3451 = vmatpush1.msra.mxu0 0.0
      %3452 = vmatprep.subr.mxu0 0.0
      %3453 = vmatpush1.msra.mxu0 0.0
      %3454 = vmatprep.subr.mxu0 0.0
      %3455 = vmatpush1.msra.mxu0 0.0
      %3456 = vmatprep.subr.mxu0 0.0
      %3457 = vmatpush1.msra.mxu0 0.0
      %3458 = vmatprep.subr.mxu0 0.0
      %3459 = vmatpush1.msra.mxu0 0.0
      %3460 = vmatprep.subr.mxu0 0.0
      %3461 = vmatpush1.msra.mxu0 0.0
      %3462 = vmatprep.subr.mxu0 0.0
      %3463 = vmatpush1.msra.mxu0 0.0
      %3464 = vmatprep.subr.mxu0 0.0
      %3465 = vmatpush1.msra.mxu0 0.0
      %3466 = vmatprep.subr.mxu0 0.0
      %3467 = vmatpush1.msra.mxu0 0.0
      %3468 = vmatprep.subr.mxu0 0.0
      %3469 = vmatpush1.msra.mxu0 0.0
      %3470 = vmatprep.mubr.f32.mxu0 0.0
      %3471 = vmatmul.mubr.f32.gmra.mrb[0].mxu0 %v3404
      %v3472 = vpop.f32.mrb[0].mxu0
      %v3473 = vadd.f32 %v3401, %v3472
      %v3474 = vpop.f32.mrb[0].mxu0
      %3475 = vdwg.mxu0
      %v3477 = vrot.slane %v3473, 4
      %v3479 = vmax.f32 %v3473, %v3477
      %v3480 = vsub.f32 %v3473, %v3479
      %v3481 = vmul.f32 %v3480, 1.442695
      %v3482 = vpow.pop %v3481
      %v3484 = vrot.slane %v3479, 4
      %v3486 = vsub.f32 %v3473, %v3484
      %v3487 = vmul.f32 %v3486, 1.442695
      %v3488 = vpow.pop %v3487
      %v3490 = vrot.slane %v3488, 4
      %v3492 = vadd.f32 %v3482, %v3490
      %v3493 = vrcp.pop %v3492
      %v3494 = vmul.f32 %v3482, %v3493
      %v3496 = vrot.slane %v3492, 4
      %v3498 = vrcp.pop %v3496
      %v3499 = vmul.f32 %v3488, %v3498
      %3501 = vset.pattern.permute.xlu0 0
      %3502 = vperm.xlu0 %3501, %v3494
      %v3503 = vpop.permute.xlu0 %3502
      %v3505 = vmul.f32 %v3503, %v1783
      %v3506 = vmul.f32 %v3503, %v1784
      %v3507 = vmul.f32 %v3503, %v1785
      %3509 = vset.pattern.permute.xlu0 0
      %3510 = vperm.xlu0 %3509, %v3499
      %v3511 = vpop.permute.xlu0 %3510
      %v3516 = vrot.slane %v3252, 4
      %v3517 = vrot.slane %v3253, 4
      %v3518 = vrot.slane %v3254, 4
      %v3522 = vmul.f32 %v3511, %v3516
      %v3523 = vmul.f32 %v3511, %v3517
      %v3524 = vmul.f32 %v3511, %v3518
      %v3528 = vrot.slane %v3522, 4
      %v3529 = vrot.slane %v3523, 4
      %v3530 = vrot.slane %v3524, 4
      %v3534 = vadd.f32 %v3505, %v3528
      %v3535 = vadd.f32 %v3506, %v3529
      %v3536 = vadd.f32 %v3507, %v3530
      %v3539 = vcombine.low %v3534, %v3535
      %3541 = vst [vmem:[%s305] sm:$0xff] %v3539
      %3542 = vst.msk [vmem:[%s305 + $0x8] sm:$0xf] %vm3281, %v3536
      %p3543 = scmp.lt.s32.totalorder %s19, 1
      %s3544 = scalar_select %p3543, %s19, 1
      %s3545 = smul.addr %s3544, 3
      %s3546 = smul.addr %s3545, 4
      %s3547 = scalar_lea.vmem %s8, %s3546
      // Predicated region
      $region53: #{splat_conv2d.1} parent=51 // pred_check
        %p3548 = pneg %p210
      $region54: #{splat_conv2d.1} parent=51 // pred_check_branch
        %3550 = sbr.rel (%p3548) target = $region56
      $region55: #{splat_conv2d.1} parent=51 // pred_region
        _
      $region56: #{splat_conv2d.1} parent=51 // pred_fallthru
        _
    $region52: #{splat_conv2d.1} parent=5 // pred_fallthru
      _
    %p3551 = scmp.le.s32.totalorder 2, %s14
    // Predicated region
    $region57: #{splat_conv2d.1} parent=5 // pred_check
      %p3552 = pneg %p3551
    $region58: #{splat_conv2d.1} parent=5 // pred_check_branch
      %3554 = sbr.rel (%p3552) target = $region60
    $region59: #{splat_conv2d.1} parent=5 // pred_region
      %s3555 = ssub.s32 %s14, 2
      // Predicated region
      $region61: #{splat_conv2d.1} parent=59 // pred_check
        %p3556 = pneg %p216
      $region62: #{splat_conv2d.1} parent=59 // pred_check_branch
        %3558 = sbr.rel (%p3556) target = $region64
      $region63: #{splat_conv2d.1} parent=59 // pred_region
        %p3559 = scmp.lt.s32.totalorder %s20, 1
        %s3560 = scalar_select %p3559, %s20, 1
        %s3561 = smul.addr %s3560, 3
        %s3562 = smul.addr %s3561, 4
        %s3563 = scalar_lea.vmem %s8, %s3562
      $region64: #{splat_conv2d.1} parent=59 // pred_fallthru
        _
    $region60: #{splat_conv2d.1} parent=5 // pred_fallthru
      _
  $region6: #{splat_conv2d.1} parent=0 // loop_footer
    %s18 = sadd.s32 1, %s14
  $region7: #{splat_conv2d.1} parent=0 // loop_footer_branch
    %13 = sbr.rel target = $region3
  $region8: #{splat_conv2d.1} parent=0 // loop_exit
    _

</llo_original>
